<compile_context>
chip_gen: v6e
topology: v6e:2x2x1
jax: 0.10.0
libtpu: 0.0.40
codegen_flags: <defaults>
</compile_context>

<pallas_src>
import functools
import math

import jax
import jax.numpy as jnp
from jax.experimental import pallas as pl
from jax.experimental.pallas import tpu as pltpu


# Set to jnp.bfloat16 on v6e/v7x for ~2x MXU throughput (f32 accumulation is kept either way).
# Kept at f32 here so the numerical check against the f32 reference is tight.
MATMUL_DTYPE = jnp.float32


def _pick_tile(dim, target, align):
    """Largest tile <= target that divides `dim` and is a multiple of `align`.
    Falls back to the full dim (a block dim equal to the array dim is always legal)."""
    if dim <= target:
        return dim
    t = (target // align) * align
    while t >= align:
        if dim % t == 0:
            return t
        t -= align
    return dim


# ------------------------------------------------------------------
# Tiled matmul kernels (projections)
# ------------------------------------------------------------------
def _matmul_kernel(x_ref, w_ref, o_ref, acc_ref):
    @pl.when(pl.program_id(2) == 0)
    def _():
        acc_ref[...] = jnp.zeros(acc_ref.shape, acc_ref.dtype)

    acc_ref[...] += jnp.dot(
        x_ref[...].astype(MATMUL_DTYPE),
        w_ref[...].astype(MATMUL_DTYPE),
        preferred_element_type=jnp.float32,
    )

    @pl.when(pl.program_id(2) == pl.num_programs(2) - 1)
    def _():
        o_ref[...] = acc_ref[...].astype(o_ref.dtype)


def matmul_tiled(x, w_t, *, tm_target=256, tn_target=512, tk_target=512):
    """x: [M, K] @ w_t: [K, N] -> [M, N] (no bias), tiled + pipelined."""
    M, K = x.shape
    N = w_t.shape[1]
    tm = _pick_tile(M, tm_target, 8)
    tn = _pick_tile(N, tn_target, 128)
    tk = _pick_tile(K, tk_target, 128)
    grid = (M // tm, N // tn, K // tk)
    return pl.pallas_call(
        _matmul_kernel,
        out_shape=jax.ShapeDtypeStruct((M, N), x.dtype),
        grid=grid,
        in_specs=[
            pl.BlockSpec((tm, tk), lambda i, j, k: (i, k)),
            pl.BlockSpec((tk, tn), lambda i, j, k: (k, j)),
        ],
        out_specs=pl.BlockSpec((tm, tn), lambda i, j, k: (i, j)),
        scratch_shapes=[pltpu.VMEM((tm, tn), jnp.float32)],
        compiler_params=pltpu.CompilerParams(
            dimension_semantics=("parallel", "parallel", "arbitrary")),
        cost_estimate=pl.CostEstimate(
            flops=2 * M * N * K,
            transcendentals=0,
            bytes_accessed=4 * (M * K + K * N + M * N)),
    )(x, w_t)


def _matmul_bias_res_kernel(x_ref, w_ref, b_ref, r_ref, o_ref, acc_ref):
    @pl.when(pl.program_id(2) == 0)
    def _():
        acc_ref[...] = jnp.zeros(acc_ref.shape, acc_ref.dtype)

    acc_ref[...] += jnp.dot(
        x_ref[...].astype(MATMUL_DTYPE),
        w_ref[...].astype(MATMUL_DTYPE),
        preferred_element_type=jnp.float32,
    )

    @pl.when(pl.program_id(2) == pl.num_programs(2) - 1)
    def _():
        o_ref[...] = (acc_ref[...] + b_ref[...]
                      + r_ref[...].astype(jnp.float32)).astype(o_ref.dtype)


def matmul_bias_residual(x, w_t, bias, residual, *,
                         tm_target=256, tn_target=512, tk_target=512):
    """residual + (x @ w_t + bias)   (dense projection + dropout_add with p=0)."""
    M, K = x.shape
    N = w_t.shape[1]
    tm = _pick_tile(M, tm_target, 8)
    tn = _pick_tile(N, tn_target, 128)
    tk = _pick_tile(K, tk_target, 128)
    grid = (M // tm, N // tn, K // tk)
    return pl.pallas_call(
        _matmul_bias_res_kernel,
        out_shape=jax.ShapeDtypeStruct((M, N), x.dtype),
        grid=grid,
        in_specs=[
            pl.BlockSpec((tm, tk), lambda i, j, k: (i, k)),
            pl.BlockSpec((tk, tn), lambda i, j, k: (k, j)),
            pl.BlockSpec((1, tn), lambda i, j, k: (0, j)),
            pl.BlockSpec((tm, tn), lambda i, j, k: (i, j)),
        ],
        out_specs=pl.BlockSpec((tm, tn), lambda i, j, k: (i, j)),
        scratch_shapes=[pltpu.VMEM((tm, tn), jnp.float32)],
        compiler_params=pltpu.CompilerParams(
            dimension_semantics=("parallel", "parallel", "arbitrary")),
        cost_estimate=pl.CostEstimate(
            flops=2 * M * N * K,
            transcendentals=0,
            bytes_accessed=4 * (M * K + K * N + 2 * M * N + N)),
    )(x, w_t, bias.reshape(1, N), residual)


# ------------------------------------------------------------------
# Rotary position embedding kernel
# ------------------------------------------------------------------
def _rope_kernel(x_ref, cos_ref, sin_ref, o_ref, *, scale):
    x = x_ref[0]                        # [ts, n_heads, D]
    cos = cos_ref[...][:, None, :]      # [ts, 1, D] -> broadcast over heads (free VPU splat)
    sin = sin_ref[...][:, None, :]
    d = x.shape[-1]
    x1 = x[..., : d // 2]
    x2 = x[..., d // 2:]
    rot = jnp.concatenate([-x2, x1], axis=-1)       # rotate_half
    out = x * cos + rot * sin
    if scale != 1.0:                                # fold 1/sqrt(head_dim) for Q here
        out = out * scale
    o_ref[0] = out.astype(o_ref.dtype)


def apply_rope(x, cos, sin, *, scale=1.0, ts_target=512):
    """x: [B, S, n_heads, D]; cos/sin: [S, D] (broadcast inside the kernel)."""
    B, S, NH, D = x.shape
    ts = _pick_tile(S, ts_target, 8)
    kernel = functools.partial(_rope_kernel, scale=scale)
    return pl.pallas_call(
        kernel,
        out_shape=jax.ShapeDtypeStruct(x.shape, x.dtype),
        grid=(B, S // ts),
        in_specs=[
            pl.BlockSpec((1, ts, NH, D), lambda b, si: (b, si, 0, 0)),
            pl.BlockSpec((ts, D), lambda b, si: (si, 0)),
            pl.BlockSpec((ts, D), lambda b, si: (si, 0)),
        ],
        out_specs=pl.BlockSpec((1, ts, NH, D), lambda b, si: (b, si, 0, 0)),
        compiler_params=pltpu.CompilerParams(
            dimension_semantics=("parallel", "parallel")),
    )(x, cos, sin)


# ------------------------------------------------------------------
# Flash attention kernel (online softmax over KV tiles, all heads per step)
# ------------------------------------------------------------------
def _flash_attn_kernel(q_ref, k_ref, v_ref, mask_ref, o_ref, m_sc, l_sc, acc_sc):
    _, _tq, n_head, _d = q_ref.shape
    n_kv = k_ref.shape[2]
    n_rep = n_head // n_kv
    ki = pl.program_id(2)

    @pl.when(ki == 0)
    def _():
        m_sc[...] = jnp.full(m_sc.shape, -jnp.inf, m_sc.dtype)
        l_sc[...] = jnp.zeros(l_sc.shape, l_sc.dtype)
        acc_sc[...] = jnp.zeros(acc_sc.shape, acc_sc.dtype)

    neg = jnp.finfo(jnp.float32).min
    masked = mask_ref[0, 0] != 0        # [tq, tk] bool, shared by all heads
    q = q_ref[0]                        # [tq, n_head, D]  (RoPE'd, pre-scaled by 1/sqrt(D))
    k = k_ref[0]                        # [tk, n_kv,   D]  (RoPE'd)
    v = v_ref[0]                        # [tk, n_kv,   D]

    for h in range(n_head):             # static unroll; per-head 2-D MXU matmuls
        hk = h // n_rep                 # GQA: query head h uses kv head h // n_rep
        q_h = q[:, h, :].astype(MATMUL_DTYPE)    # [tq, D]
        k_h = k[:, hk, :].astype(MATMUL_DTYPE)   # [tk, D]
        v_h = v[:, hk, :].astype(MATMUL_DTYPE)   # [tk, D]

        s = jax.lax.dot_general(
            q_h, k_h, (((1,), (1,)), ((), ())),
            preferred_element_type=jnp.float32)  # [tq, tk]
        s = jnp.where(masked, neg, s)            # masked_fill with finfo.min (torch semantics)

        m_prev = m_sc[h]                                   # [tq, 1]
        m_new = jnp.maximum(m_prev, jnp.max(s, axis=-1, keepdims=True))
        alpha = jnp.exp(m_prev - m_new)
        p = jnp.exp(s - m_new)                             # [tq, tk]
        l_sc[h] = alpha * l_sc[h] + jnp.sum(p, axis=-1, keepdims=True)
        acc_sc[h] = alpha * acc_sc[h] + jnp.dot(
            p.astype(MATMUL_DTYPE), v_h, preferred_element_type=jnp.float32)
        m_sc[h] = m_new

    @pl.when(ki == pl.num_programs(2) - 1)
    def _():
        parts = []
        for h in range(n_head):
            inv_l = pl.reciprocal(l_sc[h], approx=True)    # EUP slot, nearly free
            parts.append(acc_sc[h] * inv_l)                # [tq, D]
        # lane-dense store: heads concatenated along the hidden axis -> [tq, H]
        o_ref[0] = jnp.concatenate(parts, axis=-1).astype(o_ref.dtype)


def flash_attention(q, k, v, mask_i8, *, tq_target=256, tk_target=256):
    """q: [B,S,n_head,D]; k/v: [B,S,n_kv,D]; mask_i8: [B,1,S,S] (1 == masked).
    Returns merged-heads context [B, S, n_head*D]."""
    B, S, n_head, D = q.shape
    n_kv = k.shape[2]
    H = n_head * D
    tq = _pick_tile(S, tq_target, 32)   # 32-aligned: also keeps the int8 mask block legal
    tk = _pick_tile(S, tk_target, 128)
    grid = (B, S // tq, S // tk)
    flops = 4 * B * n_head * S * S * D
    bytes_acc = 4 * (B * S * n_head * D + 2 * B * S * n_kv * D + B * S * H) + B * S * S
    return pl.pallas_call(
        _flash_attn_kernel,
        out_shape=jax.ShapeDtypeStruct((B, S, H), q.dtype),
        grid=grid,
        in_specs=[
            pl.BlockSpec((1, tq, n_head, D), lambda b, qi, ki: (b, qi, 0, 0)),
            pl.BlockSpec((1, tk, n_kv, D), lambda b, qi, ki: (b, ki, 0, 0)),
            pl.BlockSpec((1, tk, n_kv, D), lambda b, qi, ki: (b, ki, 0, 0)),
            pl.BlockSpec((1, 1, tq, tk), lambda b, qi, ki: (b, 0, qi, ki)),
        ],
        out_specs=pl.BlockSpec((1, tq, H), lambda b, qi, ki: (b, qi, 0)),
        scratch_shapes=[
            pltpu.VMEM((n_head, tq, 1), jnp.float32),   # m (running max)
            pltpu.VMEM((n_head, tq, 1), jnp.float32),   # l (running denom)
            pltpu.VMEM((n_head, tq, D), jnp.float32),   # acc (running numerator)
        ],
        compiler_params=pltpu.CompilerParams(
            dimension_semantics=("parallel", "parallel", "arbitrary")),
        cost_estimate=pl.CostEstimate(
            flops=flops,
            transcendentals=B * n_head * S * S,
            bytes_accessed=bytes_acc),
    )(q, k, v, mask_i8)


# ------------------------------------------------------------------
# Rotary embedding table (glue; mirrors RotaryEmbedding.forward)
# ------------------------------------------------------------------
def rotary_cos_sin(seq_len, dim, base, base_seqlen, training_seqlen):
    total = max(seq_len, training_seqlen)
    context_value = math.log(total / base_seqlen, 2) + 1
    ntk_alpha = 2 ** math.ceil(context_value) - 1
    ntk_alpha = max(ntk_alpha, 1)
    scale = total / training_seqlen
    mscale = 1.0 if scale <= 1 else 0.1 * math.log(scale) + 1.0
    base = base * ntk_alpha ** (dim / (dim - 2))
    inv_freq = 1.0 / base ** (jnp.arange(0, dim, 2, dtype=jnp.float32) / dim)
    t = jnp.arange(total, dtype=jnp.float32)
    freqs = jnp.einsum("i,j->ij", t, inv_freq)
    emb = jnp.concatenate([freqs, freqs], axis=-1)
    # TODO(synk): torch casts cos/sin to fp16 (precision=torch.half); fp32 kept here.
    cos = mscale * jnp.cos(emb)    # [total, dim]
    sin = mscale * jnp.sin(emb)
    return cos[:seq_len], sin[:seq_len]


# ------------------------------------------------------------------
# TelechatAttention forward (flash_attn=False, use_cache=False, eval mode)
# ------------------------------------------------------------------
def telechat_attention_forward(hidden_states, residual, attention_mask, params, cfg):
    B, S, H = hidden_states.shape
    n_head = cfg["n_head"]
    n_kv = cfg["num_key_value_heads"]
    assert n_head % n_kv == 0, "n_head must be a multiple of num_key_value_heads"
    head_dim = H // n_head
    inv_norm_factor = 1.0 / math.sqrt(head_dim)

    # Stay batch-major ([B,S,H]); projections are per-token so no [S,B] transpose needed.
    x2d = hidden_states.reshape(B * S, H)

    # Fused query + key_value projection: one pass over the activations.
    w_qkv_t = jnp.concatenate([params["w_q"], params["w_kv"]], axis=0).T  # [H, H + 2*kv_proj]
    qkv = matmul_tiled(x2d, w_qkv_t)                                      # [B*S, H + 2*kv_proj]

    q = qkv[:, :H].reshape(B, S, n_head, head_dim)
    mixed_kv = qkv[:, H:].reshape(B, S, n_kv, 2 * head_dim)
    k = mixed_kv[..., :head_dim]
    v = mixed_kv[..., head_dim:]

    cos, sin = rotary_cos_sin(
        S, head_dim, 10000, cfg["base_seqlen"], cfg["training_seqlen"])
    cos, sin = cos[:S], sin[:S]                       # [S, D]

    # RoPE; the 1/sqrt(head_dim) attention scale is folded into Q here (O(S*D) work).
    q = apply_rope(q, cos, sin, scale=inv_norm_factor)
    k = apply_rope(k, cos, sin, scale=1.0)

    mask_i8 = attention_mask.astype(jnp.int8)         # 1 == masked, 4x less traffic than f32

    # Flash attention; writes merged-heads, lane-dense [B, S, H] context directly.
    ctx = flash_attention(q, k, v, mask_i8)

    # dense + dropout_add (hidden_dropout = 0.0 -> residual + dense(ctx))
    out = matmul_bias_residual(
        ctx.reshape(B * S, H),
        params["w_dense"].T,
        params["b_dense"],
        residual.reshape(B * S, H),
    )
    return out.reshape(B, S, H)
    # TODO(synk): use_cache / layer_past (KV-cache concat) and the external
    # flash_attn_unpadded_func path are not exercised here.


# ------------------------------------------------------------------
# Pure-JAX reference (same math, no Pallas) for a sanity check
# ------------------------------------------------------------------
def reference_forward(hidden_states, residual, attention_mask, params, cfg):
    B, S, H = hidden_states.shape
    n_head = cfg["n_head"]
    n_kv = cfg["num_key_value_heads"]
    D = H // n_head
    inv = 1.0 / math.sqrt(D)

    q = hidden_states @ params["w_q"].T
    kv = hidden_states @ params["w_kv"].T
    q = q.reshape(B, S, n_head, D)
    kv = kv.reshape(B, S, n_kv, 2 * D)
    k = kv[..., :D]
    v = kv[..., D:]

    cos, sin = rotary_cos_sin(S, D, 10000, cfg["base_seqlen"], cfg["training_seqlen"])
    cos = cos[:S][None, :, None, :]
    sin = sin[:S][None, :, None, :]

    def rot_half(t):
        return jnp.concatenate([-t[..., D // 2:], t[..., :D // 2]], axis=-1)

    q = q * cos + rot_half(q) * sin
    k = k * cos + rot_half(k) * sin

    n_rep = n_head // n_kv
    if n_rep > 1:
        k = jnp.repeat(k, n_rep, axis=2)
        v = jnp.repeat(v, n_rep, axis=2)

    scores = inv * jnp.einsum("bqhd,bkhd->bhqk", q, k)
    scores = jnp.where(attention_mask, jnp.finfo(jnp.float32).min, scores)
    probs = jax.nn.softmax(scores, axis=-1)
    ctx = jnp.einsum("bhqk,bkhd->bqhd", probs, v).reshape(B, S, H)
    return residual + ctx @ params["w_dense"].T + params["b_dense"]


# ------------------------------------------------------------------
if __name__ == "__main__":
    def run_case(cfg, B, S, key):
        H = cfg["hidden_size"]
        n_head, n_kv = cfg["n_head"], cfg["num_key_value_heads"]
        D = H // n_head
        kv_proj = D * n_kv
        k1, k2, k3, k4, k5, k6 = jax.random.split(key, 6)
        params = {
            "w_q": 0.02 * jax.random.normal(k1, (H, H), jnp.float32),
            "w_kv": 0.02 * jax.random.normal(k2, (2 * kv_proj, H), jnp.float32),
            "w_dense": 0.02 * jax.random.normal(k3, (H, H), jnp.float32),
            "b_dense": 0.02 * jax.random.normal(k4, (H,), jnp.float32),
        }
        hidden_states = jax.random.normal(k5, (B, S, H), jnp.float32)
        residual = jax.random.normal(k6, (B, S, H), jnp.float32)
        causal = jnp.triu(jnp.ones((S, S), dtype=bool), k=1)   # True == masked
        attention_mask = jnp.broadcast_to(causal[None, None], (B, 1, S, S))

        fwd = jax.jit(lambda hs, r, m, p: telechat_attention_forward(hs, r, m, p, cfg))
        out = jax.block_until_ready(fwd(hidden_states, residual, attention_mask, params))
        ref = reference_forward(hidden_states, residual, attention_mask, params, cfg)
        assert out.shape == (B, S, H)
        err = float(jnp.max(jnp.abs(out - ref)))
        assert jnp.allclose(out, ref, atol=1e-2, rtol=1e-2), err
        return out

    # MHA config consistent with the module: hidden=32, 4 heads, head_dim=8.
    cfg_mha = dict(hidden_size=32, n_head=4, num_key_value_heads=4,
                   base_seqlen=8, training_seqlen=8)
    run_case(cfg_mha, B=2, S=8, key=jax.random.PRNGKey(0))

    # GQA config (num_key_value_heads < n_head) exercises the in-kernel head grouping.
    cfg_gqa = dict(hidden_size=32, n_head=4, num_key_value_heads=2,
                   base_seqlen=8, training_seqlen=8)
    run_case(cfg_gqa, B=2, S=8, key=jax.random.PRNGKey(1))

    print("KERNEL_OK")
</pallas_src>

<mosaic_0001>
module attributes {stable_mosaic.version = 11 : i64} {
  func.func @_matmul_kernel(%arg0: i32, %arg1: i32, %arg2: i32, %arg3: memref<16x32xf32, #tpu.memory_space<vmem>>, %arg4: memref<32x96xf32, #tpu.memory_space<vmem>>, %arg5: memref<16x96xf32, #tpu.memory_space<vmem>>, %arg6: memref<16x96xf32, #tpu.memory_space<vmem>>) attributes {dimension_semantics = [#tpu.dimension_semantics<parallel>, #tpu.dimension_semantics<parallel>, #tpu.dimension_semantics<arbitrary>], iteration_bounds = array<i64: 1, 1, 1>, scalar_prefetch = 0 : i64, scratch_operands = 1 : i64, tpu.core_type = #tpu.core_type<tc>, window_params = [{transform_indices = @transform_0, window_bounds = array<i64: 16, 32>}, {transform_indices = @transform_1, window_bounds = array<i64: 32, 96>}, {transform_indices = @transform_2, window_bounds = array<i64: 16, 96>}]} {
    %c0_i32 = arith.constant 0 : i32
    %0 = arith.cmpi eq, %arg2, %c0_i32 : i32
    %1 = arith.extui %0 : i1 to i32
    %c0_i32_0 = arith.constant 0 : i32
    %2 = arith.cmpi ne, %1, %c0_i32_0 : i32
    scf.if %2 {
      %cst_10 = arith.constant 0.000000e+00 : f32
      %12 = vector.broadcast %cst_10 : f32 to vector<16x96xf32>
      %c0_11 = arith.constant 0 : index
      %c0_12 = arith.constant 0 : index
      %13 = vector.load %arg6[%c0_11, %c0_12] : memref<16x96xf32, #tpu.memory_space<vmem>>, vector<16x96xf32>
      tpu.vector_store %arg6[%c0_11, %c0_12], %12 {strides = array<i32>} : memref<16x96xf32, #tpu.memory_space<vmem>>, vector<16x96xf32>,
    } else {
    }
    %c0 = arith.constant 0 : index
    %c0_1 = arith.constant 0 : index
    %3 = vector.load %arg6[%c0, %c0_1] : memref<16x96xf32, #tpu.memory_space<vmem>>, vector<16x96xf32>
    %c0_2 = arith.constant 0 : index
    %c0_3 = arith.constant 0 : index
    %4 = vector.load %arg3[%c0_2, %c0_3] : memref<16x32xf32, #tpu.memory_space<vmem>>, vector<16x32xf32>
    %c0_4 = arith.constant 0 : index
    %c0_5 = arith.constant 0 : index
    %5 = vector.load %arg4[%c0_4, %c0_5] : memref<32x96xf32, #tpu.memory_space<vmem>>, vector<32x96xf32>
    %cst = arith.constant dense<0.000000e+00> : vector<16x96xf32>
    %6 = tpu.matmul %4, %5, %cst {dimension_numbers = #tpu.dot_dimension_numbers<[1], [0], [0], [1], [0, 0, 1, 1], [], []>} : vector<16x32xf32>, vector<32x96xf32>, vector<16x96xf32> -> vector<16x96xf32>
    %7 = arith.addf %3, %6 : vector<16x96xf32>
    %c0_6 = arith.constant 0 : index
    %c0_7 = arith.constant 0 : index
    %8 = vector.load %arg6[%c0_6, %c0_7] : memref<16x96xf32, #tpu.memory_space<vmem>>, vector<16x96xf32>
    tpu.vector_store %arg6[%c0_6, %c0_7], %7 {strides = array<i32>} : memref<16x96xf32, #tpu.memory_space<vmem>>, vector<16x96xf32>,
    %c0_i32_8 = arith.constant 0 : i32
    %9 = arith.cmpi eq, %arg2, %c0_i32_8 : i32
    %10 = arith.extui %9 : i1 to i32
    %c0_i32_9 = arith.constant 0 : i32
    %11 = arith.cmpi ne, %10, %c0_i32_9 : i32
    scf.if %11 {
      %c0_10 = arith.constant 0 : index
      %c0_11 = arith.constant 0 : index
      %12 = vector.load %arg6[%c0_10, %c0_11] : memref<16x96xf32, #tpu.memory_space<vmem>>, vector<16x96xf32>
      %c0_12 = arith.constant 0 : index
      %c0_13 = arith.constant 0 : index
      %13 = vector.load %arg5[%c0_12, %c0_13] : memref<16x96xf32, #tpu.memory_space<vmem>>, vector<16x96xf32>
      tpu.vector_store %arg5[%c0_12, %c0_13], %12 {strides = array<i32>} : memref<16x96xf32, #tpu.memory_space<vmem>>, vector<16x96xf32>,
    } else {
    }
    return
  }
  func.func @transform_0(%arg0: i32, %arg1: i32, %arg2: i32) -> (i32, i32) {
    %c0_i32 = arith.constant 0 : i32
    return %arg0, %arg2 : i32, i32
  }
  func.func @transform_1(%arg0: i32, %arg1: i32, %arg2: i32) -> (i32, i32) {
    %c0_i32 = arith.constant 0 : i32
    return %arg2, %arg1 : i32, i32
  }
  func.func @transform_2(%arg0: i32, %arg1: i32, %arg2: i32) -> (i32, i32) {
    %c0_i32 = arith.constant 0 : i32
    return %arg0, %arg1 : i32, i32
  }
}

module attributes {stable_mosaic.version = 11 : i64} {
  func.func @_rope_kernel(%arg0: i32, %arg1: i32, %arg2: memref<1x8x4x8xf32, #tpu.memory_space<vmem>>, %arg3: memref<8x8xf32, #tpu.memory_space<vmem>>, %arg4: memref<8x8xf32, #tpu.memory_space<vmem>>, %arg5: memref<1x8x4x8xf32, #tpu.memory_space<vmem>>) attributes {dimension_semantics = [#tpu.dimension_semantics<parallel>, #tpu.dimension_semantics<parallel>], iteration_bounds = array<i64: 2, 1>, scalar_prefetch = 0 : i64, scratch_operands = 0 : i64, tpu.core_type = #tpu.core_type<tc>, window_params = [{transform_indices = @transform_0, window_bounds = array<i64: 1, 8, 4, 8>}, {transform_indices = @transform_1, window_bounds = array<i64: 8, 8>}, {transform_indices = @transform_2, window_bounds = array<i64: 8, 8>}, {transform_indices = @transform_3, window_bounds = array<i64: 1, 8, 4, 8>}]} {
    %c0 = arith.constant 0 : index
    %c0_0 = arith.constant 0 : index
    %c0_1 = arith.constant 0 : index
    %c0_2 = arith.constant 0 : index
    %0 = vector.load %arg2[%c0, %c0_0, %c0_1, %c0_2] : memref<1x8x4x8xf32, #tpu.memory_space<vmem>>, vector<1x8x4x8xf32>
    %1 = vector.shape_cast %0 : vector<1x8x4x8xf32> to vector<8x4x8xf32>
    %c0_3 = arith.constant 0 : index
    %c0_4 = arith.constant 0 : index
    %2 = vector.load %arg3[%c0_3, %c0_4] : memref<8x8xf32, #tpu.memory_space<vmem>>, vector<8x8xf32>
    %3 = vector.shape_cast %2 : vector<8x8xf32> to vector<8x1x8xf32>
    %c0_5 = arith.constant 0 : index
    %c0_6 = arith.constant 0 : index
    %4 = vector.load %arg4[%c0_5, %c0_6] : memref<8x8xf32, #tpu.memory_space<vmem>>, vector<8x8xf32>
    %5 = vector.shape_cast %4 : vector<8x8xf32> to vector<8x1x8xf32>
    %6 = vector.extract_strided_slice %1 {offsets = [0, 0, 0], sizes = [8, 4, 4], strides = [1, 1, 1]} : vector<8x4x8xf32> to vector<8x4x4xf32>
    %7 = vector.extract_strided_slice %1 {offsets = [0, 0, 4], sizes = [8, 4, 4], strides = [1, 1, 1]} : vector<8x4x8xf32> to vector<8x4x4xf32>
    %cst = arith.constant 0.000000e+00 : f32
    %8 = vector.broadcast %cst : f32 to vector<8x4x4xf32>
    %9 = arith.subf %8, %7 : vector<8x4x4xf32>
    %10 = tpu.concatenate %9, %6 in 2 : vector<8x4x4xf32>, vector<8x4x4xf32> -> vector<8x4x8xf32>
    %11 = vector.broadcast %3 : vector<8x1x8xf32> to vector<8x4x8xf32>
    %12 = arith.mulf %1, %11 : vector<8x4x8xf32>
    %13 = vector.broadcast %5 : vector<8x1x8xf32> to vector<8x4x8xf32>
    %14 = arith.mulf %10, %13 : vector<8x4x8xf32>
    %15 = arith.addf %12, %14 : vector<8x4x8xf32>
    %c0_7 = arith.constant 0 : index
    %c0_8 = arith.constant 0 : index
    %c0_9 = arith.constant 0 : index
    %c0_10 = arith.constant 0 : index
    %16 = vector.load %arg5[%c0_7, %c0_8, %c0_9, %c0_10] : memref<1x8x4x8xf32, #tpu.memory_space<vmem>>, vector<1x8x4x8xf32>
    %17 = vector.shape_cast %16 : vector<1x8x4x8xf32> to vector<8x4x8xf32>
    %18 = vector.shape_cast %15 : vector<8x4x8xf32> to vector<1x8x4x8xf32>
    tpu.vector_store %arg5[%c0_7, %c0_8, %c0_9, %c0_10], %18 {strides = array<i32>} : memref<1x8x4x8xf32, #tpu.memory_space<vmem>>, vector<1x8x4x8xf32>,
    return
  }
  func.func @transform_0(%arg0: i32, %arg1: i32) -> (i32, i32, i32, i32) {
    %c0_i32 = arith.constant 0 : i32
    %c0_i32_0 = arith.constant 0 : i32
    %c0_i32_1 = arith.constant 0 : i32
    return %arg0, %arg1, %c0_i32, %c0_i32_0 : i32, i32, i32, i32
  }
  func.func @transform_1(%arg0: i32, %arg1: i32) -> (i32, i32) {
    %c0_i32 = arith.constant 0 : i32
    %c0_i32_0 = arith.constant 0 : i32
    return %arg1, %c0_i32 : i32, i32
  }
  func.func @transform_2(%arg0: i32, %arg1: i32) -> (i32, i32) {
    %c0_i32 = arith.constant 0 : i32
    %c0_i32_0 = arith.constant 0 : i32
    return %arg1, %c0_i32 : i32, i32
  }
  func.func @transform_3(%arg0: i32, %arg1: i32) -> (i32, i32, i32, i32) {
    %c0_i32 = arith.constant 0 : i32
    %c0_i32_0 = arith.constant 0 : i32
    %c0_i32_1 = arith.constant 0 : i32
    return %arg0, %arg1, %c0_i32, %c0_i32_0 : i32, i32, i32, i32
  }
}

module attributes {stable_mosaic.version = 11 : i64} {
  func.func @_flash_attn_kernel(%arg0: i32, %arg1: i32, %arg2: i32, %arg3: memref<1x8x4x8xf32, #tpu.memory_space<vmem>>, %arg4: memref<1x8x4x8xf32, #tpu.memory_space<vmem>>, %arg5: memref<1x8x4x8xf32, #tpu.memory_space<vmem>>, %arg6: memref<1x1x8x8xi8, #tpu.memory_space<vmem>>, %arg7: memref<1x8x32xf32, #tpu.memory_space<vmem>>, %arg8: memref<4x8x1xf32, #tpu.memory_space<vmem>>, %arg9: memref<4x8x1xf32, #tpu.memory_space<vmem>>, %arg10: memref<4x8x8xf32, #tpu.memory_space<vmem>>) attributes {dimension_semantics = [#tpu.dimension_semantics<parallel>, #tpu.dimension_semantics<parallel>, #tpu.dimension_semantics<arbitrary>], iteration_bounds = array<i64: 2, 1, 1>, scalar_prefetch = 0 : i64, scratch_operands = 3 : i64, tpu.core_type = #tpu.core_type<tc>, window_params = [{transform_indices = @transform_0, window_bounds = array<i64: 1, 8, 4, 8>}, {transform_indices = @transform_1, window_bounds = array<i64: 1, 8, 4, 8>}, {transform_indices = @transform_2, window_bounds = array<i64: 1, 8, 4, 8>}, {transform_indices = @transform_3, window_bounds = array<i64: 1, 1, 8, 8>}, {transform_indices = @transform_4, window_bounds = array<i64: 1, 8, 32>}]} {
    %c0_i32 = arith.constant 0 : i32
    %0 = arith.cmpi eq, %arg2, %c0_i32 : i32
    %1 = arith.extui %0 : i1 to i32
    %c0_i32_0 = arith.constant 0 : i32
    %2 = arith.cmpi ne, %1, %c0_i32_0 : i32
    scf.if %2 {
      %cst_106 = arith.constant 0xFF800000 : f32
      %176 = vector.broadcast %cst_106 : f32 to vector<4x8x1xf32>
      %c0_107 = arith.constant 0 : index
      %c0_108 = arith.constant 0 : index
      %c0_109 = arith.constant 0 : index
      %177 = vector.load %arg8[%c0_107, %c0_108, %c0_109] : memref<4x8x1xf32, #tpu.memory_space<vmem>>, vector<4x8x1xf32>
      tpu.vector_store %arg8[%c0_107, %c0_108, %c0_109], %176 {strides = array<i32>} : memref<4x8x1xf32, #tpu.memory_space<vmem>>, vector<4x8x1xf32>,
      %cst_110 = arith.constant 0.000000e+00 : f32
      %178 = vector.broadcast %cst_110 : f32 to vector<4x8x1xf32>
      %c0_111 = arith.constant 0 : index
      %c0_112 = arith.constant 0 : index
      %c0_113 = arith.constant 0 : index
      %179 = vector.load %arg9[%c0_111, %c0_112, %c0_113] : memref<4x8x1xf32, #tpu.memory_space<vmem>>, vector<4x8x1xf32>
      tpu.vector_store %arg9[%c0_111, %c0_112, %c0_113], %178 {strides = array<i32>} : memref<4x8x1xf32, #tpu.memory_space<vmem>>, vector<4x8x1xf32>,
      %cst_114 = arith.constant 0.000000e+00 : f32
      %180 = vector.broadcast %cst_114 : f32 to vector<4x8x8xf32>
      %c0_115 = arith.constant 0 : index
      %c0_116 = arith.constant 0 : index
      %c0_117 = arith.constant 0 : index
      %181 = vector.load %arg10[%c0_115, %c0_116, %c0_117] : memref<4x8x8xf32, #tpu.memory_space<vmem>>, vector<4x8x8xf32>
      tpu.vector_store %arg10[%c0_115, %c0_116, %c0_117], %180 {strides = array<i32>} : memref<4x8x8xf32, #tpu.memory_space<vmem>>, vector<4x8x8xf32>,
    } else {
    }
    %c0 = arith.constant 0 : index
    %c0_1 = arith.constant 0 : index
    %c0_2 = arith.constant 0 : index
    %c0_3 = arith.constant 0 : index
    %3 = vector.load %arg6[%c0, %c0_1, %c0_2, %c0_3] : memref<1x1x8x8xi8, #tpu.memory_space<vmem>>, vector<1x1x8x8xi8>
    %4 = vector.shape_cast %3 : vector<1x1x8x8xi8> to vector<8x8xi8>
    %c0_i8 = arith.constant 0 : i8
    %5 = vector.broadcast %c0_i8 : i8 to vector<8x8xi8>
    %6 = arith.cmpi ne, %4, %5 : vector<8x8xi8>
    %c0_4 = arith.constant 0 : index
    %c0_5 = arith.constant 0 : index
    %c0_6 = arith.constant 0 : index
    %c0_7 = arith.constant 0 : index
    %7 = vector.load %arg3[%c0_4, %c0_5, %c0_6, %c0_7] : memref<1x8x4x8xf32, #tpu.memory_space<vmem>>, vector<1x8x4x8xf32>
    %8 = vector.shape_cast %7 : vector<1x8x4x8xf32> to vector<8x4x8xf32>
    %c0_8 = arith.constant 0 : index
    %c0_9 = arith.constant 0 : index
    %c0_10 = arith.constant 0 : index
    %c0_11 = arith.constant 0 : index
    %9 = vector.load %arg4[%c0_8, %c0_9, %c0_10, %c0_11] : memref<1x8x4x8xf32, #tpu.memory_space<vmem>>, vector<1x8x4x8xf32>
    %10 = vector.shape_cast %9 : vector<1x8x4x8xf32> to vector<8x4x8xf32>
    %c0_12 = arith.constant 0 : index
    %c0_13 = arith.constant 0 : index
    %c0_14 = arith.constant 0 : index
    %c0_15 = arith.constant 0 : index
    %11 = vector.load %arg5[%c0_12, %c0_13, %c0_14, %c0_15] : memref<1x8x4x8xf32, #tpu.memory_space<vmem>>, vector<1x8x4x8xf32>
    %12 = vector.shape_cast %11 : vector<1x8x4x8xf32> to vector<8x4x8xf32>
    %13 = vector.extract_strided_slice %8 {offsets = [0, 0, 0], sizes = [8, 1, 8], strides = [1, 1, 1]} : vector<8x4x8xf32> to vector<8x1x8xf32>
    %14 = vector.shape_cast %13 : vector<8x1x8xf32> to vector<8x8xf32>
    %15 = vector.extract_strided_slice %10 {offsets = [0, 0, 0], sizes = [8, 1, 8], strides = [1, 1, 1]} : vector<8x4x8xf32> to vector<8x1x8xf32>
    %16 = vector.shape_cast %15 : vector<8x1x8xf32> to vector<8x8xf32>
    %17 = vector.extract_strided_slice %12 {offsets = [0, 0, 0], sizes = [8, 1, 8], strides = [1, 1, 1]} : vector<8x4x8xf32> to vector<8x1x8xf32>
    %18 = vector.shape_cast %17 : vector<8x1x8xf32> to vector<8x8xf32>
    %cst = arith.constant dense<0.000000e+00> : vector<8x8xf32>
    %19 = tpu.matmul %14, %16, %cst {dimension_numbers = #tpu.dot_dimension_numbers<[1], [1], [0], [0], [0, 0, 1, 0], [], []>} : vector<8x8xf32>, vector<8x8xf32>, vector<8x8xf32> -> vector<8x8xf32>
    %cst_16 = arith.constant -3.40282347E+38 : f32
    %20 = vector.broadcast %cst_16 : f32 to vector<8x8xf32>
    %21 = arith.select %6, %20, %19 : vector<8x8xi1>, vector<8x8xf32>
    %c0_17 = arith.constant 0 : index
    %c0_18 = arith.constant 0 : index
    %c0_19 = arith.constant 0 : index
    %22 = vector.load %arg8[%c0_17, %c0_18, %c0_19] : memref<4x8x1xf32, #tpu.memory_space<vmem>>, vector<1x8x1xf32>
    %23 = vector.shape_cast %22 : vector<1x8x1xf32> to vector<8x1xf32>
    %cst_20 = arith.constant dense<0xFF800000> : vector<8xf32>
    %24 = vector.multi_reduction <maximumf>, %21, %cst_20 [1] : vector<8x8xf32> to vector<8xf32>
    %25 = vector.shape_cast %24 : vector<8xf32> to vector<8x1xf32>
    %26 = arith.maximumf %23, %25 : vector<8x1xf32>
    %27 = arith.subf %23, %26 : vector<8x1xf32>
    %28 = math.exp %27 : vector<8x1xf32>
    %29 = vector.broadcast %26 : vector<8x1xf32> to vector<8x8xf32>
    %30 = arith.subf %21, %29 : vector<8x8xf32>
    %31 = math.exp %30 : vector<8x8xf32>
    %c0_21 = arith.constant 0 : index
    %c0_22 = arith.constant 0 : index
    %c0_23 = arith.constant 0 : index
    %32 = vector.load %arg9[%c0_21, %c0_22, %c0_23] : memref<4x8x1xf32, #tpu.memory_space<vmem>>, vector<1x8x1xf32>
    %33 = vector.shape_cast %32 : vector<1x8x1xf32> to vector<8x1xf32>
    %34 = arith.mulf %28, %33 : vector<8x1xf32>
    %cst_24 = arith.constant dense<0.000000e+00> : vector<8xf32>
    %35 = vector.multi_reduction <add>, %31, %cst_24 [1] : vector<8x8xf32> to vector<8xf32>
    %36 = vector.shape_cast %35 : vector<8xf32> to vector<8x1xf32>
    %37 = arith.addf %34, %36 : vector<8x1xf32>
    %c0_25 = arith.constant 0 : index
    %c0_26 = arith.constant 0 : index
    %c0_27 = arith.constant 0 : index
    %38 = vector.load %arg9[%c0_25, %c0_26, %c0_27] : memref<4x8x1xf32, #tpu.memory_space<vmem>>, vector<1x8x1xf32>
    %39 = vector.shape_cast %38 : vector<1x8x1xf32> to vector<8x1xf32>
    %40 = vector.shape_cast %37 : vector<8x1xf32> to vector<1x8x1xf32>
    tpu.vector_store %arg9[%c0_25, %c0_26, %c0_27], %40 {strides = array<i32>} : memref<4x8x1xf32, #tpu.memory_space<vmem>>, vector<1x8x1xf32>,
    %c0_28 = arith.constant 0 : index
    %c0_29 = arith.constant 0 : index
    %c0_30 = arith.constant 0 : index
    %41 = vector.load %arg10[%c0_28, %c0_29, %c0_30] : memref<4x8x8xf32, #tpu.memory_space<vmem>>, vector<1x8x8xf32>
    %42 = vector.shape_cast %41 : vector<1x8x8xf32> to vector<8x8xf32>
    %43 = vector.broadcast %28 : vector<8x1xf32> to vector<8x8xf32>
    %44 = arith.mulf %43, %42 : vector<8x8xf32>
    %cst_31 = arith.constant dense<0.000000e+00> : vector<8x8xf32>
    %45 = tpu.matmul %31, %18, %cst_31 {dimension_numbers = #tpu.dot_dimension_numbers<[1], [0], [0], [1], [0, 0, 1, 1], [], []>} : vector<8x8xf32>, vector<8x8xf32>, vector<8x8xf32> -> vector<8x8xf32>
    %46 = arith.addf %44, %45 : vector<8x8xf32>
    %c0_32 = arith.constant 0 : index
    %c0_33 = arith.constant 0 : index
    %c0_34 = arith.constant 0 : index
    %47 = vector.load %arg10[%c0_32, %c0_33, %c0_34] : memref<4x8x8xf32, #tpu.memory_space<vmem>>, vector<1x8x8xf32>
    %48 = vector.shape_cast %47 : vector<1x8x8xf32> to vector<8x8xf32>
    %49 = vector.shape_cast %46 : vector<8x8xf32> to vector<1x8x8xf32>
    tpu.vector_store %arg10[%c0_32, %c0_33, %c0_34], %49 {strides = array<i32>} : memref<4x8x8xf32, #tpu.memory_space<vmem>>, vector<1x8x8xf32>,
    %c0_35 = arith.constant 0 : index
    %c0_36 = arith.constant 0 : index
    %c0_37 = arith.constant 0 : index
    %50 = vector.load %arg8[%c0_35, %c0_36, %c0_37] : memref<4x8x1xf32, #tpu.memory_space<vmem>>, vector<1x8x1xf32>
    %51 = vector.shape_cast %50 : vector<1x8x1xf32> to vector<8x1xf32>
    %52 = vector.shape_cast %26 : vector<8x1xf32> to vector<1x8x1xf32>
    tpu.vector_store %arg8[%c0_35, %c0_36, %c0_37], %52 {strides = array<i32>} : memref<4x8x1xf32, #tpu.memory_space<vmem>>, vector<1x8x1xf32>,
    %53 = vector.extract_strided_slice %8 {offsets = [0, 1, 0], sizes = [8, 1, 8], strides = [1, 1, 1]} : vector<8x4x8xf32> to vector<8x1x8xf32>
    %54 = vector.shape_cast %53 : vector<8x1x8xf32> to vector<8x8xf32>
    %55 = vector.extract_strided_slice %10 {offsets = [0, 1, 0], sizes = [8, 1, 8], strides = [1, 1, 1]} : vector<8x4x8xf32> to vector<8x1x8xf32>
    %56 = vector.shape_cast %55 : vector<8x1x8xf32> to vector<8x8xf32>
    %57 = vector.extract_strided_slice %12 {offsets = [0, 1, 0], sizes = [8, 1, 8], strides = [1, 1, 1]} : vector<8x4x8xf32> to vector<8x1x8xf32>
    %58 = vector.shape_cast %57 : vector<8x1x8xf32> to vector<8x8xf32>
    %cst_38 = arith.constant dense<0.000000e+00> : vector<8x8xf32>
    %59 = tpu.matmul %54, %56, %cst_38 {dimension_numbers = #tpu.dot_dimension_numbers<[1], [1], [0], [0], [0, 0, 1, 0], [], []>} : vector<8x8xf32>, vector<8x8xf32>, vector<8x8xf32> -> vector<8x8xf32>
    %cst_39 = arith.constant -3.40282347E+38 : f32
    %60 = vector.broadcast %cst_39 : f32 to vector<8x8xf32>
    %61 = arith.select %6, %60, %59 : vector<8x8xi1>, vector<8x8xf32>
    %c1 = arith.constant 1 : index
    %c0_40 = arith.constant 0 : index
    %c0_41 = arith.constant 0 : index
    %62 = vector.load %arg8[%c1, %c0_40, %c0_41] : memref<4x8x1xf32, #tpu.memory_space<vmem>>, vector<1x8x1xf32>
    %63 = vector.shape_cast %62 : vector<1x8x1xf32> to vector<8x1xf32>
    %cst_42 = arith.constant dense<0xFF800000> : vector<8xf32>
    %64 = vector.multi_reduction <maximumf>, %61, %cst_42 [1] : vector<8x8xf32> to vector<8xf32>
    %65 = vector.shape_cast %64 : vector<8xf32> to vector<8x1xf32>
    %66 = arith.maximumf %63, %65 : vector<8x1xf32>
    %67 = arith.subf %63, %66 : vector<8x1xf32>
    %68 = math.exp %67 : vector<8x1xf32>
    %69 = vector.broadcast %66 : vector<8x1xf32> to vector<8x8xf32>
    %70 = arith.subf %61, %69 : vector<8x8xf32>
    %71 = math.exp %70 : vector<8x8xf32>
    %c1_43 = arith.constant 1 : index
    %c0_44 = arith.constant 0 : index
    %c0_45 = arith.constant 0 : index
    %72 = vector.load %arg9[%c1_43, %c0_44, %c0_45] : memref<4x8x1xf32, #tpu.memory_space<vmem>>, vector<1x8x1xf32>
    %73 = vector.shape_cast %72 : vector<1x8x1xf32> to vector<8x1xf32>
    %74 = arith.mulf %68, %73 : vector<8x1xf32>
    %cst_46 = arith.constant dense<0.000000e+00> : vector<8xf32>
    %75 = vector.multi_reduction <add>, %71, %cst_46 [1] : vector<8x8xf32> to vector<8xf32>
    %76 = vector.shape_cast %75 : vector<8xf32> to vector<8x1xf32>
    %77 = arith.addf %74, %76 : vector<8x1xf32>
    %c1_47 = arith.constant 1 : index
    %c0_48 = arith.constant 0 : index
    %c0_49 = arith.constant 0 : index
    %78 = vector.load %arg9[%c1_47, %c0_48, %c0_49] : memref<4x8x1xf32, #tpu.memory_space<vmem>>, vector<1x8x1xf32>
    %79 = vector.shape_cast %78 : vector<1x8x1xf32> to vector<8x1xf32>
    %80 = vector.shape_cast %77 : vector<8x1xf32> to vector<1x8x1xf32>
    tpu.vector_store %arg9[%c1_47, %c0_48, %c0_49], %80 {strides = array<i32>} : memref<4x8x1xf32, #tpu.memory_space<vmem>>, vector<1x8x1xf32>,
    %c1_50 = arith.constant 1 : index
    %c0_51 = arith.constant 0 : index
    %c0_52 = arith.constant 0 : index
    %81 = vector.load %arg10[%c1_50, %c0_51, %c0_52] : memref<4x8x8xf32, #tpu.memory_space<vmem>>, vector<1x8x8xf32>
    %82 = vector.shape_cast %81 : vector<1x8x8xf32> to vector<8x8xf32>
    %83 = vector.broadcast %68 : vector<8x1xf32> to vector<8x8xf32>
    %84 = arith.mulf %83, %82 : vector<8x8xf32>
    %cst_53 = arith.constant dense<0.000000e+00> : vector<8x8xf32>
    %85 = tpu.matmul %71, %58, %cst_53 {dimension_numbers = #tpu.dot_dimension_numbers<[1], [0], [0], [1], [0, 0, 1, 1], [], []>} : vector<8x8xf32>, vector<8x8xf32>, vector<8x8xf32> -> vector<8x8xf32>
    %86 = arith.addf %84, %85 : vector<8x8xf32>
    %c1_54 = arith.constant 1 : index
    %c0_55 = arith.constant 0 : index
    %c0_56 = arith.constant 0 : index
    %87 = vector.load %arg10[%c1_54, %c0_55, %c0_56] : memref<4x8x8xf32, #tpu.memory_space<vmem>>, vector<1x8x8xf32>
    %88 = vector.shape_cast %87 : vector<1x8x8xf32> to vector<8x8xf32>
    %89 = vector.shape_cast %86 : vector<8x8xf32> to vector<1x8x8xf32>
    tpu.vector_store %arg10[%c1_54, %c0_55, %c0_56], %89 {strides = array<i32>} : memref<4x8x8xf32, #tpu.memory_space<vmem>>, vector<1x8x8xf32>,
    %c1_57 = arith.constant 1 : index
    %c0_58 = arith.constant 0 : index
    %c0_59 = arith.constant 0 : index
    %90 = vector.load %arg8[%c1_57, %c0_58, %c0_59] : memref<4x8x1xf32, #tpu.memory_space<vmem>>, vector<1x8x1xf32>
    %91 = vector.shape_cast %90 : vector<1x8x1xf32> to vector<8x1xf32>
    %92 = vector.shape_cast %66 : vector<8x1xf32> to vector<1x8x1xf32>
    tpu.vector_store %arg8[%c1_57, %c0_58, %c0_59], %92 {strides = array<i32>} : memref<4x8x1xf32, #tpu.memory_space<vmem>>, vector<1x8x1xf32>,
    %93 = vector.extract_strided_slice %8 {offsets = [0, 2, 0], sizes = [8, 1, 8], strides = [1, 1, 1]} : vector<8x4x8xf32> to vector<8x1x8xf32>
    %94 = vector.shape_cast %93 : vector<8x1x8xf32> to vector<8x8xf32>
    %95 = vector.extract_strided_slice %10 {offsets = [0, 2, 0], sizes = [8, 1, 8], strides = [1, 1, 1]} : vector<8x4x8xf32> to vector<8x1x8xf32>
    %96 = vector.shape_cast %95 : vector<8x1x8xf32> to vector<8x8xf32>
    %97 = vector.extract_strided_slice %12 {offsets = [0, 2, 0], sizes = [8, 1, 8], strides = [1, 1, 1]} : vector<8x4x8xf32> to vector<8x1x8xf32>
    %98 = vector.shape_cast %97 : vector<8x1x8xf32> to vector<8x8xf32>
    %cst_60 = arith.constant dense<0.000000e+00> : vector<8x8xf32>
    %99 = tpu.matmul %94, %96, %cst_60 {dimension_numbers = #tpu.dot_dimension_numbers<[1], [1], [0], [0], [0, 0, 1, 0], [], []>} : vector<8x8xf32>, vector<8x8xf32>, vector<8x8xf32> -> vector<8x8xf32>
    %cst_61 = arith.constant -3.40282347E+38 : f32
    %100 = vector.broadcast %cst_61 : f32 to vector<8x8xf32>
    %101 = arith.select %6, %100, %99 : vector<8x8xi1>, vector<8x8xf32>
    %c2 = arith.constant 2 : index
    %c0_62 = arith.constant 0 : index
    %c0_63 = arith.constant 0 : index
    %102 = vector.load %arg8[%c2, %c0_62, %c0_63] : memref<4x8x1xf32, #tpu.memory_space<vmem>>, vector<1x8x1xf32>
    %103 = vector.shape_cast %102 : vector<1x8x1xf32> to vector<8x1xf32>
    %cst_64 = arith.constant dense<0xFF800000> : vector<8xf32>
    %104 = vector.multi_reduction <maximumf>, %101, %cst_64 [1] : vector<8x8xf32> to vector<8xf32>
    %105 = vector.shape_cast %104 : vector<8xf32> to vector<8x1xf32>
    %106 = arith.maximumf %103, %105 : vector<8x1xf32>
    %107 = arith.subf %103, %106 : vector<8x1xf32>
    %108 = math.exp %107 : vector<8x1xf32>
    %109 = vector.broadcast %106 : vector<8x1xf32> to vector<8x8xf32>
    %110 = arith.subf %101, %109 : vector<8x8xf32>
    %111 = math.exp %110 : vector<8x8xf32>
    %c2_65 = arith.constant 2 : index
    %c0_66 = arith.constant 0 : index
    %c0_67 = arith.constant 0 : index
    %112 = vector.load %arg9[%c2_65, %c0_66, %c0_67] : memref<4x8x1xf32, #tpu.memory_space<vmem>>, vector<1x8x1xf32>
    %113 = vector.shape_cast %112 : vector<1x8x1xf32> to vector<8x1xf32>
    %114 = arith.mulf %108, %113 : vector<8x1xf32>
    %cst_68 = arith.constant dense<0.000000e+00> : vector<8xf32>
    %115 = vector.multi_reduction <add>, %111, %cst_68 [1] : vector<8x8xf32> to vector<8xf32>
    %116 = vector.shape_cast %115 : vector<8xf32> to vector<8x1xf32>
    %117 = arith.addf %114, %116 : vector<8x1xf32>
    %c2_69 = arith.constant 2 : index
    %c0_70 = arith.constant 0 : index
    %c0_71 = arith.constant 0 : index
    %118 = vector.load %arg9[%c2_69, %c0_70, %c0_71] : memref<4x8x1xf32, #tpu.memory_space<vmem>>, vector<1x8x1xf32>
    %119 = vector.shape_cast %118 : vector<1x8x1xf32> to vector<8x1xf32>
    %120 = vector.shape_cast %117 : vector<8x1xf32> to vector<1x8x1xf32>
    tpu.vector_store %arg9[%c2_69, %c0_70, %c0_71], %120 {strides = array<i32>} : memref<4x8x1xf32, #tpu.memory_space<vmem>>, vector<1x8x1xf32>,
    %c2_72 = arith.constant 2 : index
    %c0_73 = arith.constant 0 : index
    %c0_74 = arith.constant 0 : index
    %121 = vector.load %arg10[%c2_72, %c0_73, %c0_74] : memref<4x8x8xf32, #tpu.memory_space<vmem>>, vector<1x8x8xf32>
    %122 = vector.shape_cast %121 : vector<1x8x8xf32> to vector<8x8xf32>
    %123 = vector.broadcast %108 : vector<8x1xf32> to vector<8x8xf32>
    %124 = arith.mulf %123, %122 : vector<8x8xf32>
    %cst_75 = arith.constant dense<0.000000e+00> : vector<8x8xf32>
    %125 = tpu.matmul %111, %98, %cst_75 {dimension_numbers = #tpu.dot_dimension_numbers<[1], [0], [0], [1], [0, 0, 1, 1], [], []>} : vector<8x8xf32>, vector<8x8xf32>, vector<8x8xf32> -> vector<8x8xf32>
    %126 = arith.addf %124, %125 : vector<8x8xf32>
    %c2_76 = arith.constant 2 : index
    %c0_77 = arith.constant 0 : index
    %c0_78 = arith.constant 0 : index
    %127 = vector.load %arg10[%c2_76, %c0_77, %c0_78] : memref<4x8x8xf32, #tpu.memory_space<vmem>>, vector<1x8x8xf32>
    %128 = vector.shape_cast %127 : vector<1x8x8xf32> to vector<8x8xf32>
    %129 = vector.shape_cast %126 : vector<8x8xf32> to vector<1x8x8xf32>
    tpu.vector_store %arg10[%c2_76, %c0_77, %c0_78], %129 {strides = array<i32>} : memref<4x8x8xf32, #tpu.memory_space<vmem>>, vector<1x8x8xf32>,
    %c2_79 = arith.constant 2 : index
    %c0_80 = arith.constant 0 : index
    %c0_81 = arith.constant 0 : index
    %130 = vector.load %arg8[%c2_79, %c0_80, %c0_81] : memref<4x8x1xf32, #tpu.memory_space<vmem>>, vector<1x8x1xf32>
    %131 = vector.shape_cast %130 : vector<1x8x1xf32> to vector<8x1xf32>
    %132 = vector.shape_cast %106 : vector<8x1xf32> to vector<1x8x1xf32>
    tpu.vector_store %arg8[%c2_79, %c0_80, %c0_81], %132 {strides = array<i32>} : memref<4x8x1xf32, #tpu.memory_space<vmem>>, vector<1x8x1xf32>,
    %133 = vector.extract_strided_slice %8 {offsets = [0, 3, 0], sizes = [8, 1, 8], strides = [1, 1, 1]} : vector<8x4x8xf32> to vector<8x1x8xf32>
    %134 = vector.shape_cast %133 : vector<8x1x8xf32> to vector<8x8xf32>
    %135 = vector.extract_strided_slice %10 {offsets = [0, 3, 0], sizes = [8, 1, 8], strides = [1, 1, 1]} : vector<8x4x8xf32> to vector<8x1x8xf32>
    %136 = vector.shape_cast %135 : vector<8x1x8xf32> to vector<8x8xf32>
    %137 = vector.extract_strided_slice %12 {offsets = [0, 3, 0], sizes = [8, 1, 8], strides = [1, 1, 1]} : vector<8x4x8xf32> to vector<8x1x8xf32>
    %138 = vector.shape_cast %137 : vector<8x1x8xf32> to vector<8x8xf32>
    %cst_82 = arith.constant dense<0.000000e+00> : vector<8x8xf32>
    %139 = tpu.matmul %134, %136, %cst_82 {dimension_numbers = #tpu.dot_dimension_numbers<[1], [1], [0], [0], [0, 0, 1, 0], [], []>} : vector<8x8xf32>, vector<8x8xf32>, vector<8x8xf32> -> vector<8x8xf32>
    %cst_83 = arith.constant -3.40282347E+38 : f32
    %140 = vector.broadcast %cst_83 : f32 to vector<8x8xf32>
    %141 = arith.select %6, %140, %139 : vector<8x8xi1>, vector<8x8xf32>
    %c3 = arith.constant 3 : index
    %c0_84 = arith.constant 0 : index
    %c0_85 = arith.constant 0 : index
    %142 = vector.load %arg8[%c3, %c0_84, %c0_85] : memref<4x8x1xf32, #tpu.memory_space<vmem>>, vector<1x8x1xf32>
    %143 = vector.shape_cast %142 : vector<1x8x1xf32> to vector<8x1xf32>
    %cst_86 = arith.constant dense<0xFF800000> : vector<8xf32>
    %144 = vector.multi_reduction <maximumf>, %141, %cst_86 [1] : vector<8x8xf32> to vector<8xf32>
    %145 = vector.shape_cast %144 : vector<8xf32> to vector<8x1xf32>
    %146 = arith.maximumf %143, %145 : vector<8x1xf32>
    %147 = arith.subf %143, %146 : vector<8x1xf32>
    %148 = math.exp %147 : vector<8x1xf32>
    %149 = vector.broadcast %146 : vector<8x1xf32> to vector<8x8xf32>
    %150 = arith.subf %141, %149 : vector<8x8xf32>
    %151 = math.exp %150 : vector<8x8xf32>
    %c3_87 = arith.constant 3 : index
    %c0_88 = arith.constant 0 : index
    %c0_89 = arith.constant 0 : index
    %152 = vector.load %arg9[%c3_87, %c0_88, %c0_89] : memref<4x8x1xf32, #tpu.memory_space<vmem>>, vector<1x8x1xf32>
    %153 = vector.shape_cast %152 : vector<1x8x1xf32> to vector<8x1xf32>
    %154 = arith.mulf %148, %153 : vector<8x1xf32>
    %cst_90 = arith.constant dense<0.000000e+00> : vector<8xf32>
    %155 = vector.multi_reduction <add>, %151, %cst_90 [1] : vector<8x8xf32> to vector<8xf32>
    %156 = vector.shape_cast %155 : vector<8xf32> to vector<8x1xf32>
    %157 = arith.addf %154, %156 : vector<8x1xf32>
    %c3_91 = arith.constant 3 : index
    %c0_92 = arith.constant 0 : index
    %c0_93 = arith.constant 0 : index
    %158 = vector.load %arg9[%c3_91, %c0_92, %c0_93] : memref<4x8x1xf32, #tpu.memory_space<vmem>>, vector<1x8x1xf32>
    %159 = vector.shape_cast %158 : vector<1x8x1xf32> to vector<8x1xf32>
    %160 = vector.shape_cast %157 : vector<8x1xf32> to vector<1x8x1xf32>
    tpu.vector_store %arg9[%c3_91, %c0_92, %c0_93], %160 {strides = array<i32>} : memref<4x8x1xf32, #tpu.memory_space<vmem>>, vector<1x8x1xf32>,
    %c3_94 = arith.constant 3 : index
    %c0_95 = arith.constant 0 : index
    %c0_96 = arith.constant 0 : index
    %161 = vector.load %arg10[%c3_94, %c0_95, %c0_96] : memref<4x8x8xf32, #tpu.memory_space<vmem>>, vector<1x8x8xf32>
    %162 = vector.shape_cast %161 : vector<1x8x8xf32> to vector<8x8xf32>
    %163 = vector.broadcast %148 : vector<8x1xf32> to vector<8x8xf32>
    %164 = arith.mulf %163, %162 : vector<8x8xf32>
    %cst_97 = arith.constant dense<0.000000e+00> : vector<8x8xf32>
    %165 = tpu.matmul %151, %138, %cst_97 {dimension_numbers = #tpu.dot_dimension_numbers<[1], [0], [0], [1], [0, 0, 1, 1], [], []>} : vector<8x8xf32>, vector<8x8xf32>, vector<8x8xf32> -> vector<8x8xf32>
    %166 = arith.addf %164, %165 : vector<8x8xf32>
    %c3_98 = arith.constant 3 : index
    %c0_99 = arith.constant 0 : index
    %c0_100 = arith.constant 0 : index
    %167 = vector.load %arg10[%c3_98, %c0_99, %c0_100] : memref<4x8x8xf32, #tpu.memory_space<vmem>>, vector<1x8x8xf32>
    %168 = vector.shape_cast %167 : vector<1x8x8xf32> to vector<8x8xf32>
    %169 = vector.shape_cast %166 : vector<8x8xf32> to vector<1x8x8xf32>
    tpu.vector_store %arg10[%c3_98, %c0_99, %c0_100], %169 {strides = array<i32>} : memref<4x8x8xf32, #tpu.memory_space<vmem>>, vector<1x8x8xf32>,
    %c3_101 = arith.constant 3 : index
    %c0_102 = arith.constant 0 : index
    %c0_103 = arith.constant 0 : index
    %170 = vector.load %arg8[%c3_101, %c0_102, %c0_103] : memref<4x8x1xf32, #tpu.memory_space<vmem>>, vector<1x8x1xf32>
    %171 = vector.shape_cast %170 : vector<1x8x1xf32> to vector<8x1xf32>
    %172 = vector.shape_cast %146 : vector<8x1xf32> to vector<1x8x1xf32>
    tpu.vector_store %arg8[%c3_101, %c0_102, %c0_103], %172 {strides = array<i32>} : memref<4x8x1xf32, #tpu.memory_space<vmem>>, vector<1x8x1xf32>,
    %c0_i32_104 = arith.constant 0 : i32
    %173 = arith.cmpi eq, %arg2, %c0_i32_104 : i32
    %174 = arith.extui %173 : i1 to i32
    %c0_i32_105 = arith.constant 0 : i32
    %175 = arith.cmpi ne, %174, %c0_i32_105 : i32
    scf.if %175 {
      %c0_106 = arith.constant 0 : index
      %c0_107 = arith.constant 0 : index
      %c0_108 = arith.constant 0 : index
      %176 = vector.load %arg9[%c0_106, %c0_107, %c0_108] : memref<4x8x1xf32, #tpu.memory_space<vmem>>, vector<1x8x1xf32>
      %177 = vector.shape_cast %176 : vector<1x8x1xf32> to vector<8x1xf32>
      %178 = tpu.reciprocal %177 {approx = true} : vector<8x1xf32> -> vector<8x1xf32>
      %c0_109 = arith.constant 0 : index
      %c0_110 = arith.constant 0 : index
      %c0_111 = arith.constant 0 : index
      %179 = vector.load %arg10[%c0_109, %c0_110, %c0_111] : memref<4x8x8xf32, #tpu.memory_space<vmem>>, vector<1x8x8xf32>
      %180 = vector.shape_cast %179 : vector<1x8x8xf32> to vector<8x8xf32>
      %181 = vector.broadcast %178 : vector<8x1xf32> to vector<8x8xf32>
      %182 = arith.mulf %180, %181 : vector<8x8xf32>
      %c1_112 = arith.constant 1 : index
      %c0_113 = arith.constant 0 : index
      %c0_114 = arith.constant 0 : index
      %183 = vector.load %arg9[%c1_112, %c0_113, %c0_114] : memref<4x8x1xf32, #tpu.memory_space<vmem>>, vector<1x8x1xf32>
      %184 = vector.shape_cast %183 : vector<1x8x1xf32> to vector<8x1xf32>
      %185 = tpu.reciprocal %184 {approx = true} : vector<8x1xf32> -> vector<8x1xf32>
      %c1_115 = arith.constant 1 : index
      %c0_116 = arith.constant 0 : index
      %c0_117 = arith.constant 0 : index
      %186 = vector.load %arg10[%c1_115, %c0_116, %c0_117] : memref<4x8x8xf32, #tpu.memory_space<vmem>>, vector<1x8x8xf32>
      %187 = vector.shape_cast %186 : vector<1x8x8xf32> to vector<8x8xf32>
      %188 = vector.broadcast %185 : vector<8x1xf32> to vector<8x8xf32>
      %189 = arith.mulf %187, %188 : vector<8x8xf32>
      %c2_118 = arith.constant 2 : index
      %c0_119 = arith.constant 0 : index
      %c0_120 = arith.constant 0 : index
      %190 = vector.load %arg9[%c2_118, %c0_119, %c0_120] : memref<4x8x1xf32, #tpu.memory_space<vmem>>, vector<1x8x1xf32>
      %191 = vector.shape_cast %190 : vector<1x8x1xf32> to vector<8x1xf32>
      %192 = tpu.reciprocal %191 {approx = true} : vector<8x1xf32> -> vector<8x1xf32>
      %c2_121 = arith.constant 2 : index
      %c0_122 = arith.constant 0 : index
      %c0_123 = arith.constant 0 : index
      %193 = vector.load %arg10[%c2_121, %c0_122, %c0_123] : memref<4x8x8xf32, #tpu.memory_space<vmem>>, vector<1x8x8xf32>
      %194 = vector.shape_cast %193 : vector<1x8x8xf32> to vector<8x8xf32>
      %195 = vector.broadcast %192 : vector<8x1xf32> to vector<8x8xf32>
      %196 = arith.mulf %194, %195 : vector<8x8xf32>
      %c3_124 = arith.constant 3 : index
      %c0_125 = arith.constant 0 : index
      %c0_126 = arith.constant 0 : index
      %197 = vector.load %arg9[%c3_124, %c0_125, %c0_126] : memref<4x8x1xf32, #tpu.memory_space<vmem>>, vector<1x8x1xf32>
      %198 = vector.shape_cast %197 : vector<1x8x1xf32> to vector<8x1xf32>
      %199 = tpu.reciprocal %198 {approx = true} : vector<8x1xf32> -> vector<8x1xf32>
      %c3_127 = arith.constant 3 : index
      %c0_128 = arith.constant 0 : index
      %c0_129 = arith.constant 0 : index
      %200 = vector.load %arg10[%c3_127, %c0_128, %c0_129] : memref<4x8x8xf32, #tpu.memory_space<vmem>>, vector<1x8x8xf32>
      %201 = vector.shape_cast %200 : vector<1x8x8xf32> to vector<8x8xf32>
      %202 = vector.broadcast %199 : vector<8x1xf32> to vector<8x8xf32>
      %203 = arith.mulf %201, %202 : vector<8x8xf32>
      %204 = tpu.concatenate %182, %189, %196, %203 in 1 : vector<8x8xf32>, vector<8x8xf32>, vector<8x8xf32>, vector<8x8xf32> -> vector<8x32xf32>
      %c0_130 = arith.constant 0 : index
      %c0_131 = arith.constant 0 : index
      %c0_132 = arith.constant 0 : index
      %205 = vector.load %arg7[%c0_130, %c0_131, %c0_132] : memref<1x8x32xf32, #tpu.memory_space<vmem>>, vector<1x8x32xf32>
      %206 = vector.shape_cast %205 : vector<1x8x32xf32> to vector<8x32xf32>
      %207 = vector.shape_cast %204 : vector<8x32xf32> to vector<1x8x32xf32>
      tpu.vector_store %arg7[%c0_130, %c0_131, %c0_132], %207 {strides = array<i32>} : memref<1x8x32xf32, #tpu.memory_space<vmem>>, vector<1x8x32xf32>,
    } else {
    }
    return
  }
  func.func @transform_0(%arg0: i32, %arg1: i32, %arg2: i32) -> (i32, i32, i32, i32) {
    %c0_i32 = arith.constant 0 : i32
    %c0_i32_0 = arith.constant 0 : i32
    %c0_i32_1 = arith.constant 0 : i32
    return %arg0, %arg1, %c0_i32, %c0_i32_0 : i32, i32, i32, i32
  }
  func.func @transform_1(%arg0: i32, %arg1: i32, %arg2: i32) -> (i32, i32, i32, i32) {
    %c0_i32 = arith.constant 0 : i32
    %c0_i32_0 = arith.constant 0 : i32
    %c0_i32_1 = arith.constant 0 : i32
    return %arg0, %arg2, %c0_i32, %c0_i32_0 : i32, i32, i32, i32
  }
  func.func @transform_2(%arg0: i32, %arg1: i32, %arg2: i32) -> (i32, i32, i32, i32) {
    %c0_i32 = arith.constant 0 : i32
    %c0_i32_0 = arith.constant 0 : i32
    %c0_i32_1 = arith.constant 0 : i32
    return %arg0, %arg2, %c0_i32, %c0_i32_0 : i32, i32, i32, i32
  }
  func.func @transform_3(%arg0: i32, %arg1: i32, %arg2: i32) -> (i32, i32, i32, i32) {
    %c0_i32 = arith.constant 0 : i32
    %c0_i32_0 = arith.constant 0 : i32
    return %arg0, %c0_i32, %arg1, %arg2 : i32, i32, i32, i32
  }
  func.func @transform_4(%arg0: i32, %arg1: i32, %arg2: i32) -> (i32, i32, i32) {
    %c0_i32 = arith.constant 0 : i32
    %c0_i32_0 = arith.constant 0 : i32
    return %arg0, %arg1, %c0_i32 : i32, i32, i32
  }
}

module attributes {stable_mosaic.version = 11 : i64} {
  func.func @_matmul_bias_res_kernel(%arg0: i32, %arg1: i32, %arg2: i32, %arg3: memref<16x32xf32, #tpu.memory_space<vmem>>, %arg4: memref<32x32xf32, #tpu.memory_space<vmem>>, %arg5: memref<1x32xf32, #tpu.memory_space<vmem>>, %arg6: memref<16x32xf32, #tpu.memory_space<vmem>>, %arg7: memref<16x32xf32, #tpu.memory_space<vmem>>, %arg8: memref<16x32xf32, #tpu.memory_space<vmem>>) attributes {dimension_semantics = [#tpu.dimension_semantics<parallel>, #tpu.dimension_semantics<parallel>, #tpu.dimension_semantics<arbitrary>], iteration_bounds = array<i64: 1, 1, 1>, scalar_prefetch = 0 : i64, scratch_operands = 1 : i64, tpu.core_type = #tpu.core_type<tc>, window_params = [{transform_indices = @transform_0, window_bounds = array<i64: 16, 32>}, {transform_indices = @transform_1, window_bounds = array<i64: 32, 32>}, {transform_indices = @transform_2, window_bounds = array<i64: 1, 32>}, {transform_indices = @transform_3, window_bounds = array<i64: 16, 32>}, {transform_indices = @transform_4, window_bounds = array<i64: 16, 32>}]} {
    %c0_i32 = arith.constant 0 : i32
    %0 = arith.cmpi eq, %arg2, %c0_i32 : i32
    %1 = arith.extui %0 : i1 to i32
    %c0_i32_0 = arith.constant 0 : i32
    %2 = arith.cmpi ne, %1, %c0_i32_0 : i32
    scf.if %2 {
      %cst_10 = arith.constant 0.000000e+00 : f32
      %12 = vector.broadcast %cst_10 : f32 to vector<16x32xf32>
      %c0_11 = arith.constant 0 : index
      %c0_12 = arith.constant 0 : index
      %13 = vector.load %arg8[%c0_11, %c0_12] : memref<16x32xf32, #tpu.memory_space<vmem>>, vector<16x32xf32>
      tpu.vector_store %arg8[%c0_11, %c0_12], %12 {strides = array<i32>} : memref<16x32xf32, #tpu.memory_space<vmem>>, vector<16x32xf32>,
    } else {
    }
    %c0 = arith.constant 0 : index
    %c0_1 = arith.constant 0 : index
    %3 = vector.load %arg8[%c0, %c0_1] : memref<16x32xf32, #tpu.memory_space<vmem>>, vector<16x32xf32>
    %c0_2 = arith.constant 0 : index
    %c0_3 = arith.constant 0 : index
    %4 = vector.load %arg3[%c0_2, %c0_3] : memref<16x32xf32, #tpu.memory_space<vmem>>, vector<16x32xf32>
    %c0_4 = arith.constant 0 : index
    %c0_5 = arith.constant 0 : index
    %5 = vector.load %arg4[%c0_4, %c0_5] : memref<32x32xf32, #tpu.memory_space<vmem>>, vector<32x32xf32>
    %cst = arith.constant dense<0.000000e+00> : vector<16x32xf32>
    %6 = tpu.matmul %4, %5, %cst {dimension_numbers = #tpu.dot_dimension_numbers<[1], [0], [0], [1], [0, 0, 1, 1], [], []>} : vector<16x32xf32>, vector<32x32xf32>, vector<16x32xf32> -> vector<16x32xf32>
    %7 = arith.addf %3, %6 : vector<16x32xf32>
    %c0_6 = arith.constant 0 : index
    %c0_7 = arith.constant 0 : index
    %8 = vector.load %arg8[%c0_6, %c0_7] : memref<16x32xf32, #tpu.memory_space<vmem>>, vector<16x32xf32>
    tpu.vector_store %arg8[%c0_6, %c0_7], %7 {strides = array<i32>} : memref<16x32xf32, #tpu.memory_space<vmem>>, vector<16x32xf32>,
    %c0_i32_8 = arith.constant 0 : i32
    %9 = arith.cmpi eq, %arg2, %c0_i32_8 : i32
    %10 = arith.extui %9 : i1 to i32
    %c0_i32_9 = arith.constant 0 : i32
    %11 = arith.cmpi ne, %10, %c0_i32_9 : i32
    scf.if %11 {
      %c0_10 = arith.constant 0 : index
      %c0_11 = arith.constant 0 : index
      %12 = vector.load %arg8[%c0_10, %c0_11] : memref<16x32xf32, #tpu.memory_space<vmem>>, vector<16x32xf32>
      %c0_12 = arith.constant 0 : index
      %c0_13 = arith.constant 0 : index
      %13 = vector.load %arg5[%c0_12, %c0_13] : memref<1x32xf32, #tpu.memory_space<vmem>>, vector<1x32xf32>
      %14 = vector.broadcast %13 : vector<1x32xf32> to vector<16x32xf32>
      %15 = arith.addf %12, %14 : vector<16x32xf32>
      %c0_14 = arith.constant 0 : index
      %c0_15 = arith.constant 0 : index
      %16 = vector.load %arg6[%c0_14, %c0_15] : memref<16x32xf32, #tpu.memory_space<vmem>>, vector<16x32xf32>
      %17 = arith.addf %15, %16 : vector<16x32xf32>
      %c0_16 = arith.constant 0 : index
      %c0_17 = arith.constant 0 : index
      %18 = vector.load %arg7[%c0_16, %c0_17] : memref<16x32xf32, #tpu.memory_space<vmem>>, vector<16x32xf32>
      tpu.vector_store %arg7[%c0_16, %c0_17], %17 {strides = array<i32>} : memref<16x32xf32, #tpu.memory_space<vmem>>, vector<16x32xf32>,
    } else {
    }
    return
  }
  func.func @transform_0(%arg0: i32, %arg1: i32, %arg2: i32) -> (i32, i32) {
    %c0_i32 = arith.constant 0 : i32
    return %arg0, %arg2 : i32, i32
  }
  func.func @transform_1(%arg0: i32, %arg1: i32, %arg2: i32) -> (i32, i32) {
    %c0_i32 = arith.constant 0 : i32
    return %arg2, %arg1 : i32, i32
  }
  func.func @transform_2(%arg0: i32, %arg1: i32, %arg2: i32) -> (i32, i32) {
    %c0_i32 = arith.constant 0 : i32
    %c0_i32_0 = arith.constant 0 : i32
    return %c0_i32, %arg1 : i32, i32
  }
  func.func @transform_3(%arg0: i32, %arg1: i32, %arg2: i32) -> (i32, i32) {
    %c0_i32 = arith.constant 0 : i32
    return %arg0, %arg1 : i32, i32
  }
  func.func @transform_4(%arg0: i32, %arg1: i32, %arg2: i32) -> (i32, i32) {
    %c0_i32 = arith.constant 0 : i32
    return %arg0, %arg1 : i32, i32
  }
}

module attributes {stable_mosaic.version = 11 : i64} {
  func.func @_rope_kernel(%arg0: i32, %arg1: i32, %arg2: memref<1x8x4x8xf32, #tpu.memory_space<vmem>>, %arg3: memref<8x8xf32, #tpu.memory_space<vmem>>, %arg4: memref<8x8xf32, #tpu.memory_space<vmem>>, %arg5: memref<1x8x4x8xf32, #tpu.memory_space<vmem>>) attributes {dimension_semantics = [#tpu.dimension_semantics<parallel>, #tpu.dimension_semantics<parallel>], iteration_bounds = array<i64: 2, 1>, scalar_prefetch = 0 : i64, scratch_operands = 0 : i64, tpu.core_type = #tpu.core_type<tc>, window_params = [{transform_indices = @transform_0, window_bounds = array<i64: 1, 8, 4, 8>}, {transform_indices = @transform_1, window_bounds = array<i64: 8, 8>}, {transform_indices = @transform_2, window_bounds = array<i64: 8, 8>}, {transform_indices = @transform_3, window_bounds = array<i64: 1, 8, 4, 8>}]} {
    %c0 = arith.constant 0 : index
    %c0_0 = arith.constant 0 : index
    %c0_1 = arith.constant 0 : index
    %c0_2 = arith.constant 0 : index
    %0 = vector.load %arg2[%c0, %c0_0, %c0_1, %c0_2] : memref<1x8x4x8xf32, #tpu.memory_space<vmem>>, vector<1x8x4x8xf32>
    %1 = vector.shape_cast %0 : vector<1x8x4x8xf32> to vector<8x4x8xf32>
    %c0_3 = arith.constant 0 : index
    %c0_4 = arith.constant 0 : index
    %2 = vector.load %arg3[%c0_3, %c0_4] : memref<8x8xf32, #tpu.memory_space<vmem>>, vector<8x8xf32>
    %3 = vector.shape_cast %2 : vector<8x8xf32> to vector<8x1x8xf32>
    %c0_5 = arith.constant 0 : index
    %c0_6 = arith.constant 0 : index
    %4 = vector.load %arg4[%c0_5, %c0_6] : memref<8x8xf32, #tpu.memory_space<vmem>>, vector<8x8xf32>
    %5 = vector.shape_cast %4 : vector<8x8xf32> to vector<8x1x8xf32>
    %6 = vector.extract_strided_slice %1 {offsets = [0, 0, 0], sizes = [8, 4, 4], strides = [1, 1, 1]} : vector<8x4x8xf32> to vector<8x4x4xf32>
    %7 = vector.extract_strided_slice %1 {offsets = [0, 0, 4], sizes = [8, 4, 4], strides = [1, 1, 1]} : vector<8x4x8xf32> to vector<8x4x4xf32>
    %cst = arith.constant 0.000000e+00 : f32
    %8 = vector.broadcast %cst : f32 to vector<8x4x4xf32>
    %9 = arith.subf %8, %7 : vector<8x4x4xf32>
    %10 = tpu.concatenate %9, %6 in 2 : vector<8x4x4xf32>, vector<8x4x4xf32> -> vector<8x4x8xf32>
    %11 = vector.broadcast %3 : vector<8x1x8xf32> to vector<8x4x8xf32>
    %12 = arith.mulf %1, %11 : vector<8x4x8xf32>
    %13 = vector.broadcast %5 : vector<8x1x8xf32> to vector<8x4x8xf32>
    %14 = arith.mulf %10, %13 : vector<8x4x8xf32>
    %15 = arith.addf %12, %14 : vector<8x4x8xf32>
    %cst_7 = arith.constant 0.353553385 : f32
    %16 = vector.broadcast %cst_7 : f32 to vector<8x4x8xf32>
    %17 = arith.mulf %15, %16 : vector<8x4x8xf32>
    %c0_8 = arith.constant 0 : index
    %c0_9 = arith.constant 0 : index
    %c0_10 = arith.constant 0 : index
    %c0_11 = arith.constant 0 : index
    %18 = vector.load %arg5[%c0_8, %c0_9, %c0_10, %c0_11] : memref<1x8x4x8xf32, #tpu.memory_space<vmem>>, vector<1x8x4x8xf32>
    %19 = vector.shape_cast %18 : vector<1x8x4x8xf32> to vector<8x4x8xf32>
    %20 = vector.shape_cast %17 : vector<8x4x8xf32> to vector<1x8x4x8xf32>
    tpu.vector_store %arg5[%c0_8, %c0_9, %c0_10, %c0_11], %20 {strides = array<i32>} : memref<1x8x4x8xf32, #tpu.memory_space<vmem>>, vector<1x8x4x8xf32>,
    return
  }
  func.func @transform_0(%arg0: i32, %arg1: i32) -> (i32, i32, i32, i32) {
    %c0_i32 = arith.constant 0 : i32
    %c0_i32_0 = arith.constant 0 : i32
    %c0_i32_1 = arith.constant 0 : i32
    return %arg0, %arg1, %c0_i32, %c0_i32_0 : i32, i32, i32, i32
  }
  func.func @transform_1(%arg0: i32, %arg1: i32) -> (i32, i32) {
    %c0_i32 = arith.constant 0 : i32
    %c0_i32_0 = arith.constant 0 : i32
    return %arg1, %c0_i32 : i32, i32
  }
  func.func @transform_2(%arg0: i32, %arg1: i32) -> (i32, i32) {
    %c0_i32 = arith.constant 0 : i32
    %c0_i32_0 = arith.constant 0 : i32
    return %arg1, %c0_i32 : i32, i32
  }
  func.func @transform_3(%arg0: i32, %arg1: i32) -> (i32, i32, i32, i32) {
    %c0_i32 = arith.constant 0 : i32
    %c0_i32_0 = arith.constant 0 : i32
    %c0_i32_1 = arith.constant 0 : i32
    return %arg0, %arg1, %c0_i32, %c0_i32_0 : i32, i32, i32, i32
  }
}

</mosaic_0001>

<llo_original>
// kernel: _lambda_.5
$region0: #{_lambda_.5}
  #allocation0 [shape = 'u32[]', space=smem, size = 0x4, offset = 0x4, fixed_abs, tag = 'smem constant byte address 0x4 - core index']
  #allocation1 [shape = 'u32[144,128]{1,0:T(1,128)}', space=vmem, size = 0x12000, scoped, tag = 'internal scratch']
  #allocation2 [shape = 'f32[16,96]{1,0:T(8,128)}', space=vmem, size = 0x2000, scoped, tag = 'scratch operand']
  %s0 = inlined_call_operand.vmem [shape: f32[16,32], index: 0, kind: input, shape index: {}]
  %s1 = inlined_call_operand.vmem [shape: f32[32,96], index: 1, kind: input, shape index: {}]
  %s2 = inlined_call_operand.vmem [shape: f32[16,96], index: 2, kind: output, shape index: {}]
  %s3 = sld [smem:[#allocation0]]
  $region26: #{_lambda_.5} parent=0
    _
  %s5 = ssub.s32 1, %s3
  %s6 = scalar_select 0, %s5, %s3
  // Predicated region
  $region2: #{_lambda_.5} parent=0 // pred_check
    _
  $region3: #{_lambda_.5} parent=0 // pred_check_branch
    %8 = sbr.rel (0) target = $region5
  $region4: #{_lambda_.5} parent=0 // pred_region
    _
  $region5: #{_lambda_.5} parent=0 // pred_fallthru
    _
  // Predicated region
  $region6: #{_lambda_.5} parent=0 // pred_check
    _
  $region7: #{_lambda_.5} parent=0 // pred_check_branch
    %10 = sbr.rel (0) target = $region9
  $region8: #{_lambda_.5} parent=0 // pred_region
    _
  $region9: #{_lambda_.5} parent=0 // pred_fallthru
    _
  %p11 = scmp.eq.s32.totalorder 0, 0
  // Predicated region
  $region10: #{_lambda_.5} parent=0 // pred_check
    %p12 = pneg %p11
  $region11: #{_lambda_.5} parent=0 // pred_check_branch
    %14 = sbr.rel (%p12) target = $region13
  $region12: #{_lambda_.5} parent=0 // pred_region
    %vm15 = vcmask 785408
    %16 = vst.msk [vmem:[#allocation2] sm:$0xff] %vm15, 0.0
    %17 = vst.msk [vmem:[#allocation2 + $0x8] sm:$0xff] %vm15, 0.0
  $region13: #{_lambda_.5} parent=0 // pred_fallthru
    _
  %v18 = vld [vmem:[#allocation2] sm:$0xff]
  %v19 = vld [vmem:[#allocation2 + $0x8] sm:$0xff]
  %v20 = vld [vmem:[%s0] sm:$0xff]
  %v21 = vld [vmem:[%s0 + $0x8] sm:$0xff]
  %v22 = vld [vmem:[%s1] sm:$0xff]
  %v23 = vld [vmem:[%s1 + $0x8] sm:$0xff]
  %v24 = vld [vmem:[%s1 + $0x10] sm:$0xff]
  %v25 = vld [vmem:[%s1 + $0x18] sm:$0xff]
  %vm26 = vcmask 261120
  %v28 = vsel %vm26, %v20, 0
  %v31 = vsel %vm26, %v21, 0
  %33 = vmatprep.subr.mxu0 0.0
  %34 = vmatpush1.msra.mxu0 0.0
  %35 = vmatprep.subr.mxu0 0.0
  %36 = vmatpush1.msra.mxu0 0.0
  %37 = vmatprep.subr.mxu0 0.0
  %38 = vmatpush1.msra.mxu0 0.0
  %39 = vmatprep.subr.mxu0 0.0
  %40 = vmatpush1.msra.mxu0 0.0
  %41 = vmatprep.subr.mxu0 0.0
  %42 = vmatpush1.msra.mxu0 0.0
  %43 = vmatprep.subr.mxu0 0.0
  %44 = vmatpush1.msra.mxu0 0.0
  %45 = vmatprep.subr.mxu0 0.0
  %46 = vmatpush1.msra.mxu0 0.0
  %47 = vmatprep.subr.mxu0 0.0
  %48 = vmatpush1.msra.mxu0 0.0
  %49 = vmatprep.subr.mxu0 0.0
  %50 = vmatpush1.msra.mxu0 0.0
  %51 = vmatprep.subr.mxu0 0.0
  %52 = vmatpush1.msra.mxu0 0.0
  %53 = vmatprep.subr.mxu0 0.0
  %54 = vmatpush1.msra.mxu0 0.0
  %55 = vmatprep.subr.mxu0 0.0
  %56 = vmatpush1.msra.mxu0 0.0
  %57 = vmatprep.subr.mxu0 0.0
  %58 = vmatpush1.msra.mxu0 %v25
  %59 = vmatprep.subr.mxu0 0.0
  %60 = vmatpush1.msra.mxu0 %v24
  %61 = vmatprep.subr.mxu0 0.0
  %62 = vmatpush1.msra.mxu0 %v23
  %63 = vmatprep.subr.mxu0 0.0
  %64 = vmatpush1.msra.mxu0 %v22
  %65 = vmatprep.subr.mxu0 0.0
  %66 = vmatpush2.msra.mxu0 0.0
  %67 = vmatprep.subr.mxu0 0.0
  %68 = vmatpush2.msra.mxu0 0.0
  %69 = vmatprep.subr.mxu0 0.0
  %70 = vmatpush2.msra.mxu0 0.0
  %71 = vmatprep.subr.mxu0 0.0
  %72 = vmatpush2.msra.mxu0 0.0
  %73 = vmatprep.subr.mxu0 0.0
  %74 = vmatpush2.msra.mxu0 0.0
  %75 = vmatprep.subr.mxu0 0.0
  %76 = vmatpush2.msra.mxu0 0.0
  %77 = vmatprep.subr.mxu0 0.0
  %78 = vmatpush2.msra.mxu0 0.0
  %79 = vmatprep.subr.mxu0 0.0
  %80 = vmatpush2.msra.mxu0 0.0
  %81 = vmatprep.subr.mxu0 0.0
  %82 = vmatpush2.msra.mxu0 0.0
  %83 = vmatprep.subr.mxu0 0.0
  %84 = vmatpush2.msra.mxu0 0.0
  %85 = vmatprep.subr.mxu0 0.0
  %86 = vmatpush2.msra.mxu0 0.0
  %87 = vmatprep.subr.mxu0 0.0
  %88 = vmatpush2.msra.mxu0 0.0
  %89 = vmatprep.subr.mxu0 0.0
  %90 = vmatpush2.msra.mxu0 0.0
  %91 = vmatprep.subr.mxu0 0.0
  %92 = vmatpush2.msra.mxu0 0.0
  %93 = vmatprep.subr.mxu0 0.0
  %94 = vmatpush2.msra.mxu0 0.0
  %95 = vmatprep.subr.mxu0 0.0
  %96 = vmatpush2.msra.mxu0 0.0
  %97 = vmatprep.mubr.f32.mxu0 0.0
  %98 = vmatmul.mubr.f32.gmra.mxu0 %v28
  %v99 = vpop.f32.mrf.mxu0
  %v100 = vadd.f32 0.0, %v99
  %v101 = vpop.f32.mrf.mxu0
  %102 = vmatprep.mubr.f32.mxu0 0.0
  %103 = vmatmul.mubr.f32.gmra.mxu0 %v31
  %v104 = vpop.f32.mrf.mxu0
  %v105 = vadd.f32 0.0, %v104
  %v106 = vpop.f32.mrf.mxu0
  %107 = vdwg.mxu0
  %v108 = vadd.f32 %v18, %v100
  %v109 = vadd.f32 %v19, %v105
  %vm110 = vcmask 785408
  %111 = vst.msk [vmem:[#allocation2] sm:$0xff] %vm110, %v108
  %112 = vst.msk [vmem:[#allocation2 + $0x8] sm:$0xff] %vm110, %v109
  // Predicated region
  $region14: #{_lambda_.5} parent=0 // pred_check
    %p113 = pneg %p11
  $region15: #{_lambda_.5} parent=0 // pred_check_branch
    %115 = sbr.rel (%p113) target = $region17
  $region16: #{_lambda_.5} parent=0 // pred_region
    %v116 = vld [vmem:[#allocation2] sm:$0xff]
    %v117 = vld [vmem:[#allocation2 + $0x8] sm:$0xff]
    %118 = vst.msk [vmem:[%s2] sm:$0xff] %vm110, %v116
    %119 = vst.msk [vmem:[%s2 + $0x8] sm:$0xff] %vm110, %v117
  $region17: #{_lambda_.5} parent=0 // pred_fallthru
    _
  // Predicated region
  $region18: #{_lambda_.5} parent=0 // pred_check
    _
  $region19: #{_lambda_.5} parent=0 // pred_check_branch
    %121 = sbr.rel (0) target = $region21
  $region20: #{_lambda_.5} parent=0 // pred_region
    _
  $region21: #{_lambda_.5} parent=0 // pred_fallthru
    _
  // Predicated region
  $region22: #{_lambda_.5} parent=0 // pred_check
    _
  $region23: #{_lambda_.5} parent=0 // pred_check_branch
    %123 = sbr.rel (0) target = $region25
  $region24: #{_lambda_.5} parent=0 // pred_region
    _
  $region25: #{_lambda_.5} parent=0 // pred_fallthru
    _

// kernel: _lambda_.7
$region0: #{_lambda_.7}
  #allocation0 [shape = 'u32[]', space=smem, size = 0x4, offset = 0x4, fixed_abs, tag = 'smem constant byte address 0x4 - core index']
  #allocation1 [shape = 'u32[144,128]{1,0:T(1,128)}', space=vmem, size = 0x12000, scoped, tag = 'internal scratch']
  %s0 = inlined_call_operand.vmem [shape: f32[2,8,4,8], index: 0, kind: input, shape index: {}]
  %s1 = inlined_call_operand.vmem [shape: f32[8,8], index: 1, kind: input, shape index: {}]
  %s2 = inlined_call_operand.vmem [shape: f32[8,8], index: 2, kind: input, shape index: {}]
  %s3 = inlined_call_operand.vmem [shape: f32[2,8,4,8], index: 3, kind: output, shape index: {}]
  %s4 = sld [smem:[#allocation0]]
  $region45: #{_lambda_.7} parent=0
    _
  %s6 = ssub.s32 1, %s4
  %s7 = scalar_select 0, %s6, %s4
  loop: start=0, step=1, limit=4
  $region2: #{_lambda_.7} parent=0 // loop_pre_header
    _
  $region3: #{_lambda_.7} parent=0 // loop_header
    %s9 = sphi 0, %s13
    %p10 = scmp.ge.s32.totalorder %s9, 4
    %s16 = sphi 0, %s28
    %s17 = sphi 0, %s24
    %s18 = sphi 0, %s16
    %s19 = sphi 0, %s17
    %s20 = sphi 0, %s18
    %s21 = sphi 0, %s19
    %s33 = sphi 0, %s35
    %s36 = sphi 0, %s33
    %s37 = sphi 0, %s36
    %s53 = sphi 0, %s37
    %s59 = sphi 0, %s61
    %s62 = sphi 0, %s59
    %s63 = sphi 0, %s62
    %s79 = sphi 0, %s63
    %s85 = sphi 0, %s87
    %s88 = sphi 0, %s85
    %s89 = sphi 0, %s88
    %s105 = sphi 0, %s89
    %s113 = sphi 0, %s115
    %s116 = sphi 0, %s113
    %s117 = sphi 0, %s116
    %s133 = sphi 0, %s117
  $region4: #{_lambda_.7} parent=0 // loop_header_branch
    %12 = sbr.rel (%p10) target = $region8
  $region5: #{_lambda_.7} parent=0 // loop_body
    %s14 = ssub.s32 %s9, 1
    %s15 = ssub.s32 %s9, 2
    %s22 = sadd.s32 1, %s17
    %p23 = scmp.ge.s32.totalorder %s22, 1
    %s24 = scalar_select %p23, 0, %s22
    %s25 = sadd.s32 1, %s16
    %s26 = scalar_select %p23, %s25, %s16
    %p27 = scmp.ge.s32.totalorder %s26, 2
    %s28 = scalar_select %p27, 0, %s26
    %s29 = ssub.s32 %s16, %s28
    %s30 = ssub.s32 %s17, %s24
    %s31 = sor.u32 %s29, %s30
    %p32 = scmp.eq.s32.totalorder %s31, 0
    %s34 = sadd.s32 %s33, 1
    %s35 = scalar_select %p32, %s33, %s34
    %p38 = pneg %p32
    %p39 = scmp.eq.s32.totalorder %s9, 1
    %p40 = por %p38, %p39
    %p41 = scmp.ne.s32.totalorder %s33, %s36
    %p42 = scmp.eq.s32.totalorder %s9, 0
    %p43 = por %p41, %p42
    %p44 = scmp.ne.s32.totalorder %s33, %s36
    %p45 = scmp.eq.s32.totalorder %s14, 1
    %p46 = por %p44, %p45
    %p47 = scmp.ne.s32.totalorder %s36, %s37
    %p48 = scmp.eq.s32.totalorder %s14, 0
    %p49 = por %p47, %p48
    %p50 = scmp.ne.s32.totalorder %s36, %s37
    %p51 = scmp.eq.s32.totalorder %s15, 1
    %p52 = por %p50, %p51
    %p54 = scmp.ne.s32.totalorder %s37, %s53
    %p55 = scmp.eq.s32.totalorder %s15, 0
    %p56 = por %p54, %p55
    %s57 = ssub.s32 %s17, %s24
    %p58 = scmp.eq.s32.totalorder %s57, 0
    %s60 = sadd.s32 %s59, 1
    %s61 = scalar_select %p58, %s59, %s60
    %p64 = pneg %p58
    %p65 = scmp.eq.s32.totalorder %s9, 1
    %p66 = por %p64, %p65
    %p67 = scmp.ne.s32.totalorder %s59, %s62
    %p68 = scmp.eq.s32.totalorder %s9, 0
    %p69 = por %p67, %p68
    %p70 = scmp.ne.s32.totalorder %s59, %s62
    %p71 = scmp.eq.s32.totalorder %s14, 1
    %p72 = por %p70, %p71
    %p73 = scmp.ne.s32.totalorder %s62, %s63
    %p74 = scmp.eq.s32.totalorder %s14, 0
    %p75 = por %p73, %p74
    %p76 = scmp.ne.s32.totalorder %s62, %s63
    %p77 = scmp.eq.s32.totalorder %s15, 1
    %p78 = por %p76, %p77
    %p80 = scmp.ne.s32.totalorder %s63, %s79
    %p81 = scmp.eq.s32.totalorder %s15, 0
    %p82 = por %p80, %p81
    %s83 = ssub.s32 %s17, %s24
    %p84 = scmp.eq.s32.totalorder %s83, 0
    %s86 = sadd.s32 %s85, 1
    %s87 = scalar_select %p84, %s85, %s86
    %p90 = pneg %p84
    %p91 = scmp.eq.s32.totalorder %s9, 1
    %p92 = por %p90, %p91
    %p93 = scmp.ne.s32.totalorder %s85, %s88
    %p94 = scmp.eq.s32.totalorder %s9, 0
    %p95 = por %p93, %p94
    %p96 = scmp.ne.s32.totalorder %s85, %s88
    %p97 = scmp.eq.s32.totalorder %s14, 1
    %p98 = por %p96, %p97
    %p99 = scmp.ne.s32.totalorder %s88, %s89
    %p100 = scmp.eq.s32.totalorder %s14, 0
    %p101 = por %p99, %p100
    %p102 = scmp.ne.s32.totalorder %s88, %s89
    %p103 = scmp.eq.s32.totalorder %s15, 1
    %p104 = por %p102, %p103
    %p106 = scmp.ne.s32.totalorder %s89, %s105
    %p107 = scmp.eq.s32.totalorder %s15, 0
    %p108 = por %p106, %p107
    %s109 = ssub.s32 %s16, %s28
    %s110 = ssub.s32 %s17, %s24
    %s111 = sor.u32 %s109, %s110
    %p112 = scmp.eq.s32.totalorder %s111, 0
    %s114 = sadd.s32 %s113, 1
    %s115 = scalar_select %p112, %s113, %s114
    %p118 = pneg %p112
    %p119 = scmp.eq.s32.totalorder %s9, 1
    %p120 = por %p118, %p119
    %p121 = scmp.ne.s32.totalorder %s113, %s116
    %p122 = scmp.eq.s32.totalorder %s9, 0
    %p123 = por %p121, %p122
    %p124 = scmp.ne.s32.totalorder %s113, %s116
    %p125 = scmp.eq.s32.totalorder %s14, 1
    %p126 = por %p124, %p125
    %p127 = scmp.ne.s32.totalorder %s116, %s117
    %p128 = scmp.eq.s32.totalorder %s14, 0
    %p129 = por %p127, %p128
    %p130 = scmp.ne.s32.totalorder %s116, %s117
    %p131 = scmp.eq.s32.totalorder %s15, 1
    %p132 = por %p130, %p131
    %p134 = scmp.ne.s32.totalorder %s117, %s133
    %p135 = scmp.eq.s32.totalorder %s15, 0
    %p136 = por %p134, %p135
    %p137 = scmp.le.s32.totalorder 1, %s9
    %p138 = scmp.lt.s32.totalorder %s9, 3
    %p139 = pnand %p137, %p138
    %p140 = pneg %p139
    // Predicated region
    $region9: #{_lambda_.7} parent=5 // pred_check
      _
    $region10: #{_lambda_.7} parent=5 // pred_check_branch
      %142 = sbr.rel (%p139) target = $region12
    $region11: #{_lambda_.7} parent=5 // pred_region
      %s143 = ssub.s32 %s9, 1
      // Predicated region
      $region13: #{_lambda_.7} parent=11 // pred_check
        %p144 = pneg %p75
      $region14: #{_lambda_.7} parent=11 // pred_check_branch
        %146 = sbr.rel (%p144) target = $region16
      $region15: #{_lambda_.7} parent=11 // pred_region
        %p147 = scmp.lt.s32.totalorder %s19, 0
        %s148 = scalar_select %p147, %s19, 0
        %s149 = smul.addr %s148, 8
        %s150 = scalar_lea.vmem %s1, %s149
      $region16: #{_lambda_.7} parent=11 // pred_fallthru
        _
      // Predicated region
      $region17: #{_lambda_.7} parent=11 // pred_check
        %p151 = pneg %p101
      $region18: #{_lambda_.7} parent=11 // pred_check_branch
        %153 = sbr.rel (%p151) target = $region20
      $region19: #{_lambda_.7} parent=11 // pred_region
        %p154 = scmp.lt.s32.totalorder %s19, 0
        %s155 = scalar_select %p154, %s19, 0
        %s156 = smul.addr %s155, 8
        %s157 = scalar_lea.vmem %s2, %s156
      $region20: #{_lambda_.7} parent=11 // pred_fallthru
        _
    $region12: #{_lambda_.7} parent=5 // pred_fallthru
      _
    %p158 = scmp.lt.s32.totalorder %s9, 2
    // Predicated region
    $region21: #{_lambda_.7} parent=5 // pred_check
      %p159 = pneg %p158
    $region22: #{_lambda_.7} parent=5 // pred_check_branch
      %161 = sbr.rel (%p159) target = $region24
    $region23: #{_lambda_.7} parent=5 // pred_region
      // Predicated region
      $region25: #{_lambda_.7} parent=23 // pred_check
        %p162 = pneg %p43
      $region26: #{_lambda_.7} parent=23 // pred_check_branch
        %164 = sbr.rel (%p162) target = $region28
      $region27: #{_lambda_.7} parent=23 // pred_region
        %s165 = smul.u32 8, %s17
        %p166 = scmp.lt.s32.totalorder %s16, 1
        %s167 = scalar_select %p166, %s16, 1
        %p168 = scmp.lt.s32.totalorder %s165, 7
        %s169 = scalar_select %p168, %s165, 7
        %s170 = smul.addr %s167, 8
        %s171 = sadd.s32 %s169, %s170
        %s172 = smul.addr %s171, 4
        %s173 = scalar_lea.vmem %s0, %s172
        %s174 = smul.u32 8, %s17
      $region28: #{_lambda_.7} parent=23 // pred_fallthru
        _
    $region24: #{_lambda_.7} parent=5 // pred_fallthru
      _
    %p175 = scmp.le.s32.totalorder 1, %s9
    %p176 = scmp.lt.s32.totalorder %s9, 3
    %p177 = pnand %p175, %p176
    %p178 = pneg %p177
    // Predicated region
    $region29: #{_lambda_.7} parent=5 // pred_check
      _
    $region30: #{_lambda_.7} parent=5 // pred_check_branch
      %180 = sbr.rel (%p177) target = $region32
    $region31: #{_lambda_.7} parent=5 // pred_region
      %s181 = ssub.s32 %s9, 1
      %s182 = smul.u32 8, %s19
      %p183 = scmp.lt.s32.totalorder %s18, 1
      %s184 = scalar_select %p183, %s18, 1
      %p185 = scmp.lt.s32.totalorder %s182, 7
      %s186 = scalar_select %p185, %s182, 7
      %s187 = smul.addr %s184, 8
      %s188 = sadd.s32 %s186, %s187
      %s189 = smul.addr %s188, 4
      %s190 = scalar_lea.vmem %s0, %s189
      %p191 = pneg %p49
      %p192 = pneg %p46
      %p193 = scmp.lt.s32.totalorder %s19, 0
      %s194 = scalar_select %p193, %s19, 0
      %s195 = smul.addr %s194, 8
      %s196 = scalar_lea.vmem %s1, %s195
      %p197 = pneg %p75
      %p198 = pneg %p72
      %p199 = scmp.lt.s32.totalorder %s19, 0
      %s200 = scalar_select %p199, %s19, 0
      %s201 = smul.addr %s200, 8
      %s202 = scalar_lea.vmem %s2, %s201
      %p203 = pneg %p101
      %p204 = pneg %p98
      %p205 = pneg %p129
      %p206 = pneg %p126
      %s207 = smul.u32 8, %s19
      %p208 = scmp.lt.s32.totalorder %s18, 1
      %s209 = scalar_select %p208, %s18, 1
      %p210 = scmp.lt.s32.totalorder %s207, 7
      %s211 = scalar_select %p210, %s207, 7
      %s212 = smul.addr %s209, 8
      %s213 = sadd.s32 %s211, %s212
      %s214 = smul.addr %s213, 4
      %s215 = scalar_lea.vmem %s3, %s214
      %s216 = smul.u32 8, %s19
      %p217 = scmp.lt.s32.totalorder %s18, 1
      %s218 = scalar_select %p217, %s18, 1
      %p219 = scmp.lt.s32.totalorder %s216, 7
      %s220 = scalar_select %p219, %s216, 7
      %s221 = smul.addr %s218, 8
      %s222 = sadd.s32 %s220, %s221
      %s223 = smul.addr %s222, 4
      %s224 = scalar_lea.vmem %s0, %s223
      %s225 = smul.u32 8, %s19
      %p226 = scmp.lt.s32.totalorder %s19, 0
      %s227 = scalar_select %p226, %s19, 0
      %s228 = smul.addr %s227, 8
      %s229 = scalar_lea.vmem %s1, %s228
      %p230 = scmp.lt.s32.totalorder %s19, 0
      %s231 = scalar_select %p230, %s19, 0
      %s232 = smul.addr %s231, 8
      %s233 = scalar_lea.vmem %s2, %s232
      %s234 = smul.u32 8, %s19
      %p235 = scmp.lt.s32.totalorder %s18, 1
      %s236 = scalar_select %p235, %s18, 1
      %p237 = scmp.lt.s32.totalorder %s234, 7
      %s238 = scalar_select %p237, %s234, 7
      %s239 = smul.addr %s236, 8
      %s240 = sadd.s32 %s238, %s239
      %s241 = smul.addr %s240, 4
      %s242 = scalar_lea.vmem %s3, %s241
      %s243 = smul.u32 8, %s19
      %v244 = vld [vmem:[%s224] sm:$0xf]
      %v245 = vld [vmem:[%s224 + $0x4] sm:$0xf]
      %v246 = vld [vmem:[%s224 + $0x8] sm:$0xf]
      %v247 = vld [vmem:[%s224 + $0xc] sm:$0xf]
      %v248 = vld [vmem:[%s224 + $0x10] sm:$0xf]
      %v249 = vld [vmem:[%s224 + $0x14] sm:$0xf]
      %v250 = vld [vmem:[%s224 + $0x18] sm:$0xf]
      %v251 = vld [vmem:[%s224 + $0x1c] sm:$0xf]
      %v252 = vld [vmem:[%s229] sm:$0xff]
      %v254 = vcombine.high %v252, %v252
      %v256 = vunpack.c.l.s4 1966171168
      %v257 = vunpack.c.0.s8 %v256
      %v258 = vlaneseq
      %v259 = vshrl.u32 %v258, 7
      %v260 = vsub.s32 %v257, %v259
      %v261 = vrot.slane %v252, %v260
      %v263 = vunpack.c.l.s4 1966171168
      %v264 = vunpack.c.0.s8 %v263
      %v265 = vlaneseq
      %v266 = vshrl.u32 %v265, 7
      %v267 = vsub.s32 %v264, %v266
      %v268 = vrot.slane %v254, %v267
      %v269 = vcombine.high %v261, %v261
      %v270 = vcombine.high %v268, %v268
      %v272 = vunpack.c.l.s4 1966171168
      %v273 = vunpack.c.0.s8 %v272
      %v274 = vlaneseq
      %v275 = vshrl.u32 %v274, 7
      %v276 = vsub.s32 %v273, %v275
      %v277 = vrot.slane %v261, %v276
      %v279 = vunpack.c.l.s4 1966171168
      %v280 = vunpack.c.0.s8 %v279
      %v281 = vlaneseq
      %v282 = vshrl.u32 %v281, 7
      %v283 = vsub.s32 %v280, %v282
      %v284 = vrot.slane %v268, %v283
      %v286 = vunpack.c.l.s4 1966171168
      %v287 = vunpack.c.0.s8 %v286
      %v288 = vlaneseq
      %v289 = vshrl.u32 %v288, 7
      %v290 = vsub.s32 %v287, %v289
      %v291 = vrot.slane %v269, %v290
      %v293 = vunpack.c.l.s4 1966171168
      %v294 = vunpack.c.0.s8 %v293
      %v295 = vlaneseq
      %v296 = vshrl.u32 %v295, 7
      %v297 = vsub.s32 %v294, %v296
      %v298 = vrot.slane %v270, %v297
      %v299 = vcombine.high %v277, %v277
      %v300 = vcombine.high %v284, %v284
      %v301 = vcombine.high %v291, %v291
      %v302 = vcombine.high %v298, %v298
      %v303 = vld [vmem:[%s233] sm:$0xff]
      %v305 = vcombine.high %v303, %v303
      %v307 = vunpack.c.l.s4 1966171168
      %v308 = vunpack.c.0.s8 %v307
      %v309 = vlaneseq
      %v310 = vshrl.u32 %v309, 7
      %v311 = vsub.s32 %v308, %v310
      %v312 = vrot.slane %v303, %v311
      %v314 = vunpack.c.l.s4 1966171168
      %v315 = vunpack.c.0.s8 %v314
      %v316 = vlaneseq
      %v317 = vshrl.u32 %v316, 7
      %v318 = vsub.s32 %v315, %v317
      %v319 = vrot.slane %v305, %v318
      %v320 = vcombine.high %v312, %v312
      %v321 = vcombine.high %v319, %v319
      %v323 = vunpack.c.l.s4 1966171168
      %v324 = vunpack.c.0.s8 %v323
      %v325 = vlaneseq
      %v326 = vshrl.u32 %v325, 7
      %v327 = vsub.s32 %v324, %v326
      %v328 = vrot.slane %v312, %v327
      %v330 = vunpack.c.l.s4 1966171168
      %v331 = vunpack.c.0.s8 %v330
      %v332 = vlaneseq
      %v333 = vshrl.u32 %v332, 7
      %v334 = vsub.s32 %v331, %v333
      %v335 = vrot.slane %v319, %v334
      %v337 = vunpack.c.l.s4 1966171168
      %v338 = vunpack.c.0.s8 %v337
      %v339 = vlaneseq
      %v340 = vshrl.u32 %v339, 7
      %v341 = vsub.s32 %v338, %v340
      %v342 = vrot.slane %v320, %v341
      %v344 = vunpack.c.l.s4 1966171168
      %v345 = vunpack.c.0.s8 %v344
      %v346 = vlaneseq
      %v347 = vshrl.u32 %v346, 7
      %v348 = vsub.s32 %v345, %v347
      %v349 = vrot.slane %v321, %v348
      %v350 = vcombine.high %v328, %v328
      %v351 = vcombine.high %v335, %v335
      %v352 = vcombine.high %v342, %v342
      %v353 = vcombine.high %v349, %v349
      %v354 = vsub.f32 0.0, %v244
      %v355 = vsub.f32 0.0, %v245
      %v356 = vsub.f32 0.0, %v246
      %v357 = vsub.f32 0.0, %v247
      %v358 = vsub.f32 0.0, %v248
      %v359 = vsub.f32 0.0, %v249
      %v360 = vsub.f32 0.0, %v250
      %v361 = vsub.f32 0.0, %v251
      %370 = vrot.lane.b32.xlu0 %v354, 124
      %v371 = vpop.permute.xlu0 %370
      %372 = vrot.lane.b32.xlu0 %v355, 124
      %v373 = vpop.permute.xlu0 %372
      %374 = vrot.lane.b32.xlu0 %v356, 124
      %v375 = vpop.permute.xlu0 %374
      %376 = vrot.lane.b32.xlu0 %v357, 124
      %v377 = vpop.permute.xlu0 %376
      %378 = vrot.lane.b32.xlu0 %v358, 124
      %v379 = vpop.permute.xlu0 %378
      %380 = vrot.lane.b32.xlu0 %v359, 124
      %v381 = vpop.permute.xlu0 %380
      %382 = vrot.lane.b32.xlu0 %v360, 124
      %v383 = vpop.permute.xlu0 %382
      %384 = vrot.lane.b32.xlu0 %v361, 124
      %v385 = vpop.permute.xlu0 %384
      %402 = vrot.lane.b32.xlu0 %v244, 4
      %v403 = vpop.permute.xlu0 %402
      %404 = vrot.lane.b32.xlu0 %v245, 4
      %v405 = vpop.permute.xlu0 %404
      %406 = vrot.lane.b32.xlu0 %v246, 4
      %v407 = vpop.permute.xlu0 %406
      %408 = vrot.lane.b32.xlu0 %v247, 4
      %v409 = vpop.permute.xlu0 %408
      %410 = vrot.lane.b32.xlu0 %v248, 4
      %v411 = vpop.permute.xlu0 %410
      %412 = vrot.lane.b32.xlu0 %v249, 4
      %v413 = vpop.permute.xlu0 %412
      %414 = vrot.lane.b32.xlu0 %v250, 4
      %v415 = vpop.permute.xlu0 %414
      %416 = vrot.lane.b32.xlu0 %v251, 4
      %v417 = vpop.permute.xlu0 %416
      %vm426 = vcmask 31744
      %v427 = vsel %vm426, %v371, %v403
      %v428 = vsel %vm426, %v373, %v405
      %v429 = vsel %vm426, %v375, %v407
      %v430 = vsel %vm426, %v377, %v409
      %v431 = vsel %vm426, %v379, %v411
      %v432 = vsel %vm426, %v381, %v413
      %v433 = vsel %vm426, %v383, %v415
      %v434 = vsel %vm426, %v385, %v417
      %v435 = vlaneseq
      %v436 = vshrl.u32 %v435, 7
      %v437 = vsub.s32 0, %v436
      %v438 = vrot.slane %v277, %v437
      %v439 = vlaneseq
      %v440 = vshrl.u32 %v439, 7
      %v441 = vsub.s32 0, %v440
      %v442 = vrot.slane %v291, %v441
      %v443 = vlaneseq
      %v444 = vshrl.u32 %v443, 7
      %v445 = vsub.s32 0, %v444
      %v446 = vrot.slane %v299, %v445
      %v447 = vlaneseq
      %v448 = vshrl.u32 %v447, 7
      %v449 = vsub.s32 0, %v448
      %v450 = vrot.slane %v301, %v449
      %v451 = vlaneseq
      %v452 = vshrl.u32 %v451, 7
      %v453 = vsub.s32 0, %v452
      %v454 = vrot.slane %v284, %v453
      %v455 = vlaneseq
      %v456 = vshrl.u32 %v455, 7
      %v457 = vsub.s32 0, %v456
      %v458 = vrot.slane %v298, %v457
      %v459 = vlaneseq
      %v460 = vshrl.u32 %v459, 7
      %v461 = vsub.s32 0, %v460
      %v462 = vrot.slane %v300, %v461
      %v463 = vlaneseq
      %v464 = vshrl.u32 %v463, 7
      %v465 = vsub.s32 0, %v464
      %v466 = vrot.slane %v302, %v465
      %v475 = vmul.f32 %v244, %v438
      %v476 = vmul.f32 %v245, %v442
      %v477 = vmul.f32 %v246, %v446
      %v478 = vmul.f32 %v247, %v450
      %v479 = vmul.f32 %v248, %v454
      %v480 = vmul.f32 %v249, %v458
      %v481 = vmul.f32 %v250, %v462
      %v482 = vmul.f32 %v251, %v466
      %v483 = vlaneseq
      %v484 = vshrl.u32 %v483, 7
      %v485 = vsub.s32 0, %v484
      %v486 = vrot.slane %v328, %v485
      %v487 = vlaneseq
      %v488 = vshrl.u32 %v487, 7
      %v489 = vsub.s32 0, %v488
      %v490 = vrot.slane %v342, %v489
      %v491 = vlaneseq
      %v492 = vshrl.u32 %v491, 7
      %v493 = vsub.s32 0, %v492
      %v494 = vrot.slane %v350, %v493
      %v495 = vlaneseq
      %v496 = vshrl.u32 %v495, 7
      %v497 = vsub.s32 0, %v496
      %v498 = vrot.slane %v352, %v497
      %v499 = vlaneseq
      %v500 = vshrl.u32 %v499, 7
      %v501 = vsub.s32 0, %v500
      %v502 = vrot.slane %v335, %v501
      %v503 = vlaneseq
      %v504 = vshrl.u32 %v503, 7
      %v505 = vsub.s32 0, %v504
      %v506 = vrot.slane %v349, %v505
      %v507 = vlaneseq
      %v508 = vshrl.u32 %v507, 7
      %v509 = vsub.s32 0, %v508
      %v510 = vrot.slane %v351, %v509
      %v511 = vlaneseq
      %v512 = vshrl.u32 %v511, 7
      %v513 = vsub.s32 0, %v512
      %v514 = vrot.slane %v353, %v513
      %v523 = vmul.f32 %v427, %v486
      %v524 = vmul.f32 %v428, %v490
      %v525 = vmul.f32 %v429, %v494
      %v526 = vmul.f32 %v430, %v498
      %v527 = vmul.f32 %v431, %v502
      %v528 = vmul.f32 %v432, %v506
      %v529 = vmul.f32 %v433, %v510
      %v530 = vmul.f32 %v434, %v514
      %v531 = vadd.f32 %v475, %v523
      %v532 = vadd.f32 %v476, %v524
      %v533 = vadd.f32 %v477, %v525
      %v534 = vadd.f32 %v478, %v526
      %v535 = vadd.f32 %v479, %v527
      %v536 = vadd.f32 %v480, %v528
      %v537 = vadd.f32 %v481, %v529
      %v538 = vadd.f32 %v482, %v530
      %vm539 = vcmask 60416
      %540 = vst.msk [vmem:[%s242] sm:$0xf] %vm539, %v531
      %541 = vst.msk [vmem:[%s242 + $0x4] sm:$0xf] %vm539, %v532
      %542 = vst.msk [vmem:[%s242 + $0x8] sm:$0xf] %vm539, %v533
      %543 = vst.msk [vmem:[%s242 + $0xc] sm:$0xf] %vm539, %v534
      %544 = vst.msk [vmem:[%s242 + $0x10] sm:$0xf] %vm539, %v535
      %545 = vst.msk [vmem:[%s242 + $0x14] sm:$0xf] %vm539, %v536
      %546 = vst.msk [vmem:[%s242 + $0x18] sm:$0xf] %vm539, %v537
      %547 = vst.msk [vmem:[%s242 + $0x1c] sm:$0xf] %vm539, %v538
      %s548 = smul.u32 8, %s19
      %p549 = scmp.lt.s32.totalorder %s18, 1
      %s550 = scalar_select %p549, %s18, 1
      %p551 = scmp.lt.s32.totalorder %s548, 7
      %s552 = scalar_select %p551, %s548, 7
      %s553 = smul.addr %s550, 8
      %s554 = sadd.s32 %s552, %s553
      %s555 = smul.addr %s554, 4
      %s556 = scalar_lea.vmem %s3, %s555
      // Predicated region
      $region33: #{_lambda_.7} parent=31 // pred_check
        %p557 = pneg %p126
      $region34: #{_lambda_.7} parent=31 // pred_check_branch
        %559 = sbr.rel (%p557) target = $region36
      $region35: #{_lambda_.7} parent=31 // pred_region
        %s560 = smul.u32 8, %s19
      $region36: #{_lambda_.7} parent=31 // pred_fallthru
        _
    $region32: #{_lambda_.7} parent=5 // pred_fallthru
      _
    %p561 = scmp.le.s32.totalorder 2, %s9
    // Predicated region
    $region37: #{_lambda_.7} parent=5 // pred_check
      %p562 = pneg %p561
    $region38: #{_lambda_.7} parent=5 // pred_check_branch
      %564 = sbr.rel (%p562) target = $region40
    $region39: #{_lambda_.7} parent=5 // pred_region
      %s565 = ssub.s32 %s9, 2
      // Predicated region
      $region41: #{_lambda_.7} parent=39 // pred_check
        %p566 = pneg %p132
      $region42: #{_lambda_.7} parent=39 // pred_check_branch
        %568 = sbr.rel (%p566) target = $region44
      $region43: #{_lambda_.7} parent=39 // pred_region
        %s569 = smul.u32 8, %s21
        %p570 = scmp.lt.s32.totalorder %s20, 1
        %s571 = scalar_select %p570, %s20, 1
        %p572 = scmp.lt.s32.totalorder %s569, 7
        %s573 = scalar_select %p572, %s569, 7
        %s574 = smul.addr %s571, 8
        %s575 = sadd.s32 %s573, %s574
        %s576 = smul.addr %s575, 4
        %s577 = scalar_lea.vmem %s3, %s576
      $region44: #{_lambda_.7} parent=39 // pred_fallthru
        _
    $region40: #{_lambda_.7} parent=5 // pred_fallthru
      _
  $region6: #{_lambda_.7} parent=0 // loop_footer
    %s13 = sadd.s32 1, %s9
  $region7: #{_lambda_.7} parent=0 // loop_footer_branch
    %8 = sbr.rel target = $region3
  $region8: #{_lambda_.7} parent=0 // loop_exit
    _

// kernel: _lambda_.9
$region0: #{_lambda_.9}
  #allocation0 [shape = 'u32[]', space=smem, size = 0x4, offset = 0x4, fixed_abs, tag = 'smem constant byte address 0x4 - core index']
  #allocation1 [shape = 'u32[144,128]{1,0:T(1,128)}', space=vmem, size = 0x12000, scoped, tag = 'internal scratch']
  #allocation2 [shape = 'f32[16,32]{1,0:T(8,128)}', space=vmem, size = 0x2000, scoped, tag = 'scratch operand']
  %s0 = inlined_call_operand.vmem [shape: f32[16,32], index: 0, kind: input, shape index: {}]
  %s1 = inlined_call_operand.vmem [shape: f32[32,32], index: 1, kind: input, shape index: {}]
  %s2 = inlined_call_operand.vmem [shape: f32[1,32], index: 2, kind: input, shape index: {}]
  %s3 = inlined_call_operand.vmem [shape: f32[16,32], index: 3, kind: input, shape index: {}]
  %s4 = inlined_call_operand.hbm [shape: f32[16,32], index: 4, kind: output, shape index: {}]
  %s5 = sld [smem:[#allocation0]]
  $region34: #{_lambda_.9} parent=0
    _
  %s7 = ssub.s32 1, %s5
  %s8 = scalar_select 0, %s7, %s5
  $region1: #{_lambda_.9} parent=0
    #allocation3 [shape = 'u8[8192]{0}', space=vmem, size = 0x2000, scoped, tag = 'output window, operand 0, single buffered']
    #allocation4 [shape = 's32[1]{0}', space=sflag, size = 0x4, scoped, tag = 'scoped memory for _lambda_.9']
    %9 = vsyncpa [#allocation4], 0
    // Predicated region
    $region2: #{_lambda_.9} parent=1 // pred_check
      _
    $region3: #{_lambda_.9} parent=1 // pred_check_branch
      %11 = sbr.rel (0) target = $region5
    $region4: #{_lambda_.9} parent=1 // pred_region
      _
    $region5: #{_lambda_.9} parent=1 // pred_fallthru
      _
    // Predicated region
    $region6: #{_lambda_.9} parent=1 // pred_check
      _
    $region7: #{_lambda_.9} parent=1 // pred_check_branch
      %13 = sbr.rel (0) target = $region9
    $region8: #{_lambda_.9} parent=1 // pred_region
      _
    $region9: #{_lambda_.9} parent=1 // pred_fallthru
      _
    // Predicated region
    $region10: #{_lambda_.9} parent=1 // pred_check
      _
    $region11: #{_lambda_.9} parent=1 // pred_check_branch
      %15 = sbr.rel (0) target = $region13
    $region12: #{_lambda_.9} parent=1 // pred_region
      _
    $region13: #{_lambda_.9} parent=1 // pred_fallthru
      _
    // Predicated region
    $region14: #{_lambda_.9} parent=1 // pred_check
      _
    $region15: #{_lambda_.9} parent=1 // pred_check_branch
      %17 = sbr.rel (0) target = $region17
    $region16: #{_lambda_.9} parent=1 // pred_region
      _
    $region17: #{_lambda_.9} parent=1 // pred_fallthru
      _
    %p18 = scmp.eq.s32.totalorder 0, 0
    // Predicated region
    $region18: #{_lambda_.9} parent=1 // pred_check
      %p19 = pneg %p18
    $region19: #{_lambda_.9} parent=1 // pred_check_branch
      %21 = sbr.rel (%p19) target = $region21
    $region20: #{_lambda_.9} parent=1 // pred_region
      %vm22 = vcmask 261120
      %23 = vst.msk [vmem:[#allocation2] sm:$0xff] %vm22, 0.0
      %24 = vst.msk [vmem:[#allocation2 + $0x8] sm:$0xff] %vm22, 0.0
    $region21: #{_lambda_.9} parent=1 // pred_fallthru
      _
    %v25 = vld [vmem:[#allocation2] sm:$0xff]
    %v26 = vld [vmem:[#allocation2 + $0x8] sm:$0xff]
    %v27 = vld [vmem:[%s0] sm:$0xff]
    %v28 = vld [vmem:[%s0 + $0x8] sm:$0xff]
    %v29 = vld [vmem:[%s1] sm:$0xff]
    %v30 = vld [vmem:[%s1 + $0x8] sm:$0xff]
    %v31 = vld [vmem:[%s1 + $0x10] sm:$0xff]
    %v32 = vld [vmem:[%s1 + $0x18] sm:$0xff]
    %vm33 = vcmask 261120
    %v35 = vsel %vm33, %v27, 0
    %v38 = vsel %vm33, %v28, 0
    %40 = vmatprep.subr.mxu0 0.0
    %41 = vmatpush1.msra.mxu0 0.0
    %42 = vmatprep.subr.mxu0 0.0
    %43 = vmatpush1.msra.mxu0 0.0
    %44 = vmatprep.subr.mxu0 0.0
    %45 = vmatpush1.msra.mxu0 0.0
    %46 = vmatprep.subr.mxu0 0.0
    %47 = vmatpush1.msra.mxu0 0.0
    %48 = vmatprep.subr.mxu0 0.0
    %49 = vmatpush1.msra.mxu0 0.0
    %50 = vmatprep.subr.mxu0 0.0
    %51 = vmatpush1.msra.mxu0 0.0
    %52 = vmatprep.subr.mxu0 0.0
    %53 = vmatpush1.msra.mxu0 0.0
    %54 = vmatprep.subr.mxu0 0.0
    %55 = vmatpush1.msra.mxu0 0.0
    %56 = vmatprep.subr.mxu0 0.0
    %57 = vmatpush1.msra.mxu0 0.0
    %58 = vmatprep.subr.mxu0 0.0
    %59 = vmatpush1.msra.mxu0 0.0
    %60 = vmatprep.subr.mxu0 0.0
    %61 = vmatpush1.msra.mxu0 0.0
    %62 = vmatprep.subr.mxu0 0.0
    %63 = vmatpush1.msra.mxu0 0.0
    %64 = vmatprep.subr.mxu0 0.0
    %65 = vmatpush1.msra.mxu0 %v32
    %66 = vmatprep.subr.mxu0 0.0
    %67 = vmatpush1.msra.mxu0 %v31
    %68 = vmatprep.subr.mxu0 0.0
    %69 = vmatpush1.msra.mxu0 %v30
    %70 = vmatprep.subr.mxu0 0.0
    %71 = vmatpush1.msra.mxu0 %v29
    %72 = vmatprep.subr.mxu0 0.0
    %73 = vmatpush2.msra.mxu0 0.0
    %74 = vmatprep.subr.mxu0 0.0
    %75 = vmatpush2.msra.mxu0 0.0
    %76 = vmatprep.subr.mxu0 0.0
    %77 = vmatpush2.msra.mxu0 0.0
    %78 = vmatprep.subr.mxu0 0.0
    %79 = vmatpush2.msra.mxu0 0.0
    %80 = vmatprep.subr.mxu0 0.0
    %81 = vmatpush2.msra.mxu0 0.0
    %82 = vmatprep.subr.mxu0 0.0
    %83 = vmatpush2.msra.mxu0 0.0
    %84 = vmatprep.subr.mxu0 0.0
    %85 = vmatpush2.msra.mxu0 0.0
    %86 = vmatprep.subr.mxu0 0.0
    %87 = vmatpush2.msra.mxu0 0.0
    %88 = vmatprep.subr.mxu0 0.0
    %89 = vmatpush2.msra.mxu0 0.0
    %90 = vmatprep.subr.mxu0 0.0
    %91 = vmatpush2.msra.mxu0 0.0
    %92 = vmatprep.subr.mxu0 0.0
    %93 = vmatpush2.msra.mxu0 0.0
    %94 = vmatprep.subr.mxu0 0.0
    %95 = vmatpush2.msra.mxu0 0.0
    %96 = vmatprep.subr.mxu0 0.0
    %97 = vmatpush2.msra.mxu0 0.0
    %98 = vmatprep.subr.mxu0 0.0
    %99 = vmatpush2.msra.mxu0 0.0
    %100 = vmatprep.subr.mxu0 0.0
    %101 = vmatpush2.msra.mxu0 0.0
    %102 = vmatprep.subr.mxu0 0.0
    %103 = vmatpush2.msra.mxu0 0.0
    %104 = vmatprep.mubr.f32.mxu0 0.0
    %105 = vmatmul.mubr.f32.gmra.mxu0 %v35
    %v106 = vpop.f32.mrf.mxu0
    %v107 = vadd.f32 0.0, %v106
    %v108 = vpop.f32.mrf.mxu0
    %109 = vmatprep.mubr.f32.mxu0 0.0
    %110 = vmatmul.mubr.f32.gmra.mxu0 %v38
    %v111 = vpop.f32.mrf.mxu0
    %v112 = vadd.f32 0.0, %v111
    %v113 = vpop.f32.mrf.mxu0
    %114 = vdwg.mxu0
    %v115 = vadd.f32 %v25, %v107
    %v116 = vadd.f32 %v26, %v112
    %117 = vst.msk [vmem:[#allocation2] sm:$0xff] %vm33, %v115
    %118 = vst.msk [vmem:[#allocation2 + $0x8] sm:$0xff] %vm33, %v116
    // Predicated region
    $region22: #{_lambda_.9} parent=1 // pred_check
      %p119 = pneg %p18
    $region23: #{_lambda_.9} parent=1 // pred_check_branch
      %121 = sbr.rel (%p119) target = $region25
    $region24: #{_lambda_.9} parent=1 // pred_region
      %v122 = vld [vmem:[#allocation2] sm:$0xff]
      %v123 = vld [vmem:[#allocation2 + $0x8] sm:$0xff]
      %v124 = vld [vmem:[%s2] sm:$0x1]
      %v126 = vlaneseq
      %v127 = vshrl.u32 %v126, 7
      %v128 = vsub.s32 0, %v127
      %v129 = vrot.slane %v124, %v128
      %v131 = vadd.f32 %v122, %v129
      %v132 = vadd.f32 %v123, %v129
      %v133 = vld [vmem:[%s3] sm:$0xff]
      %v134 = vld [vmem:[%s3 + $0x8] sm:$0xff]
      %v135 = vadd.f32 %v131, %v133
      %v136 = vadd.f32 %v132, %v134
      %137 = vst.msk [vmem:[#allocation3] sm:$0xff] %vm33, %v135
      %138 = vst.msk [vmem:[#allocation3 + $0x8] sm:$0xff] %vm33, %v136
    $region25: #{_lambda_.9} parent=1 // pred_fallthru
      _
    // Predicated region
    $region26: #{_lambda_.9} parent=1 // pred_check
      _
    $region27: #{_lambda_.9} parent=1 // pred_check_branch
      %140 = sbr.rel (0) target = $region29
    $region28: #{_lambda_.9} parent=1 // pred_region
      %s142 = ssub.s32 256, 256
      %143 = vsyncadd [#allocation4], %s142
      %s144 = sshll.u32 [#allocation3], 4
      %s145 = int_to_ptr.vmem [resolvable:$true] %s144
      %150 = dma.vmem_to_hbm [thread:$0]  %s145, 256, %s4, [#allocation4], 128, 128, 8
    $region29: #{_lambda_.9} parent=1 // pred_fallthru
      _
    // Predicated region
    $region30: #{_lambda_.9} parent=1 // pred_check
      _
    $region31: #{_lambda_.9} parent=1 // pred_check_branch
      %152 = sbr.rel (0) target = $region33
    $region32: #{_lambda_.9} parent=1 // pred_region
      %153 = dma.done [#allocation4], 256
    $region33: #{_lambda_.9} parent=1 // pred_fallthru
      _
    %154 = vsyncpa [#allocation4], 1

// kernel: _lambda_.8
$region0: #{_lambda_.8}
  #allocation0 [shape = 'u32[]', space=smem, size = 0x4, offset = 0x4, fixed_abs, tag = 'smem constant byte address 0x4 - core index']
  #allocation1 [shape = 'u32[144,128]{1,0:T(1,128)}', space=vmem, size = 0x12000, scoped, tag = 'internal scratch']
  #allocation2 [shape = 'f32[4,8,1]{2,1,0:T(8,128)}', space=vmem, size = 0x4000, scoped, tag = 'scratch operand']
  #allocation3 [shape = 'f32[4,8,1]{2,1,0:T(8,128)}', space=vmem, size = 0x4000, scoped, tag = 'scratch operand']
  #allocation4 [shape = 'f32[4,8,8]{2,1,0:T(8,128)}', space=vmem, size = 0x4000, scoped, tag = 'scratch operand']
  %s0 = inlined_call_operand.vmem [shape: f32[2,8,4,8], index: 0, kind: input, shape index: {}]
  %s1 = inlined_call_operand.vmem [shape: f32[2,8,4,8], index: 1, kind: input, shape index: {}]
  %s2 = inlined_call_operand.vmem [shape: f32[2,8,4,8], index: 2, kind: input, shape index: {}]
  %s3 = inlined_call_operand.vmem [shape: s8[2,1,8,8], index: 3, kind: input, shape index: {}]
  %s4 = inlined_call_operand.vmem [shape: f32[2,8,32], index: 4, kind: output, shape index: {}]
  %s5 = sld [smem:[#allocation0]]
  $region57: #{_lambda_.8} parent=0
    _
  %s7 = ssub.s32 1, %s5
  %s8 = scalar_select 0, %s7, %s5
  loop: start=0, step=1, limit=4
  $region2: #{_lambda_.8} parent=0 // loop_pre_header
    _
  $region3: #{_lambda_.8} parent=0 // loop_header
    %s10 = sphi 0, %s14
    %p11 = scmp.ge.s32.totalorder %s10, 4
    %s17 = sphi 0, %s36
    %s18 = sphi 0, %s32
    %s19 = sphi 0, %s28
    %s20 = sphi 0, %s17
    %s21 = sphi 0, %s18
    %s22 = sphi 0, %s19
    %s23 = sphi 0, %s20
    %s24 = sphi 0, %s21
    %s25 = sphi 0, %s22
    %s41 = sphi 0, %s43
    %s44 = sphi 0, %s41
    %s45 = sphi 0, %s44
    %s61 = sphi 0, %s45
    %s69 = sphi 0, %s71
    %s72 = sphi 0, %s69
    %s73 = sphi 0, %s72
    %s89 = sphi 0, %s73
    %s97 = sphi 0, %s99
    %s100 = sphi 0, %s97
    %s101 = sphi 0, %s100
    %s117 = sphi 0, %s101
    %s127 = sphi 0, %s129
    %s130 = sphi 0, %s127
    %s131 = sphi 0, %s130
    %s147 = sphi 0, %s131
    %s155 = sphi 0, %s157
    %s158 = sphi 0, %s155
    %s159 = sphi 0, %s158
    %s175 = sphi 0, %s159
  $region4: #{_lambda_.8} parent=0 // loop_header_branch
    %13 = sbr.rel (%p11) target = $region8
  $region5: #{_lambda_.8} parent=0 // loop_body
    %s15 = ssub.s32 %s10, 1
    %s16 = ssub.s32 %s10, 2
    %s26 = sadd.s32 1, %s19
    %p27 = scmp.ge.s32.totalorder %s26, 1
    %s28 = scalar_select %p27, 0, %s26
    %s29 = sadd.s32 1, %s18
    %s30 = scalar_select %p27, %s29, %s18
    %p31 = scmp.ge.s32.totalorder %s30, 1
    %s32 = scalar_select %p31, 0, %s30
    %s33 = sadd.s32 1, %s17
    %s34 = scalar_select %p31, %s33, %s17
    %p35 = scmp.ge.s32.totalorder %s34, 2
    %s36 = scalar_select %p35, 0, %s34
    %s37 = ssub.s32 %s17, %s36
    %s38 = ssub.s32 %s18, %s32
    %s39 = sor.u32 %s37, %s38
    %p40 = scmp.eq.s32.totalorder %s39, 0
    %s42 = sadd.s32 %s41, 1
    %s43 = scalar_select %p40, %s41, %s42
    %p46 = pneg %p40
    %p47 = scmp.eq.s32.totalorder %s10, 1
    %p48 = por %p46, %p47
    %p49 = scmp.ne.s32.totalorder %s41, %s44
    %p50 = scmp.eq.s32.totalorder %s10, 0
    %p51 = por %p49, %p50
    %p52 = scmp.ne.s32.totalorder %s41, %s44
    %p53 = scmp.eq.s32.totalorder %s15, 1
    %p54 = por %p52, %p53
    %p55 = scmp.ne.s32.totalorder %s44, %s45
    %p56 = scmp.eq.s32.totalorder %s15, 0
    %p57 = por %p55, %p56
    %p58 = scmp.ne.s32.totalorder %s44, %s45
    %p59 = scmp.eq.s32.totalorder %s16, 1
    %p60 = por %p58, %p59
    %p62 = scmp.ne.s32.totalorder %s45, %s61
    %p63 = scmp.eq.s32.totalorder %s16, 0
    %p64 = por %p62, %p63
    %s65 = ssub.s32 %s17, %s36
    %s66 = ssub.s32 %s19, %s28
    %s67 = sor.u32 %s65, %s66
    %p68 = scmp.eq.s32.totalorder %s67, 0
    %s70 = sadd.s32 %s69, 1
    %s71 = scalar_select %p68, %s69, %s70
    %p74 = pneg %p68
    %p75 = scmp.eq.s32.totalorder %s10, 1
    %p76 = por %p74, %p75
    %p77 = scmp.ne.s32.totalorder %s69, %s72
    %p78 = scmp.eq.s32.totalorder %s10, 0
    %p79 = por %p77, %p78
    %p80 = scmp.ne.s32.totalorder %s69, %s72
    %p81 = scmp.eq.s32.totalorder %s15, 1
    %p82 = por %p80, %p81
    %p83 = scmp.ne.s32.totalorder %s72, %s73
    %p84 = scmp.eq.s32.totalorder %s15, 0
    %p85 = por %p83, %p84
    %p86 = scmp.ne.s32.totalorder %s72, %s73
    %p87 = scmp.eq.s32.totalorder %s16, 1
    %p88 = por %p86, %p87
    %p90 = scmp.ne.s32.totalorder %s73, %s89
    %p91 = scmp.eq.s32.totalorder %s16, 0
    %p92 = por %p90, %p91
    %s93 = ssub.s32 %s17, %s36
    %s94 = ssub.s32 %s19, %s28
    %s95 = sor.u32 %s93, %s94
    %p96 = scmp.eq.s32.totalorder %s95, 0
    %s98 = sadd.s32 %s97, 1
    %s99 = scalar_select %p96, %s97, %s98
    %p102 = pneg %p96
    %p103 = scmp.eq.s32.totalorder %s10, 1
    %p104 = por %p102, %p103
    %p105 = scmp.ne.s32.totalorder %s97, %s100
    %p106 = scmp.eq.s32.totalorder %s10, 0
    %p107 = por %p105, %p106
    %p108 = scmp.ne.s32.totalorder %s97, %s100
    %p109 = scmp.eq.s32.totalorder %s15, 1
    %p110 = por %p108, %p109
    %p111 = scmp.ne.s32.totalorder %s100, %s101
    %p112 = scmp.eq.s32.totalorder %s15, 0
    %p113 = por %p111, %p112
    %p114 = scmp.ne.s32.totalorder %s100, %s101
    %p115 = scmp.eq.s32.totalorder %s16, 1
    %p116 = por %p114, %p115
    %p118 = scmp.ne.s32.totalorder %s101, %s117
    %p119 = scmp.eq.s32.totalorder %s16, 0
    %p120 = por %p118, %p119
    %s121 = ssub.s32 %s17, %s36
    %s122 = ssub.s32 %s18, %s32
    %s123 = sor.u32 %s121, %s122
    %s124 = ssub.s32 %s19, %s28
    %s125 = sor.u32 %s123, %s124
    %p126 = scmp.eq.s32.totalorder %s125, 0
    %s128 = sadd.s32 %s127, 1
    %s129 = scalar_select %p126, %s127, %s128
    %p132 = pneg %p126
    %p133 = scmp.eq.s32.totalorder %s10, 1
    %p134 = por %p132, %p133
    %p135 = scmp.ne.s32.totalorder %s127, %s130
    %p136 = scmp.eq.s32.totalorder %s10, 0
    %p137 = por %p135, %p136
    %p138 = scmp.ne.s32.totalorder %s127, %s130
    %p139 = scmp.eq.s32.totalorder %s15, 1
    %p140 = por %p138, %p139
    %p141 = scmp.ne.s32.totalorder %s130, %s131
    %p142 = scmp.eq.s32.totalorder %s15, 0
    %p143 = por %p141, %p142
    %p144 = scmp.ne.s32.totalorder %s130, %s131
    %p145 = scmp.eq.s32.totalorder %s16, 1
    %p146 = por %p144, %p145
    %p148 = scmp.ne.s32.totalorder %s131, %s147
    %p149 = scmp.eq.s32.totalorder %s16, 0
    %p150 = por %p148, %p149
    %s151 = ssub.s32 %s17, %s36
    %s152 = ssub.s32 %s18, %s32
    %s153 = sor.u32 %s151, %s152
    %p154 = scmp.eq.s32.totalorder %s153, 0
    %s156 = sadd.s32 %s155, 1
    %s157 = scalar_select %p154, %s155, %s156
    %p160 = pneg %p154
    %p161 = scmp.eq.s32.totalorder %s10, 1
    %p162 = por %p160, %p161
    %p163 = scmp.ne.s32.totalorder %s155, %s158
    %p164 = scmp.eq.s32.totalorder %s10, 0
    %p165 = por %p163, %p164
    %p166 = scmp.ne.s32.totalorder %s155, %s158
    %p167 = scmp.eq.s32.totalorder %s15, 1
    %p168 = por %p166, %p167
    %p169 = scmp.ne.s32.totalorder %s158, %s159
    %p170 = scmp.eq.s32.totalorder %s15, 0
    %p171 = por %p169, %p170
    %p172 = scmp.ne.s32.totalorder %s158, %s159
    %p173 = scmp.eq.s32.totalorder %s16, 1
    %p174 = por %p172, %p173
    %p176 = scmp.ne.s32.totalorder %s159, %s175
    %p177 = scmp.eq.s32.totalorder %s16, 0
    %p178 = por %p176, %p177
    %p179 = scmp.le.s32.totalorder 1, %s10
    %p180 = scmp.lt.s32.totalorder %s10, 3
    %p181 = pnand %p179, %p180
    %p182 = pneg %p181
    // Predicated region
    $region9: #{_lambda_.8} parent=5 // pred_check
      _
    $region10: #{_lambda_.8} parent=5 // pred_check_branch
      %184 = sbr.rel (%p181) target = $region12
    $region11: #{_lambda_.8} parent=5 // pred_region
      %s185 = ssub.s32 %s10, 1
    $region12: #{_lambda_.8} parent=5 // pred_fallthru
      _
    %p186 = scmp.lt.s32.totalorder %s10, 2
    // Predicated region
    $region13: #{_lambda_.8} parent=5 // pred_check
      %p187 = pneg %p186
    $region14: #{_lambda_.8} parent=5 // pred_check_branch
      %189 = sbr.rel (%p187) target = $region16
    $region15: #{_lambda_.8} parent=5 // pred_region
      // Predicated region
      $region17: #{_lambda_.8} parent=15 // pred_check
        %p190 = pneg %p51
      $region18: #{_lambda_.8} parent=15 // pred_check_branch
        %192 = sbr.rel (%p190) target = $region20
      $region19: #{_lambda_.8} parent=15 // pred_region
        %s193 = smul.u32 8, %s18
        %p194 = scmp.lt.s32.totalorder %s17, 1
        %s195 = scalar_select %p194, %s17, 1
        %p196 = scmp.lt.s32.totalorder %s193, 7
        %s197 = scalar_select %p196, %s193, 7
        %s198 = smul.addr %s195, 8
        %s199 = sadd.s32 %s197, %s198
        %s200 = smul.addr %s199, 4
        %s201 = scalar_lea.vmem %s0, %s200
        %s202 = smul.u32 8, %s18
      $region20: #{_lambda_.8} parent=15 // pred_fallthru
        _
      // Predicated region
      $region21: #{_lambda_.8} parent=15 // pred_check
        %p203 = pneg %p79
      $region22: #{_lambda_.8} parent=15 // pred_check_branch
        %205 = sbr.rel (%p203) target = $region24
      $region23: #{_lambda_.8} parent=15 // pred_region
        %s206 = smul.u32 8, %s19
        %p207 = scmp.lt.s32.totalorder %s17, 1
        %s208 = scalar_select %p207, %s17, 1
        %p209 = scmp.lt.s32.totalorder %s206, 7
        %s210 = scalar_select %p209, %s206, 7
        %s211 = smul.addr %s208, 8
        %s212 = sadd.s32 %s210, %s211
        %s213 = smul.addr %s212, 4
        %s214 = scalar_lea.vmem %s1, %s213
        %s215 = smul.u32 8, %s19
      $region24: #{_lambda_.8} parent=15 // pred_fallthru
        _
      // Predicated region
      $region25: #{_lambda_.8} parent=15 // pred_check
        %p216 = pneg %p107
      $region26: #{_lambda_.8} parent=15 // pred_check_branch
        %218 = sbr.rel (%p216) target = $region28
      $region27: #{_lambda_.8} parent=15 // pred_region
        %s219 = smul.u32 8, %s19
        %p220 = scmp.lt.s32.totalorder %s17, 1
        %s221 = scalar_select %p220, %s17, 1
        %p222 = scmp.lt.s32.totalorder %s219, 7
        %s223 = scalar_select %p222, %s219, 7
        %s224 = smul.addr %s221, 8
        %s225 = sadd.s32 %s223, %s224
        %s226 = smul.addr %s225, 4
        %s227 = scalar_lea.vmem %s2, %s226
        %s228 = smul.u32 8, %s19
      $region28: #{_lambda_.8} parent=15 // pred_fallthru
        _
      // Predicated region
      $region29: #{_lambda_.8} parent=15 // pred_check
        %p229 = pneg %p137
      $region30: #{_lambda_.8} parent=15 // pred_check_branch
        %231 = sbr.rel (%p229) target = $region32
      $region31: #{_lambda_.8} parent=15 // pred_region
        %p232 = scmp.lt.s32.totalorder %s17, 1
        %s233 = scalar_select %p232, %s17, 1
        %p234 = scmp.lt.s32.totalorder %s18, 0
        %s235 = scalar_select %p234, %s18, 0
        %p236 = scmp.lt.s32.totalorder %s19, 0
        %s237 = scalar_select %p236, %s19, 0
        %s238 = sadd.s32 %s237, %s235
        %s239 = sadd.s32 %s238, %s233
        %s240 = smul.addr %s239, 2
        %s241 = scalar_lea.vmem %s3, %s240
      $region32: #{_lambda_.8} parent=15 // pred_fallthru
        _
    $region16: #{_lambda_.8} parent=5 // pred_fallthru
      _
    %p242 = scmp.le.s32.totalorder 1, %s10
    %p243 = scmp.lt.s32.totalorder %s10, 3
    %p244 = pnand %p242, %p243
    %p245 = pneg %p244
    // Predicated region
    $region33: #{_lambda_.8} parent=5 // pred_check
      _
    $region34: #{_lambda_.8} parent=5 // pred_check_branch
      %247 = sbr.rel (%p244) target = $region36
    $region35: #{_lambda_.8} parent=5 // pred_region
      %s248 = ssub.s32 %s10, 1
      %s249 = smul.u32 8, %s21
      %p250 = scmp.lt.s32.totalorder %s20, 1
      %s251 = scalar_select %p250, %s20, 1
      %p252 = scmp.lt.s32.totalorder %s249, 7
      %s253 = scalar_select %p252, %s249, 7
      %s254 = smul.addr %s251, 8
      %s255 = sadd.s32 %s253, %s254
      %s256 = smul.addr %s255, 4
      %s257 = scalar_lea.vmem %s0, %s256
      %p258 = pneg %p57
      %p259 = pneg %p54
      %s260 = smul.u32 8, %s22
      %p261 = scmp.lt.s32.totalorder %s20, 1
      %s262 = scalar_select %p261, %s20, 1
      %p263 = scmp.lt.s32.totalorder %s260, 7
      %s264 = scalar_select %p263, %s260, 7
      %s265 = smul.addr %s262, 8
      %s266 = sadd.s32 %s264, %s265
      %s267 = smul.addr %s266, 4
      %s268 = scalar_lea.vmem %s1, %s267
      %p269 = pneg %p85
      %p270 = pneg %p82
      %s271 = smul.u32 8, %s22
      %p272 = scmp.lt.s32.totalorder %s20, 1
      %s273 = scalar_select %p272, %s20, 1
      %p274 = scmp.lt.s32.totalorder %s271, 7
      %s275 = scalar_select %p274, %s271, 7
      %s276 = smul.addr %s273, 8
      %s277 = sadd.s32 %s275, %s276
      %s278 = smul.addr %s277, 4
      %s279 = scalar_lea.vmem %s2, %s278
      %p280 = pneg %p113
      %p281 = pneg %p110
      %p282 = scmp.lt.s32.totalorder %s20, 1
      %s283 = scalar_select %p282, %s20, 1
      %p284 = scmp.lt.s32.totalorder %s21, 0
      %s285 = scalar_select %p284, %s21, 0
      %p286 = scmp.lt.s32.totalorder %s22, 0
      %s287 = scalar_select %p286, %s22, 0
      %s288 = sadd.s32 %s287, %s285
      %s289 = sadd.s32 %s288, %s283
      %s290 = smul.addr %s289, 2
      %s291 = scalar_lea.vmem %s3, %s290
      %p292 = pneg %p143
      %p293 = pneg %p140
      %p294 = pneg %p171
      %p295 = pneg %p168
      %p296 = scmp.lt.s32.totalorder %s20, 1
      %s297 = scalar_select %p296, %s20, 1
      %p298 = scmp.lt.s32.totalorder %s21, 0
      %s299 = scalar_select %p298, %s21, 0
      %s300 = sadd.s32 %s299, %s297
      %s301 = smul.addr %s300, 8
      %s302 = scalar_lea.vmem %s4, %s301
      %s303 = smul.u32 8, %s21
      %p304 = scmp.lt.s32.totalorder %s20, 1
      %s305 = scalar_select %p304, %s20, 1
      %p306 = scmp.lt.s32.totalorder %s303, 7
      %s307 = scalar_select %p306, %s303, 7
      %s308 = smul.addr %s305, 8
      %s309 = sadd.s32 %s307, %s308
      %s310 = smul.addr %s309, 4
      %s311 = scalar_lea.vmem %s0, %s310
      %s312 = smul.u32 8, %s21
      %s313 = smul.u32 8, %s22
      %p314 = scmp.lt.s32.totalorder %s20, 1
      %s315 = scalar_select %p314, %s20, 1
      %p316 = scmp.lt.s32.totalorder %s313, 7
      %s317 = scalar_select %p316, %s313, 7
      %s318 = smul.addr %s315, 8
      %s319 = sadd.s32 %s317, %s318
      %s320 = smul.addr %s319, 4
      %s321 = scalar_lea.vmem %s1, %s320
      %s322 = smul.u32 8, %s22
      %s323 = smul.u32 8, %s22
      %p324 = scmp.lt.s32.totalorder %s20, 1
      %s325 = scalar_select %p324, %s20, 1
      %p326 = scmp.lt.s32.totalorder %s323, 7
      %s327 = scalar_select %p326, %s323, 7
      %s328 = smul.addr %s325, 8
      %s329 = sadd.s32 %s327, %s328
      %s330 = smul.addr %s329, 4
      %s331 = scalar_lea.vmem %s2, %s330
      %s332 = smul.u32 8, %s22
      %p333 = scmp.lt.s32.totalorder %s20, 1
      %s334 = scalar_select %p333, %s20, 1
      %p335 = scmp.lt.s32.totalorder %s21, 0
      %s336 = scalar_select %p335, %s21, 0
      %p337 = scmp.lt.s32.totalorder %s22, 0
      %s338 = scalar_select %p337, %s22, 0
      %s339 = sadd.s32 %s338, %s336
      %s340 = sadd.s32 %s339, %s334
      %s341 = smul.addr %s340, 2
      %s342 = scalar_lea.vmem %s3, %s341
      %p343 = scmp.lt.s32.totalorder %s20, 1
      %s344 = scalar_select %p343, %s20, 1
      %p345 = scmp.lt.s32.totalorder %s21, 0
      %s346 = scalar_select %p345, %s21, 0
      %s347 = sadd.s32 %s346, %s344
      %s348 = smul.addr %s347, 8
      %s349 = scalar_lea.vmem %s4, %s348
      %p352 = scmp.eq.s32.totalorder %s22, 0
      // Predicated region
      $region37: #{_lambda_.8} parent=35 // pred_check
        %p353 = pneg %p352
      $region38: #{_lambda_.8} parent=35 // pred_check_branch
        %355 = sbr.rel (%p353) target = $region40
      $region39: #{_lambda_.8} parent=35 // pred_region
        %vm356 = vcmask 7168
        %357 = vst.msk [vmem:[#allocation2] sm:$0xff] %vm356, -inf
        %358 = vst.msk [vmem:[#allocation2 + $0x8] sm:$0xff] %vm356, -inf
        %359 = vst.msk [vmem:[#allocation2 + $0x10] sm:$0xff] %vm356, -inf
        %360 = vst.msk [vmem:[#allocation2 + $0x18] sm:$0xff] %vm356, -inf
        %361 = vst.msk [vmem:[#allocation3] sm:$0xff] %vm356, 0.0
        %362 = vst.msk [vmem:[#allocation3 + $0x8] sm:$0xff] %vm356, 0.0
        %363 = vst.msk [vmem:[#allocation3 + $0x10] sm:$0xff] %vm356, 0.0
        %364 = vst.msk [vmem:[#allocation3 + $0x18] sm:$0xff] %vm356, 0.0
        %vm365 = vcmask 64512
        %366 = vst.msk [vmem:[#allocation4] sm:$0xff] %vm365, 0.0
        %367 = vst.msk [vmem:[#allocation4 + $0x8] sm:$0xff] %vm365, 0.0
        %368 = vst.msk [vmem:[#allocation4 + $0x10] sm:$0xff] %vm365, 0.0
        %369 = vst.msk [vmem:[#allocation4 + $0x18] sm:$0xff] %vm365, 0.0
      $region40: #{_lambda_.8} parent=35 // pred_fallthru
        _
      %v370 = vld [vmem:[%s342] sm:$0x3]
      %vm371 = vnez %v370
      %v372 = vld [vmem:[%s311] sm:$0xf]
      %v373 = vld [vmem:[%s311 + $0x4] sm:$0xf]
      %v374 = vld [vmem:[%s311 + $0x8] sm:$0xf]
      %v375 = vld [vmem:[%s311 + $0xc] sm:$0xf]
      %v376 = vld [vmem:[%s311 + $0x10] sm:$0xf]
      %v377 = vld [vmem:[%s311 + $0x14] sm:$0xf]
      %v378 = vld [vmem:[%s311 + $0x18] sm:$0xf]
      %v379 = vld [vmem:[%s311 + $0x1c] sm:$0xf]
      %v380 = vld [vmem:[%s321] sm:$0xf]
      %v381 = vld [vmem:[%s321 + $0x4] sm:$0xf]
      %v382 = vld [vmem:[%s321 + $0x8] sm:$0xf]
      %v383 = vld [vmem:[%s321 + $0xc] sm:$0xf]
      %v384 = vld [vmem:[%s321 + $0x10] sm:$0xf]
      %v385 = vld [vmem:[%s321 + $0x14] sm:$0xf]
      %v386 = vld [vmem:[%s321 + $0x18] sm:$0xf]
      %v387 = vld [vmem:[%s321 + $0x1c] sm:$0xf]
      %v388 = vld [vmem:[%s331] sm:$0xf]
      %v389 = vld [vmem:[%s331 + $0x4] sm:$0xf]
      %v390 = vld [vmem:[%s331 + $0x8] sm:$0xf]
      %v391 = vld [vmem:[%s331 + $0xc] sm:$0xf]
      %v392 = vld [vmem:[%s331 + $0x10] sm:$0xf]
      %v393 = vld [vmem:[%s331 + $0x14] sm:$0xf]
      %v394 = vld [vmem:[%s331 + $0x18] sm:$0xf]
      %v395 = vld [vmem:[%s331 + $0x1c] sm:$0xf]
      %v404 = vrot.slane %v373, 7
      %vm405 = vcmask 1041409
      %v406 = vsel %vm405, %v404, %v372
      %v407 = vrot.slane %v374, 6
      %vm408 = vcmask 1042434
      %v409 = vsel %vm408, %v407, %v406
      %v410 = vrot.slane %v375, 5
      %vm411 = vcmask 1043459
      %v412 = vsel %vm411, %v410, %v409
      %v413 = vrot.slane %v376, 4
      %vm414 = vcmask 1044484
      %v415 = vsel %vm414, %v413, %v412
      %v416 = vrot.slane %v377, 3
      %vm417 = vcmask 1045509
      %v418 = vsel %vm417, %v416, %v415
      %v419 = vrot.slane %v378, 2
      %vm420 = vcmask 1046534
      %v421 = vsel %vm420, %v419, %v418
      %v422 = vrot.slane %v379, 1
      %vm423 = vcmask 1047559
      %v424 = vsel %vm423, %v422, %v421
      %v433 = vrot.slane %v381, 7
      %v434 = vsel %vm405, %v433, %v380
      %v435 = vrot.slane %v382, 6
      %v436 = vsel %vm408, %v435, %v434
      %v437 = vrot.slane %v383, 5
      %v438 = vsel %vm411, %v437, %v436
      %v439 = vrot.slane %v384, 4
      %v440 = vsel %vm414, %v439, %v438
      %v441 = vrot.slane %v385, 3
      %v442 = vsel %vm417, %v441, %v440
      %v443 = vrot.slane %v386, 2
      %v444 = vsel %vm420, %v443, %v442
      %v445 = vrot.slane %v387, 1
      %v446 = vsel %vm423, %v445, %v444
      %vm447 = vcmask 64512
      %v448 = vsel %vm447, %v424, 0
      %v450 = vsel %vm447, %v446, 0
      %452 = vmatprep.subr.mxu0 0.0
      %453 = vmatpush1.xpose.msra.mxu0 0.0
      %454 = vmatprep.subr.mxu0 0.0
      %455 = vmatpush1.xpose.msra.mxu0 0.0
      %456 = vmatprep.subr.mxu0 0.0
      %457 = vmatpush1.xpose.msra.mxu0 0.0
      %458 = vmatprep.subr.mxu0 0.0
      %459 = vmatpush1.xpose.msra.mxu0 0.0
      %460 = vmatprep.subr.mxu0 0.0
      %461 = vmatpush1.xpose.msra.mxu0 0.0
      %462 = vmatprep.subr.mxu0 0.0
      %463 = vmatpush1.xpose.msra.mxu0 0.0
      %464 = vmatprep.subr.mxu0 0.0
      %465 = vmatpush1.xpose.msra.mxu0 0.0
      %466 = vmatprep.subr.mxu0 0.0
      %467 = vmatpush1.xpose.msra.mxu0 0.0
      %468 = vmatprep.subr.mxu0 0.0
      %469 = vmatpush1.xpose.msra.mxu0 0.0
      %470 = vmatprep.subr.mxu0 0.0
      %471 = vmatpush1.xpose.msra.mxu0 0.0
      %472 = vmatprep.subr.mxu0 0.0
      %473 = vmatpush1.xpose.msra.mxu0 0.0
      %474 = vmatprep.subr.mxu0 0.0
      %475 = vmatpush1.xpose.msra.mxu0 0.0
      %476 = vmatprep.subr.mxu0 0.0
      %477 = vmatpush1.xpose.msra.mxu0 0.0
      %478 = vmatprep.subr.mxu0 0.0
      %479 = vmatpush1.xpose.msra.mxu0 0.0
      %480 = vmatprep.subr.mxu0 0.0
      %481 = vmatpush1.xpose.msra.mxu0 0.0
      %482 = vmatprep.subr.mxu0 0.0
      %483 = vmatpush1.xpose.msra.mxu0 %v450
      %484 = vmatprep.subr.mxu0 0.0
      %485 = vmatpush2.xpose.msra.mxu0 0.0
      %486 = vmatprep.subr.mxu0 0.0
      %487 = vmatpush2.xpose.msra.mxu0 0.0
      %488 = vmatprep.subr.mxu0 0.0
      %489 = vmatpush2.xpose.msra.mxu0 0.0
      %490 = vmatprep.subr.mxu0 0.0
      %491 = vmatpush2.xpose.msra.mxu0 0.0
      %492 = vmatprep.subr.mxu0 0.0
      %493 = vmatpush2.xpose.msra.mxu0 0.0
      %494 = vmatprep.subr.mxu0 0.0
      %495 = vmatpush2.xpose.msra.mxu0 0.0
      %496 = vmatprep.subr.mxu0 0.0
      %497 = vmatpush2.xpose.msra.mxu0 0.0
      %498 = vmatprep.subr.mxu0 0.0
      %499 = vmatpush2.xpose.msra.mxu0 0.0
      %500 = vmatprep.subr.mxu0 0.0
      %501 = vmatpush2.xpose.msra.mxu0 0.0
      %502 = vmatprep.subr.mxu0 0.0
      %503 = vmatpush2.xpose.msra.mxu0 0.0
      %504 = vmatprep.subr.mxu0 0.0
      %505 = vmatpush2.xpose.msra.mxu0 0.0
      %506 = vmatprep.subr.mxu0 0.0
      %507 = vmatpush2.xpose.msra.mxu0 0.0
      %508 = vmatprep.subr.mxu0 0.0
      %509 = vmatpush2.xpose.msra.mxu0 0.0
      %510 = vmatprep.subr.mxu0 0.0
      %511 = vmatpush2.xpose.msra.mxu0 0.0
      %512 = vmatprep.subr.mxu0 0.0
      %513 = vmatpush2.xpose.msra.mxu0 0.0
      %514 = vmatprep.subr.mxu0 0.0
      %515 = vmatpush2.xpose.msra.mxu0 0.0
      %516 = vmatprep.mubr.f32.mxu0 0.0
      %517 = vmatmul.mubr.f32.gmra.mxu0 %v448
      %v518 = vpop.f32.mrf.mxu0
      %v519 = vadd.f32 0.0, %v518
      %v520 = vpop.f32.mrf.mxu0
      %521 = vdwg.mxu0
      %v522 = vsel %vm371, 16843009, 0
      %v523 = vunpack.c.0.s8 %v522
      %vm524 = vcmp.ne.s32.totalorder %v523, 0
      %v525 = vsel %vm524, -3.4028235e+38, %v519
      %v526 = vld [vmem:[#allocation2] sm:$0xff]
      %v527 = vsel %vm447, %v525, -inf
      %528 = vmax.xlane.f32.xlu0 %v527
      %v529 = vpop.xlane.xlu0 %528
      %v530 = vmax.f32 %v526, %v529
      %v531 = vsub.f32 %v526, %v530
      %v532 = vmul.f32 %v531, 1.442695
      %v533 = vpow.pop %v532
      %535 = vset.pattern.permute.xlu0 0
      %536 = vperm.xlu0 %535, %v530
      %v537 = vpop.permute.xlu0 %536
      %v539 = vsub.f32 %v525, %v537
      %v540 = vmul.f32 %v539, 1.442695
      %v541 = vpow.pop %v540
      %v542 = vld [vmem:[#allocation3] sm:$0xff]
      %v543 = vmul.f32 %v533, %v542
      %v544 = vsel %vm447, %v541, 0.0
      %545 = vadd.xlane.f32.xlu0 %v544
      %v546 = vpop.xlane.xlu0 %545
      %v547 = vadd.f32 %v543, %v546
      %vm548 = vcmask 7168
      %549 = vst.msk [vmem:[#allocation3] sm:$0xff] %vm548, %v547
      %v550 = vld [vmem:[#allocation4] sm:$0xff]
      %552 = vset.pattern.permute.xlu0 0
      %553 = vperm.xlu0 %552, %v533
      %v554 = vpop.permute.xlu0 %553
      %v556 = vmul.f32 %v554, %v550
      %v565 = vrot.slane %v389, 7
      %v566 = vsel %vm405, %v565, %v388
      %v567 = vrot.slane %v390, 6
      %v568 = vsel %vm408, %v567, %v566
      %v569 = vrot.slane %v391, 5
      %v570 = vsel %vm411, %v569, %v568
      %v571 = vrot.slane %v392, 4
      %v572 = vsel %vm414, %v571, %v570
      %v573 = vrot.slane %v393, 3
      %v574 = vsel %vm417, %v573, %v572
      %v575 = vrot.slane %v394, 2
      %v576 = vsel %vm420, %v575, %v574
      %v577 = vrot.slane %v395, 1
      %v578 = vsel %vm423, %v577, %v576
      %v581 = vsel %vm447, %v541, 0
      %583 = vmatprep.subr.mxu0 0.0
      %584 = vmatpush1.msra.mxu0 0.0
      %585 = vmatprep.subr.mxu0 0.0
      %586 = vmatpush1.msra.mxu0 0.0
      %587 = vmatprep.subr.mxu0 0.0
      %588 = vmatpush1.msra.mxu0 0.0
      %589 = vmatprep.subr.mxu0 0.0
      %590 = vmatpush1.msra.mxu0 0.0
      %591 = vmatprep.subr.mxu0 0.0
      %592 = vmatpush1.msra.mxu0 0.0
      %593 = vmatprep.subr.mxu0 0.0
      %594 = vmatpush1.msra.mxu0 0.0
      %595 = vmatprep.subr.mxu0 0.0
      %596 = vmatpush1.msra.mxu0 0.0
      %597 = vmatprep.subr.mxu0 0.0
      %598 = vmatpush1.msra.mxu0 0.0
      %599 = vmatprep.subr.mxu0 0.0
      %600 = vmatpush1.msra.mxu0 0.0
      %601 = vmatprep.subr.mxu0 0.0
      %602 = vmatpush1.msra.mxu0 0.0
      %603 = vmatprep.subr.mxu0 0.0
      %604 = vmatpush1.msra.mxu0 0.0
      %605 = vmatprep.subr.mxu0 0.0
      %606 = vmatpush1.msra.mxu0 0.0
      %607 = vmatprep.subr.mxu0 0.0
      %608 = vmatpush1.msra.mxu0 0.0
      %609 = vmatprep.subr.mxu0 0.0
      %610 = vmatpush1.msra.mxu0 0.0
      %611 = vmatprep.subr.mxu0 0.0
      %612 = vmatpush1.msra.mxu0 0.0
      %613 = vmatprep.subr.mxu0 0.0
      %614 = vmatpush1.msra.mxu0 %v578
      %615 = vmatprep.subr.mxu0 0.0
      %616 = vmatpush2.msra.mxu0 0.0
      %617 = vmatprep.subr.mxu0 0.0
      %618 = vmatpush2.msra.mxu0 0.0
      %619 = vmatprep.subr.mxu0 0.0
      %620 = vmatpush2.msra.mxu0 0.0
      %621 = vmatprep.subr.mxu0 0.0
      %622 = vmatpush2.msra.mxu0 0.0
      %623 = vmatprep.subr.mxu0 0.0
      %624 = vmatpush2.msra.mxu0 0.0
      %625 = vmatprep.subr.mxu0 0.0
      %626 = vmatpush2.msra.mxu0 0.0
      %627 = vmatprep.subr.mxu0 0.0
      %628 = vmatpush2.msra.mxu0 0.0
      %629 = vmatprep.subr.mxu0 0.0
      %630 = vmatpush2.msra.mxu0 0.0
      %631 = vmatprep.subr.mxu0 0.0
      %632 = vmatpush2.msra.mxu0 0.0
      %633 = vmatprep.subr.mxu0 0.0
      %634 = vmatpush2.msra.mxu0 0.0
      %635 = vmatprep.subr.mxu0 0.0
      %636 = vmatpush2.msra.mxu0 0.0
      %637 = vmatprep.subr.mxu0 0.0
      %638 = vmatpush2.msra.mxu0 0.0
      %639 = vmatprep.subr.mxu0 0.0
      %640 = vmatpush2.msra.mxu0 0.0
      %641 = vmatprep.subr.mxu0 0.0
      %642 = vmatpush2.msra.mxu0 0.0
      %643 = vmatprep.subr.mxu0 0.0
      %644 = vmatpush2.msra.mxu0 0.0
      %645 = vmatprep.subr.mxu0 0.0
      %646 = vmatpush2.msra.mxu0 0.0
      %647 = vmatprep.mubr.f32.mxu0 0.0
      %648 = vmatmul.mubr.f32.gmra.mxu0 %v581
      %v649 = vpop.f32.mrf.mxu0
      %v650 = vadd.f32 0.0, %v649
      %v651 = vpop.f32.mrf.mxu0
      %652 = vdwg.mxu0
      %v653 = vadd.f32 %v556, %v650
      %654 = vst.msk [vmem:[#allocation4] sm:$0xff] %vm447, %v653
      %655 = vst.msk [vmem:[#allocation2] sm:$0xff] %vm548, %v530
      %v656 = vrot.slane %v372, 1
      %v657 = vsel %vm405, %v373, %v656
      %v658 = vrot.slane %v374, 7
      %v659 = vsel %vm408, %v658, %v657
      %v660 = vrot.slane %v375, 6
      %v661 = vsel %vm411, %v660, %v659
      %v662 = vrot.slane %v376, 5
      %v663 = vsel %vm414, %v662, %v661
      %v664 = vrot.slane %v377, 4
      %v665 = vsel %vm417, %v664, %v663
      %v666 = vrot.slane %v378, 3
      %v667 = vsel %vm420, %v666, %v665
      %v668 = vrot.slane %v379, 2
      %v669 = vsel %vm423, %v668, %v667
      %v670 = vrot.slane %v380, 1
      %v671 = vsel %vm405, %v381, %v670
      %v672 = vrot.slane %v382, 7
      %v673 = vsel %vm408, %v672, %v671
      %v674 = vrot.slane %v383, 6
      %v675 = vsel %vm411, %v674, %v673
      %v676 = vrot.slane %v384, 5
      %v677 = vsel %vm414, %v676, %v675
      %v678 = vrot.slane %v385, 4
      %v679 = vsel %vm417, %v678, %v677
      %v680 = vrot.slane %v386, 3
      %v681 = vsel %vm420, %v680, %v679
      %v682 = vrot.slane %v387, 2
      %v683 = vsel %vm423, %v682, %v681
      %v684 = vsel %vm447, %v669, 0
      %v686 = vsel %vm447, %v683, 0
      %688 = vmatprep.subr.mxu0 0.0
      %689 = vmatpush1.xpose.msra.mxu0 0.0
      %690 = vmatprep.subr.mxu0 0.0
      %691 = vmatpush1.xpose.msra.mxu0 0.0
      %692 = vmatprep.subr.mxu0 0.0
      %693 = vmatpush1.xpose.msra.mxu0 0.0
      %694 = vmatprep.subr.mxu0 0.0
      %695 = vmatpush1.xpose.msra.mxu0 0.0
      %696 = vmatprep.subr.mxu0 0.0
      %697 = vmatpush1.xpose.msra.mxu0 0.0
      %698 = vmatprep.subr.mxu0 0.0
      %699 = vmatpush1.xpose.msra.mxu0 0.0
      %700 = vmatprep.subr.mxu0 0.0
      %701 = vmatpush1.xpose.msra.mxu0 0.0
      %702 = vmatprep.subr.mxu0 0.0
      %703 = vmatpush1.xpose.msra.mxu0 0.0
      %704 = vmatprep.subr.mxu0 0.0
      %705 = vmatpush1.xpose.msra.mxu0 0.0
      %706 = vmatprep.subr.mxu0 0.0
      %707 = vmatpush1.xpose.msra.mxu0 0.0
      %708 = vmatprep.subr.mxu0 0.0
      %709 = vmatpush1.xpose.msra.mxu0 0.0
      %710 = vmatprep.subr.mxu0 0.0
      %711 = vmatpush1.xpose.msra.mxu0 0.0
      %712 = vmatprep.subr.mxu0 0.0
      %713 = vmatpush1.xpose.msra.mxu0 0.0
      %714 = vmatprep.subr.mxu0 0.0
      %715 = vmatpush1.xpose.msra.mxu0 0.0
      %716 = vmatprep.subr.mxu0 0.0
      %717 = vmatpush1.xpose.msra.mxu0 0.0
      %718 = vmatprep.subr.mxu0 0.0
      %719 = vmatpush1.xpose.msra.mxu0 %v686
      %720 = vmatprep.subr.mxu0 0.0
      %721 = vmatpush2.xpose.msra.mxu0 0.0
      %722 = vmatprep.subr.mxu0 0.0
      %723 = vmatpush2.xpose.msra.mxu0 0.0
      %724 = vmatprep.subr.mxu0 0.0
      %725 = vmatpush2.xpose.msra.mxu0 0.0
      %726 = vmatprep.subr.mxu0 0.0
      %727 = vmatpush2.xpose.msra.mxu0 0.0
      %728 = vmatprep.subr.mxu0 0.0
      %729 = vmatpush2.xpose.msra.mxu0 0.0
      %730 = vmatprep.subr.mxu0 0.0
      %731 = vmatpush2.xpose.msra.mxu0 0.0
      %732 = vmatprep.subr.mxu0 0.0
      %733 = vmatpush2.xpose.msra.mxu0 0.0
      %734 = vmatprep.subr.mxu0 0.0
      %735 = vmatpush2.xpose.msra.mxu0 0.0
      %736 = vmatprep.subr.mxu0 0.0
      %737 = vmatpush2.xpose.msra.mxu0 0.0
      %738 = vmatprep.subr.mxu0 0.0
      %739 = vmatpush2.xpose.msra.mxu0 0.0
      %740 = vmatprep.subr.mxu0 0.0
      %741 = vmatpush2.xpose.msra.mxu0 0.0
      %742 = vmatprep.subr.mxu0 0.0
      %743 = vmatpush2.xpose.msra.mxu0 0.0
      %744 = vmatprep.subr.mxu0 0.0
      %745 = vmatpush2.xpose.msra.mxu0 0.0
      %746 = vmatprep.subr.mxu0 0.0
      %747 = vmatpush2.xpose.msra.mxu0 0.0
      %748 = vmatprep.subr.mxu0 0.0
      %749 = vmatpush2.xpose.msra.mxu0 0.0
      %750 = vmatprep.subr.mxu0 0.0
      %751 = vmatpush2.xpose.msra.mxu0 0.0
      %752 = vmatprep.mubr.f32.mxu0 0.0
      %753 = vmatmul.mubr.f32.gmra.mxu0 %v684
      %v754 = vpop.f32.mrf.mxu0
      %v755 = vadd.f32 0.0, %v754
      %v756 = vpop.f32.mrf.mxu0
      %757 = vdwg.mxu0
      %v758 = vsel %vm524, -3.4028235e+38, %v755
      %s759 = scalar_lea.vmem [#allocation2], 8
      %v760 = vld [vmem:[%s759] sm:$0xff]
      %v761 = vsel %vm447, %v758, -inf
      %762 = vmax.xlane.f32.xlu0 %v761
      %v763 = vpop.xlane.xlu0 %762
      %v764 = vmax.f32 %v760, %v763
      %v765 = vsub.f32 %v760, %v764
      %v766 = vmul.f32 %v765, 1.442695
      %v767 = vpow.pop %v766
      %769 = vset.pattern.permute.xlu0 0
      %770 = vperm.xlu0 %769, %v764
      %v771 = vpop.permute.xlu0 %770
      %v773 = vsub.f32 %v758, %v771
      %v774 = vmul.f32 %v773, 1.442695
      %v775 = vpow.pop %v774
      %s776 = scalar_lea.vmem [#allocation3], 8
      %v777 = vld [vmem:[%s776] sm:$0xff]
      %v778 = vmul.f32 %v767, %v777
      %v779 = vsel %vm447, %v775, 0.0
      %780 = vadd.xlane.f32.xlu0 %v779
      %v781 = vpop.xlane.xlu0 %780
      %v782 = vadd.f32 %v778, %v781
      %783 = vst.msk [vmem:[%s776] sm:$0xff] %vm548, %v782
      %s784 = scalar_lea.vmem [#allocation4], 8
      %v785 = vld [vmem:[%s784] sm:$0xff]
      %787 = vset.pattern.permute.xlu0 0
      %788 = vperm.xlu0 %787, %v767
      %v789 = vpop.permute.xlu0 %788
      %v791 = vmul.f32 %v789, %v785
      %v792 = vrot.slane %v388, 1
      %v793 = vsel %vm405, %v389, %v792
      %v794 = vrot.slane %v390, 7
      %v795 = vsel %vm408, %v794, %v793
      %v796 = vrot.slane %v391, 6
      %v797 = vsel %vm411, %v796, %v795
      %v798 = vrot.slane %v392, 5
      %v799 = vsel %vm414, %v798, %v797
      %v800 = vrot.slane %v393, 4
      %v801 = vsel %vm417, %v800, %v799
      %v802 = vrot.slane %v394, 3
      %v803 = vsel %vm420, %v802, %v801
      %v804 = vrot.slane %v395, 2
      %v805 = vsel %vm423, %v804, %v803
      %v808 = vsel %vm447, %v775, 0
      %810 = vmatprep.subr.mxu0 0.0
      %811 = vmatpush1.msra.mxu0 0.0
      %812 = vmatprep.subr.mxu0 0.0
      %813 = vmatpush1.msra.mxu0 0.0
      %814 = vmatprep.subr.mxu0 0.0
      %815 = vmatpush1.msra.mxu0 0.0
      %816 = vmatprep.subr.mxu0 0.0
      %817 = vmatpush1.msra.mxu0 0.0
      %818 = vmatprep.subr.mxu0 0.0
      %819 = vmatpush1.msra.mxu0 0.0
      %820 = vmatprep.subr.mxu0 0.0
      %821 = vmatpush1.msra.mxu0 0.0
      %822 = vmatprep.subr.mxu0 0.0
      %823 = vmatpush1.msra.mxu0 0.0
      %824 = vmatprep.subr.mxu0 0.0
      %825 = vmatpush1.msra.mxu0 0.0
      %826 = vmatprep.subr.mxu0 0.0
      %827 = vmatpush1.msra.mxu0 0.0
      %828 = vmatprep.subr.mxu0 0.0
      %829 = vmatpush1.msra.mxu0 0.0
      %830 = vmatprep.subr.mxu0 0.0
      %831 = vmatpush1.msra.mxu0 0.0
      %832 = vmatprep.subr.mxu0 0.0
      %833 = vmatpush1.msra.mxu0 0.0
      %834 = vmatprep.subr.mxu0 0.0
      %835 = vmatpush1.msra.mxu0 0.0
      %836 = vmatprep.subr.mxu0 0.0
      %837 = vmatpush1.msra.mxu0 0.0
      %838 = vmatprep.subr.mxu0 0.0
      %839 = vmatpush1.msra.mxu0 0.0
      %840 = vmatprep.subr.mxu0 0.0
      %841 = vmatpush1.msra.mxu0 %v805
      %842 = vmatprep.subr.mxu0 0.0
      %843 = vmatpush2.msra.mxu0 0.0
      %844 = vmatprep.subr.mxu0 0.0
      %845 = vmatpush2.msra.mxu0 0.0
      %846 = vmatprep.subr.mxu0 0.0
      %847 = vmatpush2.msra.mxu0 0.0
      %848 = vmatprep.subr.mxu0 0.0
      %849 = vmatpush2.msra.mxu0 0.0
      %850 = vmatprep.subr.mxu0 0.0
      %851 = vmatpush2.msra.mxu0 0.0
      %852 = vmatprep.subr.mxu0 0.0
      %853 = vmatpush2.msra.mxu0 0.0
      %854 = vmatprep.subr.mxu0 0.0
      %855 = vmatpush2.msra.mxu0 0.0
      %856 = vmatprep.subr.mxu0 0.0
      %857 = vmatpush2.msra.mxu0 0.0
      %858 = vmatprep.subr.mxu0 0.0
      %859 = vmatpush2.msra.mxu0 0.0
      %860 = vmatprep.subr.mxu0 0.0
      %861 = vmatpush2.msra.mxu0 0.0
      %862 = vmatprep.subr.mxu0 0.0
      %863 = vmatpush2.msra.mxu0 0.0
      %864 = vmatprep.subr.mxu0 0.0
      %865 = vmatpush2.msra.mxu0 0.0
      %866 = vmatprep.subr.mxu0 0.0
      %867 = vmatpush2.msra.mxu0 0.0
      %868 = vmatprep.subr.mxu0 0.0
      %869 = vmatpush2.msra.mxu0 0.0
      %870 = vmatprep.subr.mxu0 0.0
      %871 = vmatpush2.msra.mxu0 0.0
      %872 = vmatprep.subr.mxu0 0.0
      %873 = vmatpush2.msra.mxu0 0.0
      %874 = vmatprep.mubr.f32.mxu0 0.0
      %875 = vmatmul.mubr.f32.gmra.mxu0 %v808
      %v876 = vpop.f32.mrf.mxu0
      %v877 = vadd.f32 0.0, %v876
      %v878 = vpop.f32.mrf.mxu0
      %879 = vdwg.mxu0
      %v880 = vadd.f32 %v791, %v877
      %881 = vst.msk [vmem:[%s784] sm:$0xff] %vm447, %v880
      %882 = vst.msk [vmem:[%s759] sm:$0xff] %vm548, %v764
      %v883 = vrot.slane %v372, 2
      %v884 = vrot.slane %v373, 1
      %v885 = vsel %vm405, %v884, %v883
      %v886 = vsel %vm408, %v374, %v885
      %v887 = vrot.slane %v375, 7
      %v888 = vsel %vm411, %v887, %v886
      %v889 = vrot.slane %v376, 6
      %v890 = vsel %vm414, %v889, %v888
      %v891 = vrot.slane %v377, 5
      %v892 = vsel %vm417, %v891, %v890
      %v893 = vrot.slane %v378, 4
      %v894 = vsel %vm420, %v893, %v892
      %v895 = vrot.slane %v379, 3
      %v896 = vsel %vm423, %v895, %v894
      %v897 = vrot.slane %v380, 2
      %v898 = vrot.slane %v381, 1
      %v899 = vsel %vm405, %v898, %v897
      %v900 = vsel %vm408, %v382, %v899
      %v901 = vrot.slane %v383, 7
      %v902 = vsel %vm411, %v901, %v900
      %v903 = vrot.slane %v384, 6
      %v904 = vsel %vm414, %v903, %v902
      %v905 = vrot.slane %v385, 5
      %v906 = vsel %vm417, %v905, %v904
      %v907 = vrot.slane %v386, 4
      %v908 = vsel %vm420, %v907, %v906
      %v909 = vrot.slane %v387, 3
      %v910 = vsel %vm423, %v909, %v908
      %v911 = vsel %vm447, %v896, 0
      %v913 = vsel %vm447, %v910, 0
      %915 = vmatprep.subr.mxu0 0.0
      %916 = vmatpush1.xpose.msra.mxu0 0.0
      %917 = vmatprep.subr.mxu0 0.0
      %918 = vmatpush1.xpose.msra.mxu0 0.0
      %919 = vmatprep.subr.mxu0 0.0
      %920 = vmatpush1.xpose.msra.mxu0 0.0
      %921 = vmatprep.subr.mxu0 0.0
      %922 = vmatpush1.xpose.msra.mxu0 0.0
      %923 = vmatprep.subr.mxu0 0.0
      %924 = vmatpush1.xpose.msra.mxu0 0.0
      %925 = vmatprep.subr.mxu0 0.0
      %926 = vmatpush1.xpose.msra.mxu0 0.0
      %927 = vmatprep.subr.mxu0 0.0
      %928 = vmatpush1.xpose.msra.mxu0 0.0
      %929 = vmatprep.subr.mxu0 0.0
      %930 = vmatpush1.xpose.msra.mxu0 0.0
      %931 = vmatprep.subr.mxu0 0.0
      %932 = vmatpush1.xpose.msra.mxu0 0.0
      %933 = vmatprep.subr.mxu0 0.0
      %934 = vmatpush1.xpose.msra.mxu0 0.0
      %935 = vmatprep.subr.mxu0 0.0
      %936 = vmatpush1.xpose.msra.mxu0 0.0
      %937 = vmatprep.subr.mxu0 0.0
      %938 = vmatpush1.xpose.msra.mxu0 0.0
      %939 = vmatprep.subr.mxu0 0.0
      %940 = vmatpush1.xpose.msra.mxu0 0.0
      %941 = vmatprep.subr.mxu0 0.0
      %942 = vmatpush1.xpose.msra.mxu0 0.0
      %943 = vmatprep.subr.mxu0 0.0
      %944 = vmatpush1.xpose.msra.mxu0 0.0
      %945 = vmatprep.subr.mxu0 0.0
      %946 = vmatpush1.xpose.msra.mxu0 %v913
      %947 = vmatprep.subr.mxu0 0.0
      %948 = vmatpush2.xpose.msra.mxu0 0.0
      %949 = vmatprep.subr.mxu0 0.0
      %950 = vmatpush2.xpose.msra.mxu0 0.0
      %951 = vmatprep.subr.mxu0 0.0
      %952 = vmatpush2.xpose.msra.mxu0 0.0
      %953 = vmatprep.subr.mxu0 0.0
      %954 = vmatpush2.xpose.msra.mxu0 0.0
      %955 = vmatprep.subr.mxu0 0.0
      %956 = vmatpush2.xpose.msra.mxu0 0.0
      %957 = vmatprep.subr.mxu0 0.0
      %958 = vmatpush2.xpose.msra.mxu0 0.0
      %959 = vmatprep.subr.mxu0 0.0
      %960 = vmatpush2.xpose.msra.mxu0 0.0
      %961 = vmatprep.subr.mxu0 0.0
      %962 = vmatpush2.xpose.msra.mxu0 0.0
      %963 = vmatprep.subr.mxu0 0.0
      %964 = vmatpush2.xpose.msra.mxu0 0.0
      %965 = vmatprep.subr.mxu0 0.0
      %966 = vmatpush2.xpose.msra.mxu0 0.0
      %967 = vmatprep.subr.mxu0 0.0
      %968 = vmatpush2.xpose.msra.mxu0 0.0
      %969 = vmatprep.subr.mxu0 0.0
      %970 = vmatpush2.xpose.msra.mxu0 0.0
      %971 = vmatprep.subr.mxu0 0.0
      %972 = vmatpush2.xpose.msra.mxu0 0.0
      %973 = vmatprep.subr.mxu0 0.0
      %974 = vmatpush2.xpose.msra.mxu0 0.0
      %975 = vmatprep.subr.mxu0 0.0
      %976 = vmatpush2.xpose.msra.mxu0 0.0
      %977 = vmatprep.subr.mxu0 0.0
      %978 = vmatpush2.xpose.msra.mxu0 0.0
      %979 = vmatprep.mubr.f32.mxu0 0.0
      %980 = vmatmul.mubr.f32.gmra.mxu0 %v911
      %v981 = vpop.f32.mrf.mxu0
      %v982 = vadd.f32 0.0, %v981
      %v983 = vpop.f32.mrf.mxu0
      %984 = vdwg.mxu0
      %v985 = vsel %vm524, -3.4028235e+38, %v982
      %s986 = scalar_lea.vmem [#allocation2], 16
      %v987 = vld [vmem:[%s986] sm:$0xff]
      %v988 = vsel %vm447, %v985, -inf
      %989 = vmax.xlane.f32.xlu0 %v988
      %v990 = vpop.xlane.xlu0 %989
      %v991 = vmax.f32 %v987, %v990
      %v992 = vsub.f32 %v987, %v991
      %v993 = vmul.f32 %v992, 1.442695
      %v994 = vpow.pop %v993
      %996 = vset.pattern.permute.xlu0 0
      %997 = vperm.xlu0 %996, %v991
      %v998 = vpop.permute.xlu0 %997
      %v1000 = vsub.f32 %v985, %v998
      %v1001 = vmul.f32 %v1000, 1.442695
      %v1002 = vpow.pop %v1001
      %s1003 = scalar_lea.vmem [#allocation3], 16
      %v1004 = vld [vmem:[%s1003] sm:$0xff]
      %v1005 = vmul.f32 %v994, %v1004
      %v1006 = vsel %vm447, %v1002, 0.0
      %1007 = vadd.xlane.f32.xlu0 %v1006
      %v1008 = vpop.xlane.xlu0 %1007
      %v1009 = vadd.f32 %v1005, %v1008
      %1010 = vst.msk [vmem:[%s1003] sm:$0xff] %vm548, %v1009
      %s1011 = scalar_lea.vmem [#allocation4], 16
      %v1012 = vld [vmem:[%s1011] sm:$0xff]
      %1014 = vset.pattern.permute.xlu0 0
      %1015 = vperm.xlu0 %1014, %v994
      %v1016 = vpop.permute.xlu0 %1015
      %v1018 = vmul.f32 %v1016, %v1012
      %v1019 = vrot.slane %v388, 2
      %v1020 = vrot.slane %v389, 1
      %v1021 = vsel %vm405, %v1020, %v1019
      %v1022 = vsel %vm408, %v390, %v1021
      %v1023 = vrot.slane %v391, 7
      %v1024 = vsel %vm411, %v1023, %v1022
      %v1025 = vrot.slane %v392, 6
      %v1026 = vsel %vm414, %v1025, %v1024
      %v1027 = vrot.slane %v393, 5
      %v1028 = vsel %vm417, %v1027, %v1026
      %v1029 = vrot.slane %v394, 4
      %v1030 = vsel %vm420, %v1029, %v1028
      %v1031 = vrot.slane %v395, 3
      %v1032 = vsel %vm423, %v1031, %v1030
      %v1035 = vsel %vm447, %v1002, 0
      %1037 = vmatprep.subr.mxu0 0.0
      %1038 = vmatpush1.msra.mxu0 0.0
      %1039 = vmatprep.subr.mxu0 0.0
      %1040 = vmatpush1.msra.mxu0 0.0
      %1041 = vmatprep.subr.mxu0 0.0
      %1042 = vmatpush1.msra.mxu0 0.0
      %1043 = vmatprep.subr.mxu0 0.0
      %1044 = vmatpush1.msra.mxu0 0.0
      %1045 = vmatprep.subr.mxu0 0.0
      %1046 = vmatpush1.msra.mxu0 0.0
      %1047 = vmatprep.subr.mxu0 0.0
      %1048 = vmatpush1.msra.mxu0 0.0
      %1049 = vmatprep.subr.mxu0 0.0
      %1050 = vmatpush1.msra.mxu0 0.0
      %1051 = vmatprep.subr.mxu0 0.0
      %1052 = vmatpush1.msra.mxu0 0.0
      %1053 = vmatprep.subr.mxu0 0.0
      %1054 = vmatpush1.msra.mxu0 0.0
      %1055 = vmatprep.subr.mxu0 0.0
      %1056 = vmatpush1.msra.mxu0 0.0
      %1057 = vmatprep.subr.mxu0 0.0
      %1058 = vmatpush1.msra.mxu0 0.0
      %1059 = vmatprep.subr.mxu0 0.0
      %1060 = vmatpush1.msra.mxu0 0.0
      %1061 = vmatprep.subr.mxu0 0.0
      %1062 = vmatpush1.msra.mxu0 0.0
      %1063 = vmatprep.subr.mxu0 0.0
      %1064 = vmatpush1.msra.mxu0 0.0
      %1065 = vmatprep.subr.mxu0 0.0
      %1066 = vmatpush1.msra.mxu0 0.0
      %1067 = vmatprep.subr.mxu0 0.0
      %1068 = vmatpush1.msra.mxu0 %v1032
      %1069 = vmatprep.subr.mxu0 0.0
      %1070 = vmatpush2.msra.mxu0 0.0
      %1071 = vmatprep.subr.mxu0 0.0
      %1072 = vmatpush2.msra.mxu0 0.0
      %1073 = vmatprep.subr.mxu0 0.0
      %1074 = vmatpush2.msra.mxu0 0.0
      %1075 = vmatprep.subr.mxu0 0.0
      %1076 = vmatpush2.msra.mxu0 0.0
      %1077 = vmatprep.subr.mxu0 0.0
      %1078 = vmatpush2.msra.mxu0 0.0
      %1079 = vmatprep.subr.mxu0 0.0
      %1080 = vmatpush2.msra.mxu0 0.0
      %1081 = vmatprep.subr.mxu0 0.0
      %1082 = vmatpush2.msra.mxu0 0.0
      %1083 = vmatprep.subr.mxu0 0.0
      %1084 = vmatpush2.msra.mxu0 0.0
      %1085 = vmatprep.subr.mxu0 0.0
      %1086 = vmatpush2.msra.mxu0 0.0
      %1087 = vmatprep.subr.mxu0 0.0
      %1088 = vmatpush2.msra.mxu0 0.0
      %1089 = vmatprep.subr.mxu0 0.0
      %1090 = vmatpush2.msra.mxu0 0.0
      %1091 = vmatprep.subr.mxu0 0.0
      %1092 = vmatpush2.msra.mxu0 0.0
      %1093 = vmatprep.subr.mxu0 0.0
      %1094 = vmatpush2.msra.mxu0 0.0
      %1095 = vmatprep.subr.mxu0 0.0
      %1096 = vmatpush2.msra.mxu0 0.0
      %1097 = vmatprep.subr.mxu0 0.0
      %1098 = vmatpush2.msra.mxu0 0.0
      %1099 = vmatprep.subr.mxu0 0.0
      %1100 = vmatpush2.msra.mxu0 0.0
      %1101 = vmatprep.mubr.f32.mxu0 0.0
      %1102 = vmatmul.mubr.f32.gmra.mxu0 %v1035
      %v1103 = vpop.f32.mrf.mxu0
      %v1104 = vadd.f32 0.0, %v1103
      %v1105 = vpop.f32.mrf.mxu0
      %1106 = vdwg.mxu0
      %v1107 = vadd.f32 %v1018, %v1104
      %1108 = vst.msk [vmem:[%s1011] sm:$0xff] %vm447, %v1107
      %1109 = vst.msk [vmem:[%s986] sm:$0xff] %vm548, %v991
      %v1110 = vrot.slane %v372, 3
      %v1111 = vrot.slane %v373, 2
      %v1112 = vsel %vm405, %v1111, %v1110
      %v1113 = vrot.slane %v374, 1
      %v1114 = vsel %vm408, %v1113, %v1112
      %v1115 = vsel %vm411, %v375, %v1114
      %v1116 = vrot.slane %v376, 7
      %v1117 = vsel %vm414, %v1116, %v1115
      %v1118 = vrot.slane %v377, 6
      %v1119 = vsel %vm417, %v1118, %v1117
      %v1120 = vrot.slane %v378, 5
      %v1121 = vsel %vm420, %v1120, %v1119
      %v1122 = vrot.slane %v379, 4
      %v1123 = vsel %vm423, %v1122, %v1121
      %v1124 = vrot.slane %v380, 3
      %v1125 = vrot.slane %v381, 2
      %v1126 = vsel %vm405, %v1125, %v1124
      %v1127 = vrot.slane %v382, 1
      %v1128 = vsel %vm408, %v1127, %v1126
      %v1129 = vsel %vm411, %v383, %v1128
      %v1130 = vrot.slane %v384, 7
      %v1131 = vsel %vm414, %v1130, %v1129
      %v1132 = vrot.slane %v385, 6
      %v1133 = vsel %vm417, %v1132, %v1131
      %v1134 = vrot.slane %v386, 5
      %v1135 = vsel %vm420, %v1134, %v1133
      %v1136 = vrot.slane %v387, 4
      %v1137 = vsel %vm423, %v1136, %v1135
      %v1138 = vsel %vm447, %v1123, 0
      %v1140 = vsel %vm447, %v1137, 0
      %1142 = vmatprep.subr.mxu0 0.0
      %1143 = vmatpush1.xpose.msra.mxu0 0.0
      %1144 = vmatprep.subr.mxu0 0.0
      %1145 = vmatpush1.xpose.msra.mxu0 0.0
      %1146 = vmatprep.subr.mxu0 0.0
      %1147 = vmatpush1.xpose.msra.mxu0 0.0
      %1148 = vmatprep.subr.mxu0 0.0
      %1149 = vmatpush1.xpose.msra.mxu0 0.0
      %1150 = vmatprep.subr.mxu0 0.0
      %1151 = vmatpush1.xpose.msra.mxu0 0.0
      %1152 = vmatprep.subr.mxu0 0.0
      %1153 = vmatpush1.xpose.msra.mxu0 0.0
      %1154 = vmatprep.subr.mxu0 0.0
      %1155 = vmatpush1.xpose.msra.mxu0 0.0
      %1156 = vmatprep.subr.mxu0 0.0
      %1157 = vmatpush1.xpose.msra.mxu0 0.0
      %1158 = vmatprep.subr.mxu0 0.0
      %1159 = vmatpush1.xpose.msra.mxu0 0.0
      %1160 = vmatprep.subr.mxu0 0.0
      %1161 = vmatpush1.xpose.msra.mxu0 0.0
      %1162 = vmatprep.subr.mxu0 0.0
      %1163 = vmatpush1.xpose.msra.mxu0 0.0
      %1164 = vmatprep.subr.mxu0 0.0
      %1165 = vmatpush1.xpose.msra.mxu0 0.0
      %1166 = vmatprep.subr.mxu0 0.0
      %1167 = vmatpush1.xpose.msra.mxu0 0.0
      %1168 = vmatprep.subr.mxu0 0.0
      %1169 = vmatpush1.xpose.msra.mxu0 0.0
      %1170 = vmatprep.subr.mxu0 0.0
      %1171 = vmatpush1.xpose.msra.mxu0 0.0
      %1172 = vmatprep.subr.mxu0 0.0
      %1173 = vmatpush1.xpose.msra.mxu0 %v1140
      %1174 = vmatprep.subr.mxu0 0.0
      %1175 = vmatpush2.xpose.msra.mxu0 0.0
      %1176 = vmatprep.subr.mxu0 0.0
      %1177 = vmatpush2.xpose.msra.mxu0 0.0
      %1178 = vmatprep.subr.mxu0 0.0
      %1179 = vmatpush2.xpose.msra.mxu0 0.0
      %1180 = vmatprep.subr.mxu0 0.0
      %1181 = vmatpush2.xpose.msra.mxu0 0.0
      %1182 = vmatprep.subr.mxu0 0.0
      %1183 = vmatpush2.xpose.msra.mxu0 0.0
      %1184 = vmatprep.subr.mxu0 0.0
      %1185 = vmatpush2.xpose.msra.mxu0 0.0
      %1186 = vmatprep.subr.mxu0 0.0
      %1187 = vmatpush2.xpose.msra.mxu0 0.0
      %1188 = vmatprep.subr.mxu0 0.0
      %1189 = vmatpush2.xpose.msra.mxu0 0.0
      %1190 = vmatprep.subr.mxu0 0.0
      %1191 = vmatpush2.xpose.msra.mxu0 0.0
      %1192 = vmatprep.subr.mxu0 0.0
      %1193 = vmatpush2.xpose.msra.mxu0 0.0
      %1194 = vmatprep.subr.mxu0 0.0
      %1195 = vmatpush2.xpose.msra.mxu0 0.0
      %1196 = vmatprep.subr.mxu0 0.0
      %1197 = vmatpush2.xpose.msra.mxu0 0.0
      %1198 = vmatprep.subr.mxu0 0.0
      %1199 = vmatpush2.xpose.msra.mxu0 0.0
      %1200 = vmatprep.subr.mxu0 0.0
      %1201 = vmatpush2.xpose.msra.mxu0 0.0
      %1202 = vmatprep.subr.mxu0 0.0
      %1203 = vmatpush2.xpose.msra.mxu0 0.0
      %1204 = vmatprep.subr.mxu0 0.0
      %1205 = vmatpush2.xpose.msra.mxu0 0.0
      %1206 = vmatprep.mubr.f32.mxu0 0.0
      %1207 = vmatmul.mubr.f32.gmra.mxu0 %v1138
      %v1208 = vpop.f32.mrf.mxu0
      %v1209 = vadd.f32 0.0, %v1208
      %v1210 = vpop.f32.mrf.mxu0
      %1211 = vdwg.mxu0
      %v1212 = vsel %vm524, -3.4028235e+38, %v1209
      %s1213 = scalar_lea.vmem [#allocation2], 24
      %v1214 = vld [vmem:[%s1213] sm:$0xff]
      %v1215 = vsel %vm447, %v1212, -inf
      %1216 = vmax.xlane.f32.xlu0 %v1215
      %v1217 = vpop.xlane.xlu0 %1216
      %v1218 = vmax.f32 %v1214, %v1217
      %v1219 = vsub.f32 %v1214, %v1218
      %v1220 = vmul.f32 %v1219, 1.442695
      %v1221 = vpow.pop %v1220
      %1223 = vset.pattern.permute.xlu0 0
      %1224 = vperm.xlu0 %1223, %v1218
      %v1225 = vpop.permute.xlu0 %1224
      %v1227 = vsub.f32 %v1212, %v1225
      %v1228 = vmul.f32 %v1227, 1.442695
      %v1229 = vpow.pop %v1228
      %s1230 = scalar_lea.vmem [#allocation3], 24
      %v1231 = vld [vmem:[%s1230] sm:$0xff]
      %v1232 = vmul.f32 %v1221, %v1231
      %v1233 = vsel %vm447, %v1229, 0.0
      %1234 = vadd.xlane.f32.xlu0 %v1233
      %v1235 = vpop.xlane.xlu0 %1234
      %v1236 = vadd.f32 %v1232, %v1235
      %1237 = vst.msk [vmem:[%s1230] sm:$0xff] %vm548, %v1236
      %s1238 = scalar_lea.vmem [#allocation4], 24
      %v1239 = vld [vmem:[%s1238] sm:$0xff]
      %1241 = vset.pattern.permute.xlu0 0
      %1242 = vperm.xlu0 %1241, %v1221
      %v1243 = vpop.permute.xlu0 %1242
      %v1245 = vmul.f32 %v1243, %v1239
      %v1246 = vrot.slane %v388, 3
      %v1247 = vrot.slane %v389, 2
      %v1248 = vsel %vm405, %v1247, %v1246
      %v1249 = vrot.slane %v390, 1
      %v1250 = vsel %vm408, %v1249, %v1248
      %v1251 = vsel %vm411, %v391, %v1250
      %v1252 = vrot.slane %v392, 7
      %v1253 = vsel %vm414, %v1252, %v1251
      %v1254 = vrot.slane %v393, 6
      %v1255 = vsel %vm417, %v1254, %v1253
      %v1256 = vrot.slane %v394, 5
      %v1257 = vsel %vm420, %v1256, %v1255
      %v1258 = vrot.slane %v395, 4
      %v1259 = vsel %vm423, %v1258, %v1257
      %v1262 = vsel %vm447, %v1229, 0
      %1264 = vmatprep.subr.mxu0 0.0
      %1265 = vmatpush1.msra.mxu0 0.0
      %1266 = vmatprep.subr.mxu0 0.0
      %1267 = vmatpush1.msra.mxu0 0.0
      %1268 = vmatprep.subr.mxu0 0.0
      %1269 = vmatpush1.msra.mxu0 0.0
      %1270 = vmatprep.subr.mxu0 0.0
      %1271 = vmatpush1.msra.mxu0 0.0
      %1272 = vmatprep.subr.mxu0 0.0
      %1273 = vmatpush1.msra.mxu0 0.0
      %1274 = vmatprep.subr.mxu0 0.0
      %1275 = vmatpush1.msra.mxu0 0.0
      %1276 = vmatprep.subr.mxu0 0.0
      %1277 = vmatpush1.msra.mxu0 0.0
      %1278 = vmatprep.subr.mxu0 0.0
      %1279 = vmatpush1.msra.mxu0 0.0
      %1280 = vmatprep.subr.mxu0 0.0
      %1281 = vmatpush1.msra.mxu0 0.0
      %1282 = vmatprep.subr.mxu0 0.0
      %1283 = vmatpush1.msra.mxu0 0.0
      %1284 = vmatprep.subr.mxu0 0.0
      %1285 = vmatpush1.msra.mxu0 0.0
      %1286 = vmatprep.subr.mxu0 0.0
      %1287 = vmatpush1.msra.mxu0 0.0
      %1288 = vmatprep.subr.mxu0 0.0
      %1289 = vmatpush1.msra.mxu0 0.0
      %1290 = vmatprep.subr.mxu0 0.0
      %1291 = vmatpush1.msra.mxu0 0.0
      %1292 = vmatprep.subr.mxu0 0.0
      %1293 = vmatpush1.msra.mxu0 0.0
      %1294 = vmatprep.subr.mxu0 0.0
      %1295 = vmatpush1.msra.mxu0 %v1259
      %1296 = vmatprep.subr.mxu0 0.0
      %1297 = vmatpush2.msra.mxu0 0.0
      %1298 = vmatprep.subr.mxu0 0.0
      %1299 = vmatpush2.msra.mxu0 0.0
      %1300 = vmatprep.subr.mxu0 0.0
      %1301 = vmatpush2.msra.mxu0 0.0
      %1302 = vmatprep.subr.mxu0 0.0
      %1303 = vmatpush2.msra.mxu0 0.0
      %1304 = vmatprep.subr.mxu0 0.0
      %1305 = vmatpush2.msra.mxu0 0.0
      %1306 = vmatprep.subr.mxu0 0.0
      %1307 = vmatpush2.msra.mxu0 0.0
      %1308 = vmatprep.subr.mxu0 0.0
      %1309 = vmatpush2.msra.mxu0 0.0
      %1310 = vmatprep.subr.mxu0 0.0
      %1311 = vmatpush2.msra.mxu0 0.0
      %1312 = vmatprep.subr.mxu0 0.0
      %1313 = vmatpush2.msra.mxu0 0.0
      %1314 = vmatprep.subr.mxu0 0.0
      %1315 = vmatpush2.msra.mxu0 0.0
      %1316 = vmatprep.subr.mxu0 0.0
      %1317 = vmatpush2.msra.mxu0 0.0
      %1318 = vmatprep.subr.mxu0 0.0
      %1319 = vmatpush2.msra.mxu0 0.0
      %1320 = vmatprep.subr.mxu0 0.0
      %1321 = vmatpush2.msra.mxu0 0.0
      %1322 = vmatprep.subr.mxu0 0.0
      %1323 = vmatpush2.msra.mxu0 0.0
      %1324 = vmatprep.subr.mxu0 0.0
      %1325 = vmatpush2.msra.mxu0 0.0
      %1326 = vmatprep.subr.mxu0 0.0
      %1327 = vmatpush2.msra.mxu0 0.0
      %1328 = vmatprep.mubr.f32.mxu0 0.0
      %1329 = vmatmul.mubr.f32.gmra.mxu0 %v1262
      %v1330 = vpop.f32.mrf.mxu0
      %v1331 = vadd.f32 0.0, %v1330
      %v1332 = vpop.f32.mrf.mxu0
      %1333 = vdwg.mxu0
      %v1334 = vadd.f32 %v1245, %v1331
      %1335 = vst.msk [vmem:[%s1238] sm:$0xff] %vm447, %v1334
      %1336 = vst.msk [vmem:[%s1213] sm:$0xff] %vm548, %v1218
      // Predicated region
      $region41: #{_lambda_.8} parent=35 // pred_check
        %p1337 = pneg %p352
      $region42: #{_lambda_.8} parent=35 // pred_check_branch
        %1339 = sbr.rel (%p1337) target = $region44
      $region43: #{_lambda_.8} parent=35 // pred_region
        %v1340 = vld [vmem:[#allocation3] sm:$0xff]
        %v1341 = vrcp.pop %v1340
        %v1342 = vld [vmem:[#allocation4] sm:$0xff]
        %1344 = vset.pattern.permute.xlu0 0
        %1345 = vperm.xlu0 %1344, %v1341
        %v1346 = vpop.permute.xlu0 %1345
        %v1348 = vmul.f32 %v1342, %v1346
        %v1349 = vld [vmem:[%s776] sm:$0xff]
        %v1350 = vrcp.pop %v1349
        %v1351 = vld [vmem:[%s784] sm:$0xff]
        %1353 = vset.pattern.permute.xlu0 0
        %1354 = vperm.xlu0 %1353, %v1350
        %v1355 = vpop.permute.xlu0 %1354
        %v1357 = vmul.f32 %v1351, %v1355
        %v1358 = vld [vmem:[%s1003] sm:$0xff]
        %v1359 = vrcp.pop %v1358
        %v1360 = vld [vmem:[%s1011] sm:$0xff]
        %1362 = vset.pattern.permute.xlu0 0
        %1363 = vperm.xlu0 %1362, %v1359
        %v1364 = vpop.permute.xlu0 %1363
        %v1366 = vmul.f32 %v1360, %v1364
        %v1367 = vld [vmem:[%s1230] sm:$0xff]
        %v1368 = vrcp.pop %v1367
        %v1369 = vld [vmem:[%s1238] sm:$0xff]
        %1371 = vset.pattern.permute.xlu0 0
        %1372 = vperm.xlu0 %1371, %v1368
        %v1373 = vpop.permute.xlu0 %1372
        %v1375 = vmul.f32 %v1369, %v1373
        %1377 = vrot.lane.b32.xlu0 %v1357, 8
        %v1378 = vpop.permute.xlu0 %1377
        %1381 = vrot.lane.b32.xlu0 %v1366, 16
        %v1382 = vpop.permute.xlu0 %1381
        %1385 = vrot.lane.b32.xlu0 %v1375, 24
        %v1386 = vpop.permute.xlu0 %1385
        %v1388 = vsel %vm447, %v1348, %v1378
        %vm1389 = vcmask 130048
        %v1390 = vsel %vm1389, %v1388, %v1382
        %vm1391 = vcmask 195584
        %v1392 = vsel %vm1391, %v1390, %v1386
        %vm1393 = vcmask 261120
        %1394 = vst.msk [vmem:[%s349] sm:$0xff] %vm1393, %v1392
      $region44: #{_lambda_.8} parent=35 // pred_fallthru
        _
      %p1395 = scmp.lt.s32.totalorder %s20, 1
      %s1396 = scalar_select %p1395, %s20, 1
      %p1397 = scmp.lt.s32.totalorder %s21, 0
      %s1398 = scalar_select %p1397, %s21, 0
      %s1399 = sadd.s32 %s1398, %s1396
      %s1400 = smul.addr %s1399, 8
      %s1401 = scalar_lea.vmem %s4, %s1400
      // Predicated region
      $region45: #{_lambda_.8} parent=35 // pred_check
        %p1402 = pneg %p168
      $region46: #{_lambda_.8} parent=35 // pred_check_branch
        %1404 = sbr.rel (%p1402) target = $region48
      $region47: #{_lambda_.8} parent=35 // pred_region
        _
      $region48: #{_lambda_.8} parent=35 // pred_fallthru
        _
    $region36: #{_lambda_.8} parent=5 // pred_fallthru
      _
    %p1405 = scmp.le.s32.totalorder 2, %s10
    // Predicated region
    $region49: #{_lambda_.8} parent=5 // pred_check
      %p1406 = pneg %p1405
    $region50: #{_lambda_.8} parent=5 // pred_check_branch
      %1408 = sbr.rel (%p1406) target = $region52
    $region51: #{_lambda_.8} parent=5 // pred_region
      %s1409 = ssub.s32 %s10, 2
      // Predicated region
      $region53: #{_lambda_.8} parent=51 // pred_check
        %p1410 = pneg %p174
      $region54: #{_lambda_.8} parent=51 // pred_check_branch
        %1412 = sbr.rel (%p1410) target = $region56
      $region55: #{_lambda_.8} parent=51 // pred_region
        %p1413 = scmp.lt.s32.totalorder %s23, 1
        %s1414 = scalar_select %p1413, %s23, 1
        %p1415 = scmp.lt.s32.totalorder %s24, 0
        %s1416 = scalar_select %p1415, %s24, 0
        %s1417 = sadd.s32 %s1416, %s1414
        %s1418 = smul.addr %s1417, 8
        %s1419 = scalar_lea.vmem %s4, %s1418
      $region56: #{_lambda_.8} parent=51 // pred_fallthru
        _
    $region52: #{_lambda_.8} parent=5 // pred_fallthru
      _
  $region6: #{_lambda_.8} parent=0 // loop_footer
    %s14 = sadd.s32 1, %s10
  $region7: #{_lambda_.8} parent=0 // loop_footer_branch
    %9 = sbr.rel target = $region3
  $region8: #{_lambda_.8} parent=0 // loop_exit
    _

// kernel: _lambda_.6
$region0: #{_lambda_.6}
  #allocation0 [shape = 'u32[]', space=smem, size = 0x4, offset = 0x4, fixed_abs, tag = 'smem constant byte address 0x4 - core index']
  #allocation1 [shape = 'u32[144,128]{1,0:T(1,128)}', space=vmem, size = 0x12000, scoped, tag = 'internal scratch']
  %s0 = inlined_call_operand.vmem [shape: f32[2,8,4,8], index: 0, kind: input, shape index: {}]
  %s1 = inlined_call_operand.vmem [shape: f32[8,8], index: 1, kind: input, shape index: {}]
  %s2 = inlined_call_operand.vmem [shape: f32[8,8], index: 2, kind: input, shape index: {}]
  %s3 = inlined_call_operand.vmem [shape: f32[2,8,4,8], index: 3, kind: output, shape index: {}]
  %s4 = sld [smem:[#allocation0]]
  $region45: #{_lambda_.6} parent=0
    _
  %s6 = ssub.s32 1, %s4
  %s7 = scalar_select 0, %s6, %s4
  loop: start=0, step=1, limit=4
  $region2: #{_lambda_.6} parent=0 // loop_pre_header
    _
  $region3: #{_lambda_.6} parent=0 // loop_header
    %s9 = sphi 0, %s13
    %p10 = scmp.ge.s32.totalorder %s9, 4
    %s16 = sphi 0, %s28
    %s17 = sphi 0, %s24
    %s18 = sphi 0, %s16
    %s19 = sphi 0, %s17
    %s20 = sphi 0, %s18
    %s21 = sphi 0, %s19
    %s33 = sphi 0, %s35
    %s36 = sphi 0, %s33
    %s37 = sphi 0, %s36
    %s53 = sphi 0, %s37
    %s59 = sphi 0, %s61
    %s62 = sphi 0, %s59
    %s63 = sphi 0, %s62
    %s79 = sphi 0, %s63
    %s85 = sphi 0, %s87
    %s88 = sphi 0, %s85
    %s89 = sphi 0, %s88
    %s105 = sphi 0, %s89
    %s113 = sphi 0, %s115
    %s116 = sphi 0, %s113
    %s117 = sphi 0, %s116
    %s133 = sphi 0, %s117
  $region4: #{_lambda_.6} parent=0 // loop_header_branch
    %12 = sbr.rel (%p10) target = $region8
  $region5: #{_lambda_.6} parent=0 // loop_body
    %s14 = ssub.s32 %s9, 1
    %s15 = ssub.s32 %s9, 2
    %s22 = sadd.s32 1, %s17
    %p23 = scmp.ge.s32.totalorder %s22, 1
    %s24 = scalar_select %p23, 0, %s22
    %s25 = sadd.s32 1, %s16
    %s26 = scalar_select %p23, %s25, %s16
    %p27 = scmp.ge.s32.totalorder %s26, 2
    %s28 = scalar_select %p27, 0, %s26
    %s29 = ssub.s32 %s16, %s28
    %s30 = ssub.s32 %s17, %s24
    %s31 = sor.u32 %s29, %s30
    %p32 = scmp.eq.s32.totalorder %s31, 0
    %s34 = sadd.s32 %s33, 1
    %s35 = scalar_select %p32, %s33, %s34
    %p38 = pneg %p32
    %p39 = scmp.eq.s32.totalorder %s9, 1
    %p40 = por %p38, %p39
    %p41 = scmp.ne.s32.totalorder %s33, %s36
    %p42 = scmp.eq.s32.totalorder %s9, 0
    %p43 = por %p41, %p42
    %p44 = scmp.ne.s32.totalorder %s33, %s36
    %p45 = scmp.eq.s32.totalorder %s14, 1
    %p46 = por %p44, %p45
    %p47 = scmp.ne.s32.totalorder %s36, %s37
    %p48 = scmp.eq.s32.totalorder %s14, 0
    %p49 = por %p47, %p48
    %p50 = scmp.ne.s32.totalorder %s36, %s37
    %p51 = scmp.eq.s32.totalorder %s15, 1
    %p52 = por %p50, %p51
    %p54 = scmp.ne.s32.totalorder %s37, %s53
    %p55 = scmp.eq.s32.totalorder %s15, 0
    %p56 = por %p54, %p55
    %s57 = ssub.s32 %s17, %s24
    %p58 = scmp.eq.s32.totalorder %s57, 0
    %s60 = sadd.s32 %s59, 1
    %s61 = scalar_select %p58, %s59, %s60
    %p64 = pneg %p58
    %p65 = scmp.eq.s32.totalorder %s9, 1
    %p66 = por %p64, %p65
    %p67 = scmp.ne.s32.totalorder %s59, %s62
    %p68 = scmp.eq.s32.totalorder %s9, 0
    %p69 = por %p67, %p68
    %p70 = scmp.ne.s32.totalorder %s59, %s62
    %p71 = scmp.eq.s32.totalorder %s14, 1
    %p72 = por %p70, %p71
    %p73 = scmp.ne.s32.totalorder %s62, %s63
    %p74 = scmp.eq.s32.totalorder %s14, 0
    %p75 = por %p73, %p74
    %p76 = scmp.ne.s32.totalorder %s62, %s63
    %p77 = scmp.eq.s32.totalorder %s15, 1
    %p78 = por %p76, %p77
    %p80 = scmp.ne.s32.totalorder %s63, %s79
    %p81 = scmp.eq.s32.totalorder %s15, 0
    %p82 = por %p80, %p81
    %s83 = ssub.s32 %s17, %s24
    %p84 = scmp.eq.s32.totalorder %s83, 0
    %s86 = sadd.s32 %s85, 1
    %s87 = scalar_select %p84, %s85, %s86
    %p90 = pneg %p84
    %p91 = scmp.eq.s32.totalorder %s9, 1
    %p92 = por %p90, %p91
    %p93 = scmp.ne.s32.totalorder %s85, %s88
    %p94 = scmp.eq.s32.totalorder %s9, 0
    %p95 = por %p93, %p94
    %p96 = scmp.ne.s32.totalorder %s85, %s88
    %p97 = scmp.eq.s32.totalorder %s14, 1
    %p98 = por %p96, %p97
    %p99 = scmp.ne.s32.totalorder %s88, %s89
    %p100 = scmp.eq.s32.totalorder %s14, 0
    %p101 = por %p99, %p100
    %p102 = scmp.ne.s32.totalorder %s88, %s89
    %p103 = scmp.eq.s32.totalorder %s15, 1
    %p104 = por %p102, %p103
    %p106 = scmp.ne.s32.totalorder %s89, %s105
    %p107 = scmp.eq.s32.totalorder %s15, 0
    %p108 = por %p106, %p107
    %s109 = ssub.s32 %s16, %s28
    %s110 = ssub.s32 %s17, %s24
    %s111 = sor.u32 %s109, %s110
    %p112 = scmp.eq.s32.totalorder %s111, 0
    %s114 = sadd.s32 %s113, 1
    %s115 = scalar_select %p112, %s113, %s114
    %p118 = pneg %p112
    %p119 = scmp.eq.s32.totalorder %s9, 1
    %p120 = por %p118, %p119
    %p121 = scmp.ne.s32.totalorder %s113, %s116
    %p122 = scmp.eq.s32.totalorder %s9, 0
    %p123 = por %p121, %p122
    %p124 = scmp.ne.s32.totalorder %s113, %s116
    %p125 = scmp.eq.s32.totalorder %s14, 1
    %p126 = por %p124, %p125
    %p127 = scmp.ne.s32.totalorder %s116, %s117
    %p128 = scmp.eq.s32.totalorder %s14, 0
    %p129 = por %p127, %p128
    %p130 = scmp.ne.s32.totalorder %s116, %s117
    %p131 = scmp.eq.s32.totalorder %s15, 1
    %p132 = por %p130, %p131
    %p134 = scmp.ne.s32.totalorder %s117, %s133
    %p135 = scmp.eq.s32.totalorder %s15, 0
    %p136 = por %p134, %p135
    %p137 = scmp.le.s32.totalorder 1, %s9
    %p138 = scmp.lt.s32.totalorder %s9, 3
    %p139 = pnand %p137, %p138
    %p140 = pneg %p139
    // Predicated region
    $region9: #{_lambda_.6} parent=5 // pred_check
      _
    $region10: #{_lambda_.6} parent=5 // pred_check_branch
      %142 = sbr.rel (%p139) target = $region12
    $region11: #{_lambda_.6} parent=5 // pred_region
      %s143 = ssub.s32 %s9, 1
      // Predicated region
      $region13: #{_lambda_.6} parent=11 // pred_check
        %p144 = pneg %p75
      $region14: #{_lambda_.6} parent=11 // pred_check_branch
        %146 = sbr.rel (%p144) target = $region16
      $region15: #{_lambda_.6} parent=11 // pred_region
        %p147 = scmp.lt.s32.totalorder %s19, 0
        %s148 = scalar_select %p147, %s19, 0
        %s149 = smul.addr %s148, 8
        %s150 = scalar_lea.vmem %s1, %s149
      $region16: #{_lambda_.6} parent=11 // pred_fallthru
        _
      // Predicated region
      $region17: #{_lambda_.6} parent=11 // pred_check
        %p151 = pneg %p101
      $region18: #{_lambda_.6} parent=11 // pred_check_branch
        %153 = sbr.rel (%p151) target = $region20
      $region19: #{_lambda_.6} parent=11 // pred_region
        %p154 = scmp.lt.s32.totalorder %s19, 0
        %s155 = scalar_select %p154, %s19, 0
        %s156 = smul.addr %s155, 8
        %s157 = scalar_lea.vmem %s2, %s156
      $region20: #{_lambda_.6} parent=11 // pred_fallthru
        _
    $region12: #{_lambda_.6} parent=5 // pred_fallthru
      _
    %p158 = scmp.lt.s32.totalorder %s9, 2
    // Predicated region
    $region21: #{_lambda_.6} parent=5 // pred_check
      %p159 = pneg %p158
    $region22: #{_lambda_.6} parent=5 // pred_check_branch
      %161 = sbr.rel (%p159) target = $region24
    $region23: #{_lambda_.6} parent=5 // pred_region
      // Predicated region
      $region25: #{_lambda_.6} parent=23 // pred_check
        %p162 = pneg %p43
      $region26: #{_lambda_.6} parent=23 // pred_check_branch
        %164 = sbr.rel (%p162) target = $region28
      $region27: #{_lambda_.6} parent=23 // pred_region
        %s165 = smul.u32 8, %s17
        %p166 = scmp.lt.s32.totalorder %s16, 1
        %s167 = scalar_select %p166, %s16, 1
        %p168 = scmp.lt.s32.totalorder %s165, 7
        %s169 = scalar_select %p168, %s165, 7
        %s170 = smul.addr %s167, 8
        %s171 = sadd.s32 %s169, %s170
        %s172 = smul.addr %s171, 4
        %s173 = scalar_lea.vmem %s0, %s172
        %s174 = smul.u32 8, %s17
      $region28: #{_lambda_.6} parent=23 // pred_fallthru
        _
    $region24: #{_lambda_.6} parent=5 // pred_fallthru
      _
    %p175 = scmp.le.s32.totalorder 1, %s9
    %p176 = scmp.lt.s32.totalorder %s9, 3
    %p177 = pnand %p175, %p176
    %p178 = pneg %p177
    // Predicated region
    $region29: #{_lambda_.6} parent=5 // pred_check
      _
    $region30: #{_lambda_.6} parent=5 // pred_check_branch
      %180 = sbr.rel (%p177) target = $region32
    $region31: #{_lambda_.6} parent=5 // pred_region
      %s181 = ssub.s32 %s9, 1
      %s182 = smul.u32 8, %s19
      %p183 = scmp.lt.s32.totalorder %s18, 1
      %s184 = scalar_select %p183, %s18, 1
      %p185 = scmp.lt.s32.totalorder %s182, 7
      %s186 = scalar_select %p185, %s182, 7
      %s187 = smul.addr %s184, 8
      %s188 = sadd.s32 %s186, %s187
      %s189 = smul.addr %s188, 4
      %s190 = scalar_lea.vmem %s0, %s189
      %p191 = pneg %p49
      %p192 = pneg %p46
      %p193 = scmp.lt.s32.totalorder %s19, 0
      %s194 = scalar_select %p193, %s19, 0
      %s195 = smul.addr %s194, 8
      %s196 = scalar_lea.vmem %s1, %s195
      %p197 = pneg %p75
      %p198 = pneg %p72
      %p199 = scmp.lt.s32.totalorder %s19, 0
      %s200 = scalar_select %p199, %s19, 0
      %s201 = smul.addr %s200, 8
      %s202 = scalar_lea.vmem %s2, %s201
      %p203 = pneg %p101
      %p204 = pneg %p98
      %p205 = pneg %p129
      %p206 = pneg %p126
      %s207 = smul.u32 8, %s19
      %p208 = scmp.lt.s32.totalorder %s18, 1
      %s209 = scalar_select %p208, %s18, 1
      %p210 = scmp.lt.s32.totalorder %s207, 7
      %s211 = scalar_select %p210, %s207, 7
      %s212 = smul.addr %s209, 8
      %s213 = sadd.s32 %s211, %s212
      %s214 = smul.addr %s213, 4
      %s215 = scalar_lea.vmem %s3, %s214
      %s216 = smul.u32 8, %s19
      %p217 = scmp.lt.s32.totalorder %s18, 1
      %s218 = scalar_select %p217, %s18, 1
      %p219 = scmp.lt.s32.totalorder %s216, 7
      %s220 = scalar_select %p219, %s216, 7
      %s221 = smul.addr %s218, 8
      %s222 = sadd.s32 %s220, %s221
      %s223 = smul.addr %s222, 4
      %s224 = scalar_lea.vmem %s0, %s223
      %s225 = smul.u32 8, %s19
      %p226 = scmp.lt.s32.totalorder %s19, 0
      %s227 = scalar_select %p226, %s19, 0
      %s228 = smul.addr %s227, 8
      %s229 = scalar_lea.vmem %s1, %s228
      %p230 = scmp.lt.s32.totalorder %s19, 0
      %s231 = scalar_select %p230, %s19, 0
      %s232 = smul.addr %s231, 8
      %s233 = scalar_lea.vmem %s2, %s232
      %s234 = smul.u32 8, %s19
      %p235 = scmp.lt.s32.totalorder %s18, 1
      %s236 = scalar_select %p235, %s18, 1
      %p237 = scmp.lt.s32.totalorder %s234, 7
      %s238 = scalar_select %p237, %s234, 7
      %s239 = smul.addr %s236, 8
      %s240 = sadd.s32 %s238, %s239
      %s241 = smul.addr %s240, 4
      %s242 = scalar_lea.vmem %s3, %s241
      %s243 = smul.u32 8, %s19
      %v244 = vld [vmem:[%s224] sm:$0xf]
      %v245 = vld [vmem:[%s224 + $0x4] sm:$0xf]
      %v246 = vld [vmem:[%s224 + $0x8] sm:$0xf]
      %v247 = vld [vmem:[%s224 + $0xc] sm:$0xf]
      %v248 = vld [vmem:[%s224 + $0x10] sm:$0xf]
      %v249 = vld [vmem:[%s224 + $0x14] sm:$0xf]
      %v250 = vld [vmem:[%s224 + $0x18] sm:$0xf]
      %v251 = vld [vmem:[%s224 + $0x1c] sm:$0xf]
      %v252 = vld [vmem:[%s229] sm:$0xff]
      %v254 = vcombine.high %v252, %v252
      %v256 = vunpack.c.l.s4 1966171168
      %v257 = vunpack.c.0.s8 %v256
      %v258 = vlaneseq
      %v259 = vshrl.u32 %v258, 7
      %v260 = vsub.s32 %v257, %v259
      %v261 = vrot.slane %v252, %v260
      %v263 = vunpack.c.l.s4 1966171168
      %v264 = vunpack.c.0.s8 %v263
      %v265 = vlaneseq
      %v266 = vshrl.u32 %v265, 7
      %v267 = vsub.s32 %v264, %v266
      %v268 = vrot.slane %v254, %v267
      %v269 = vcombine.high %v261, %v261
      %v270 = vcombine.high %v268, %v268
      %v272 = vunpack.c.l.s4 1966171168
      %v273 = vunpack.c.0.s8 %v272
      %v274 = vlaneseq
      %v275 = vshrl.u32 %v274, 7
      %v276 = vsub.s32 %v273, %v275
      %v277 = vrot.slane %v261, %v276
      %v279 = vunpack.c.l.s4 1966171168
      %v280 = vunpack.c.0.s8 %v279
      %v281 = vlaneseq
      %v282 = vshrl.u32 %v281, 7
      %v283 = vsub.s32 %v280, %v282
      %v284 = vrot.slane %v268, %v283
      %v286 = vunpack.c.l.s4 1966171168
      %v287 = vunpack.c.0.s8 %v286
      %v288 = vlaneseq
      %v289 = vshrl.u32 %v288, 7
      %v290 = vsub.s32 %v287, %v289
      %v291 = vrot.slane %v269, %v290
      %v293 = vunpack.c.l.s4 1966171168
      %v294 = vunpack.c.0.s8 %v293
      %v295 = vlaneseq
      %v296 = vshrl.u32 %v295, 7
      %v297 = vsub.s32 %v294, %v296
      %v298 = vrot.slane %v270, %v297
      %v299 = vcombine.high %v277, %v277
      %v300 = vcombine.high %v284, %v284
      %v301 = vcombine.high %v291, %v291
      %v302 = vcombine.high %v298, %v298
      %v303 = vld [vmem:[%s233] sm:$0xff]
      %v305 = vcombine.high %v303, %v303
      %v307 = vunpack.c.l.s4 1966171168
      %v308 = vunpack.c.0.s8 %v307
      %v309 = vlaneseq
      %v310 = vshrl.u32 %v309, 7
      %v311 = vsub.s32 %v308, %v310
      %v312 = vrot.slane %v303, %v311
      %v314 = vunpack.c.l.s4 1966171168
      %v315 = vunpack.c.0.s8 %v314
      %v316 = vlaneseq
      %v317 = vshrl.u32 %v316, 7
      %v318 = vsub.s32 %v315, %v317
      %v319 = vrot.slane %v305, %v318
      %v320 = vcombine.high %v312, %v312
      %v321 = vcombine.high %v319, %v319
      %v323 = vunpack.c.l.s4 1966171168
      %v324 = vunpack.c.0.s8 %v323
      %v325 = vlaneseq
      %v326 = vshrl.u32 %v325, 7
      %v327 = vsub.s32 %v324, %v326
      %v328 = vrot.slane %v312, %v327
      %v330 = vunpack.c.l.s4 1966171168
      %v331 = vunpack.c.0.s8 %v330
      %v332 = vlaneseq
      %v333 = vshrl.u32 %v332, 7
      %v334 = vsub.s32 %v331, %v333
      %v335 = vrot.slane %v319, %v334
      %v337 = vunpack.c.l.s4 1966171168
      %v338 = vunpack.c.0.s8 %v337
      %v339 = vlaneseq
      %v340 = vshrl.u32 %v339, 7
      %v341 = vsub.s32 %v338, %v340
      %v342 = vrot.slane %v320, %v341
      %v344 = vunpack.c.l.s4 1966171168
      %v345 = vunpack.c.0.s8 %v344
      %v346 = vlaneseq
      %v347 = vshrl.u32 %v346, 7
      %v348 = vsub.s32 %v345, %v347
      %v349 = vrot.slane %v321, %v348
      %v350 = vcombine.high %v328, %v328
      %v351 = vcombine.high %v335, %v335
      %v352 = vcombine.high %v342, %v342
      %v353 = vcombine.high %v349, %v349
      %v354 = vsub.f32 0.0, %v244
      %v355 = vsub.f32 0.0, %v245
      %v356 = vsub.f32 0.0, %v246
      %v357 = vsub.f32 0.0, %v247
      %v358 = vsub.f32 0.0, %v248
      %v359 = vsub.f32 0.0, %v249
      %v360 = vsub.f32 0.0, %v250
      %v361 = vsub.f32 0.0, %v251
      %370 = vrot.lane.b32.xlu0 %v354, 124
      %v371 = vpop.permute.xlu0 %370
      %372 = vrot.lane.b32.xlu0 %v355, 124
      %v373 = vpop.permute.xlu0 %372
      %374 = vrot.lane.b32.xlu0 %v356, 124
      %v375 = vpop.permute.xlu0 %374
      %376 = vrot.lane.b32.xlu0 %v357, 124
      %v377 = vpop.permute.xlu0 %376
      %378 = vrot.lane.b32.xlu0 %v358, 124
      %v379 = vpop.permute.xlu0 %378
      %380 = vrot.lane.b32.xlu0 %v359, 124
      %v381 = vpop.permute.xlu0 %380
      %382 = vrot.lane.b32.xlu0 %v360, 124
      %v383 = vpop.permute.xlu0 %382
      %384 = vrot.lane.b32.xlu0 %v361, 124
      %v385 = vpop.permute.xlu0 %384
      %402 = vrot.lane.b32.xlu0 %v244, 4
      %v403 = vpop.permute.xlu0 %402
      %404 = vrot.lane.b32.xlu0 %v245, 4
      %v405 = vpop.permute.xlu0 %404
      %406 = vrot.lane.b32.xlu0 %v246, 4
      %v407 = vpop.permute.xlu0 %406
      %408 = vrot.lane.b32.xlu0 %v247, 4
      %v409 = vpop.permute.xlu0 %408
      %410 = vrot.lane.b32.xlu0 %v248, 4
      %v411 = vpop.permute.xlu0 %410
      %412 = vrot.lane.b32.xlu0 %v249, 4
      %v413 = vpop.permute.xlu0 %412
      %414 = vrot.lane.b32.xlu0 %v250, 4
      %v415 = vpop.permute.xlu0 %414
      %416 = vrot.lane.b32.xlu0 %v251, 4
      %v417 = vpop.permute.xlu0 %416
      %vm426 = vcmask 31744
      %v427 = vsel %vm426, %v371, %v403
      %v428 = vsel %vm426, %v373, %v405
      %v429 = vsel %vm426, %v375, %v407
      %v430 = vsel %vm426, %v377, %v409
      %v431 = vsel %vm426, %v379, %v411
      %v432 = vsel %vm426, %v381, %v413
      %v433 = vsel %vm426, %v383, %v415
      %v434 = vsel %vm426, %v385, %v417
      %v435 = vlaneseq
      %v436 = vshrl.u32 %v435, 7
      %v437 = vsub.s32 0, %v436
      %v438 = vrot.slane %v277, %v437
      %v439 = vlaneseq
      %v440 = vshrl.u32 %v439, 7
      %v441 = vsub.s32 0, %v440
      %v442 = vrot.slane %v291, %v441
      %v443 = vlaneseq
      %v444 = vshrl.u32 %v443, 7
      %v445 = vsub.s32 0, %v444
      %v446 = vrot.slane %v299, %v445
      %v447 = vlaneseq
      %v448 = vshrl.u32 %v447, 7
      %v449 = vsub.s32 0, %v448
      %v450 = vrot.slane %v301, %v449
      %v451 = vlaneseq
      %v452 = vshrl.u32 %v451, 7
      %v453 = vsub.s32 0, %v452
      %v454 = vrot.slane %v284, %v453
      %v455 = vlaneseq
      %v456 = vshrl.u32 %v455, 7
      %v457 = vsub.s32 0, %v456
      %v458 = vrot.slane %v298, %v457
      %v459 = vlaneseq
      %v460 = vshrl.u32 %v459, 7
      %v461 = vsub.s32 0, %v460
      %v462 = vrot.slane %v300, %v461
      %v463 = vlaneseq
      %v464 = vshrl.u32 %v463, 7
      %v465 = vsub.s32 0, %v464
      %v466 = vrot.slane %v302, %v465
      %v475 = vmul.f32 %v244, %v438
      %v476 = vmul.f32 %v245, %v442
      %v477 = vmul.f32 %v246, %v446
      %v478 = vmul.f32 %v247, %v450
      %v479 = vmul.f32 %v248, %v454
      %v480 = vmul.f32 %v249, %v458
      %v481 = vmul.f32 %v250, %v462
      %v482 = vmul.f32 %v251, %v466
      %v483 = vlaneseq
      %v484 = vshrl.u32 %v483, 7
      %v485 = vsub.s32 0, %v484
      %v486 = vrot.slane %v328, %v485
      %v487 = vlaneseq
      %v488 = vshrl.u32 %v487, 7
      %v489 = vsub.s32 0, %v488
      %v490 = vrot.slane %v342, %v489
      %v491 = vlaneseq
      %v492 = vshrl.u32 %v491, 7
      %v493 = vsub.s32 0, %v492
      %v494 = vrot.slane %v350, %v493
      %v495 = vlaneseq
      %v496 = vshrl.u32 %v495, 7
      %v497 = vsub.s32 0, %v496
      %v498 = vrot.slane %v352, %v497
      %v499 = vlaneseq
      %v500 = vshrl.u32 %v499, 7
      %v501 = vsub.s32 0, %v500
      %v502 = vrot.slane %v335, %v501
      %v503 = vlaneseq
      %v504 = vshrl.u32 %v503, 7
      %v505 = vsub.s32 0, %v504
      %v506 = vrot.slane %v349, %v505
      %v507 = vlaneseq
      %v508 = vshrl.u32 %v507, 7
      %v509 = vsub.s32 0, %v508
      %v510 = vrot.slane %v351, %v509
      %v511 = vlaneseq
      %v512 = vshrl.u32 %v511, 7
      %v513 = vsub.s32 0, %v512
      %v514 = vrot.slane %v353, %v513
      %v523 = vmul.f32 %v427, %v486
      %v524 = vmul.f32 %v428, %v490
      %v525 = vmul.f32 %v429, %v494
      %v526 = vmul.f32 %v430, %v498
      %v527 = vmul.f32 %v431, %v502
      %v528 = vmul.f32 %v432, %v506
      %v529 = vmul.f32 %v433, %v510
      %v530 = vmul.f32 %v434, %v514
      %v531 = vadd.f32 %v475, %v523
      %v532 = vadd.f32 %v476, %v524
      %v533 = vadd.f32 %v477, %v525
      %v534 = vadd.f32 %v478, %v526
      %v535 = vadd.f32 %v479, %v527
      %v536 = vadd.f32 %v480, %v528
      %v537 = vadd.f32 %v481, %v529
      %v538 = vadd.f32 %v482, %v530
      %v539 = vmul.f32 %v531, 0.35355338
      %v540 = vmul.f32 %v532, 0.35355338
      %v541 = vmul.f32 %v533, 0.35355338
      %v542 = vmul.f32 %v534, 0.35355338
      %v543 = vmul.f32 %v535, 0.35355338
      %v544 = vmul.f32 %v536, 0.35355338
      %v545 = vmul.f32 %v537, 0.35355338
      %v546 = vmul.f32 %v538, 0.35355338
      %vm547 = vcmask 60416
      %548 = vst.msk [vmem:[%s242] sm:$0xf] %vm547, %v539
      %549 = vst.msk [vmem:[%s242 + $0x4] sm:$0xf] %vm547, %v540
      %550 = vst.msk [vmem:[%s242 + $0x8] sm:$0xf] %vm547, %v541
      %551 = vst.msk [vmem:[%s242 + $0xc] sm:$0xf] %vm547, %v542
      %552 = vst.msk [vmem:[%s242 + $0x10] sm:$0xf] %vm547, %v543
      %553 = vst.msk [vmem:[%s242 + $0x14] sm:$0xf] %vm547, %v544
      %554 = vst.msk [vmem:[%s242 + $0x18] sm:$0xf] %vm547, %v545
      %555 = vst.msk [vmem:[%s242 + $0x1c] sm:$0xf] %vm547, %v546
      %s556 = smul.u32 8, %s19
      %p557 = scmp.lt.s32.totalorder %s18, 1
      %s558 = scalar_select %p557, %s18, 1
      %p559 = scmp.lt.s32.totalorder %s556, 7
      %s560 = scalar_select %p559, %s556, 7
      %s561 = smul.addr %s558, 8
      %s562 = sadd.s32 %s560, %s561
      %s563 = smul.addr %s562, 4
      %s564 = scalar_lea.vmem %s3, %s563
      // Predicated region
      $region33: #{_lambda_.6} parent=31 // pred_check
        %p565 = pneg %p126
      $region34: #{_lambda_.6} parent=31 // pred_check_branch
        %567 = sbr.rel (%p565) target = $region36
      $region35: #{_lambda_.6} parent=31 // pred_region
        %s568 = smul.u32 8, %s19
      $region36: #{_lambda_.6} parent=31 // pred_fallthru
        _
    $region32: #{_lambda_.6} parent=5 // pred_fallthru
      _
    %p569 = scmp.le.s32.totalorder 2, %s9
    // Predicated region
    $region37: #{_lambda_.6} parent=5 // pred_check
      %p570 = pneg %p569
    $region38: #{_lambda_.6} parent=5 // pred_check_branch
      %572 = sbr.rel (%p570) target = $region40
    $region39: #{_lambda_.6} parent=5 // pred_region
      %s573 = ssub.s32 %s9, 2
      // Predicated region
      $region41: #{_lambda_.6} parent=39 // pred_check
        %p574 = pneg %p132
      $region42: #{_lambda_.6} parent=39 // pred_check_branch
        %576 = sbr.rel (%p574) target = $region44
      $region43: #{_lambda_.6} parent=39 // pred_region
        %s577 = smul.u32 8, %s21
        %p578 = scmp.lt.s32.totalorder %s20, 1
        %s579 = scalar_select %p578, %s20, 1
        %p580 = scmp.lt.s32.totalorder %s577, 7
        %s581 = scalar_select %p580, %s577, 7
        %s582 = smul.addr %s579, 8
        %s583 = sadd.s32 %s581, %s582
        %s584 = smul.addr %s583, 4
        %s585 = scalar_lea.vmem %s3, %s584
      $region44: #{_lambda_.6} parent=39 // pred_fallthru
        _
    $region40: #{_lambda_.6} parent=5 // pred_fallthru
      _
  $region6: #{_lambda_.6} parent=0 // loop_footer
    %s13 = sadd.s32 1, %s9
  $region7: #{_lambda_.6} parent=0 // loop_footer_branch
    %8 = sbr.rel target = $region3
  $region8: #{_lambda_.6} parent=0 // loop_exit
    _

</llo_original>
